<compile_context>
chip_gen: v7x
topology: tpu7x:2x2x1
jax: 0.10.0
libtpu: 0.0.40
codegen_flags: <defaults>
</compile_context>

<pallas_src>
import functools

import jax
import jax.numpy as jnp
from jax.experimental import pallas as pl
from jax.experimental.pallas import tpu as pltpu


def _conv_bnstats_kernel(x_ref, w_ref, y_ref, stats_ref, *, K, dil, Ho, Wo):
    """Conv for one (pre-padded) batch image + partial BN statistics.

    x_ref     : (1, Hp, Wp, Cin_pad)  zero-padded NHWC input tile, bf16
    w_ref     : (K*K, Cin_pad, Cpad)  weights, bf16 (Cout zero-padded to Cpad)
    y_ref     : (1, Ho, Wo, Cpad)     conv output, f32, lane-dense
    stats_ref : (1, 2, Cpad)          per-image [channel sum; channel sum-of-squares]
    """
    Cin = x_ref.shape[-1]
    Cpad = w_ref.shape[-1]
    M = Ho * Wo

    # Direct conv: K*K rank-Cin MXU matmuls accumulated in an f32 register tile.
    acc = jnp.zeros((M, Cpad), dtype=jnp.float32)
    for kh in range(K):
        for kw in range(K):
            tap = x_ref[0, kh * dil:kh * dil + Ho, kw * dil:kw * dil + Wo, :]
            tap = tap.reshape(M, Cin)                       # (M, Cin_pad), bf16
            acc = acc + jnp.dot(tap, w_ref[kh * K + kw],
                                preferred_element_type=jnp.float32)

    y_ref[...] = acc.reshape(1, Ho, Wo, Cpad).astype(y_ref.dtype)

    # Partial BN statistics in the same pass (f32, reduced over spatial positions).
    s = jnp.sum(acc, axis=0, keepdims=True)                 # (1, Cpad)
    ss = jnp.sum(acc * acc, axis=0, keepdims=True)          # (1, Cpad)
    stats_ref[0, 0:1, :] = s
    stats_ref[0, 1:2, :] = ss


def _bn_relu_kernel(y_ref, scale_ref, shift_ref, o_ref, *, act):
    """Fused BN (precomputed per-channel scale/shift) + optional ReLU, lane-dense."""
    y = y_ref[...]
    out = y * scale_ref[...].reshape(1, 1, 1, -1) + shift_ref[...].reshape(1, 1, 1, -1)
    if act:
        out = jnp.maximum(out, 0.0)
    o_ref[...] = out.astype(o_ref.dtype)


def conv2d_bn_relu(x_nchw, w, b, gamma, beta, *,
                   kernel_size=3, padding=1, dilation=1, eps=1e-5, act=True):
    """x_nchw: (N, Cin, H, W); w: (K, K, Cin, Cout); b/gamma/beta: (Cout,).
    Returns (N, Cout, Ho, Wo) matching nn.Conv2d + nn.BatchNorm2d(train) [+ ReLU]."""
    # Conv bias is cancelled exactly by training-mode BN mean subtraction -> unused.
    del b

    N, Cin, H, W = x_nchw.shape
    K = kernel_size
    Cout = w.shape[-1]
    Ho = H + 2 * padding - dilation * (K - 1)
    Wo = W + 2 * padding - dilation * (K - 1)
    # Lane-dense output channels; sublane-friendly input channels.
    Cpad = max(128, ((Cout + 127) // 128) * 128)
    Cin_pad = max(8, ((Cin + 7) // 8) * 8)

    # NCHW -> NHWC (channels on lanes); bf16 MXU operands.  Spatial zero-pad kept in
    # the wrapper (trivial at these shapes; fold the halo into overlapping input
    # blocks when tiling spatially at larger shapes).
    x = jnp.transpose(x_nchw, (0, 2, 3, 1))
    x_pad = jnp.pad(
        x, ((0, 0), (padding, padding), (padding, padding), (0, Cin_pad - Cin))
    ).astype(jnp.bfloat16)
    Hp, Wp = H + 2 * padding, W + 2 * padding

    # Weight layout (kh, kw) major, zero-padded on Cin and Cout axes.
    w_p = jnp.pad(w, ((0, 0), (0, 0), (0, Cin_pad - Cin), (0, Cpad - Cout)))
    w_p = w_p.reshape(K * K, Cin_pad, Cpad).astype(jnp.bfloat16)

    conv_kernel = functools.partial(_conv_bnstats_kernel,
                                    K=K, dil=dilation, Ho=Ho, Wo=Wo)

    conv_out, stats = pl.pallas_call(
        conv_kernel,
        out_shape=(
            jax.ShapeDtypeStruct((N, Ho, Wo, Cpad), jnp.float32),
            jax.ShapeDtypeStruct((N, 2, Cpad), jnp.float32),
        ),
        grid=(N,),
        in_specs=[
            pl.BlockSpec((1, Hp, Wp, Cin_pad), lambda n: (n, 0, 0, 0)),
            pl.BlockSpec((K * K, Cin_pad, Cpad), lambda n: (0, 0, 0)),
        ],
        out_specs=(
            pl.BlockSpec((1, Ho, Wo, Cpad), lambda n: (n, 0, 0, 0)),
            pl.BlockSpec((1, 2, Cpad), lambda n: (n, 0, 0)),
        ),
        compiler_params=pltpu.CompilerParams(dimension_semantics=("parallel",)),
    )(x_pad, w_p)

    # Finalize global BN statistics (biased variance over N*Ho*Wo) and fold
    # gamma/beta/mean/var into one per-channel scale/shift (f32, O(Cout) work).
    count = float(N * Ho * Wo)
    total = jnp.sum(stats, axis=0)                          # (2, Cpad)
    mean = total[0] / count
    var = total[1] / count - mean * mean                    # biased variance
    gamma_p = jnp.pad(gamma.astype(jnp.float32), (0, Cpad - Cout), constant_values=1.0)
    beta_p = jnp.pad(beta.astype(jnp.float32), (0, Cpad - Cout))
    scale = gamma_p * jax.lax.rsqrt(var + eps)              # (Cpad,)
    shift = beta_p - mean * scale                           # (Cpad,)

    bn_kernel = functools.partial(_bn_relu_kernel, act=act)

    out_nhwc = pl.pallas_call(
        bn_kernel,
        out_shape=jax.ShapeDtypeStruct((N, Ho, Wo, Cpad), jnp.float32),
        grid=(N,),
        in_specs=[
            pl.BlockSpec((1, Ho, Wo, Cpad), lambda n: (n, 0, 0, 0)),
            pl.BlockSpec((1, Cpad), lambda n: (0, 0)),
            pl.BlockSpec((1, Cpad), lambda n: (0, 0)),
        ],
        out_specs=pl.BlockSpec((1, Ho, Wo, Cpad), lambda n: (n, 0, 0, 0)),
        compiler_params=pltpu.CompilerParams(dimension_semantics=("parallel",)),
    )(conv_out, scale.reshape(1, Cpad), shift.reshape(1, Cpad))

    # Drop channel padding and return NCHW to match PyTorch.
    return jnp.transpose(out_nhwc[..., :Cout], (0, 3, 1, 2))


if __name__ == "__main__":
    # Small shapes consistent with the module: N=2, in_c=4, out_c=8, 16x16 spatial.
    N, Cin, H, W = 2, 4, 16, 16
    Cout, K = 8, 3

    key = jax.random.PRNGKey(0)
    kx, kw, kb = jax.random.split(key, 3)

    x = jax.random.normal(kx, (N, Cin, H, W), dtype=jnp.float32)
    # Deterministic synthetic parameters (shapes match nn.Conv2d(4, 8, 3) / BatchNorm2d(8)).
    w = jax.random.normal(kw, (K, K, Cin, Cout), dtype=jnp.float32) * 0.1
    b = jax.random.normal(kb, (Cout,), dtype=jnp.float32) * 0.1
    gamma = jnp.ones((Cout,), dtype=jnp.float32)   # BN default weight
    beta = jnp.zeros((Cout,), dtype=jnp.float32)   # BN default bias

    y = conv2d_bn_relu(x, w, b, gamma, beta,
                       kernel_size=K, padding=1, dilation=1, act=True)
    jax.block_until_ready(y)
    assert y.shape == (N, Cout, H, W)
    print("KERNEL_OK")
</pallas_src>

<mosaic_0001>
module attributes {stable_mosaic.version = 11 : i64} {
  func.func @_conv_bnstats_kernel(%arg0: i32, %arg1: memref<1x18x18x8xbf16, #tpu.memory_space<vmem>>, %arg2: memref<9x8x128xbf16, #tpu.memory_space<vmem>>, %arg3: memref<1x16x16x128xf32, #tpu.memory_space<vmem>>, %arg4: memref<1x2x128xf32, #tpu.memory_space<vmem>>) attributes {dimension_semantics = [#tpu.dimension_semantics<parallel>], iteration_bounds = array<i64: 2>, scalar_prefetch = 0 : i64, scratch_operands = 0 : i64, tpu.core_type = #tpu.core_type<tc>, window_params = [{transform_indices = @transform_0, window_bounds = array<i64: 1, 18, 18, 8>}, {pipeline_mode = #tpu.pipeline_mode<synchronous>, transform_indices = @transform_1, window_bounds = array<i64: 9, 8, 128>}, {transform_indices = @transform_2, window_bounds = array<i64: 1, 16, 16, 128>}, {transform_indices = @transform_3, window_bounds = array<i64: 1, 2, 128>}]} {
    %cst = arith.constant 0.000000e+00 : f32
    %0 = vector.broadcast %cst : f32 to vector<256x128xf32>
    %c0 = arith.constant 0 : index
    %c0_0 = arith.constant 0 : index
    %c0_1 = arith.constant 0 : index
    %c0_2 = arith.constant 0 : index
    %1 = vector.load %arg1[%c0, %c0_0, %c0_1, %c0_2] : memref<1x18x18x8xbf16, #tpu.memory_space<vmem>>, vector<1x16x16x8xbf16>
    %2 = vector.shape_cast %1 : vector<1x16x16x8xbf16> to vector<16x16x8xbf16>
    %3 = vector.shape_cast %2 : vector<16x16x8xbf16> to vector<256x8xbf16>
    %c0_3 = arith.constant 0 : index
    %c0_4 = arith.constant 0 : index
    %c0_5 = arith.constant 0 : index
    %4 = vector.load %arg2[%c0_3, %c0_4, %c0_5] : memref<9x8x128xbf16, #tpu.memory_space<vmem>>, vector<1x8x128xbf16>
    %5 = vector.shape_cast %4 : vector<1x8x128xbf16> to vector<8x128xbf16>
    %cst_6 = arith.constant dense<0.000000e+00> : vector<256x128xf32>
    %6 = tpu.matmul %3, %5, %cst_6 {dimension_numbers = #tpu.dot_dimension_numbers<[1], [0], [0], [1], [0, 0, 1, 1], [], []>} : vector<256x8xbf16>, vector<8x128xbf16>, vector<256x128xf32> -> vector<256x128xf32>
    %7 = arith.addf %0, %6 : vector<256x128xf32>
    %c0_7 = arith.constant 0 : index
    %c0_8 = arith.constant 0 : index
    %c1 = arith.constant 1 : index
    %c0_9 = arith.constant 0 : index
    %8 = vector.load %arg1[%c0_7, %c0_8, %c1, %c0_9] : memref<1x18x18x8xbf16, #tpu.memory_space<vmem>>, vector<1x16x16x8xbf16>
    %9 = vector.shape_cast %8 : vector<1x16x16x8xbf16> to vector<16x16x8xbf16>
    %10 = vector.shape_cast %9 : vector<16x16x8xbf16> to vector<256x8xbf16>
    %c1_10 = arith.constant 1 : index
    %c0_11 = arith.constant 0 : index
    %c0_12 = arith.constant 0 : index
    %11 = vector.load %arg2[%c1_10, %c0_11, %c0_12] : memref<9x8x128xbf16, #tpu.memory_space<vmem>>, vector<1x8x128xbf16>
    %12 = vector.shape_cast %11 : vector<1x8x128xbf16> to vector<8x128xbf16>
    %cst_13 = arith.constant dense<0.000000e+00> : vector<256x128xf32>
    %13 = tpu.matmul %10, %12, %cst_13 {dimension_numbers = #tpu.dot_dimension_numbers<[1], [0], [0], [1], [0, 0, 1, 1], [], []>} : vector<256x8xbf16>, vector<8x128xbf16>, vector<256x128xf32> -> vector<256x128xf32>
    %14 = arith.addf %7, %13 : vector<256x128xf32>
    %c0_14 = arith.constant 0 : index
    %c0_15 = arith.constant 0 : index
    %c2 = arith.constant 2 : index
    %c0_16 = arith.constant 0 : index
    %15 = vector.load %arg1[%c0_14, %c0_15, %c2, %c0_16] : memref<1x18x18x8xbf16, #tpu.memory_space<vmem>>, vector<1x16x16x8xbf16>
    %16 = vector.shape_cast %15 : vector<1x16x16x8xbf16> to vector<16x16x8xbf16>
    %17 = vector.shape_cast %16 : vector<16x16x8xbf16> to vector<256x8xbf16>
    %c2_17 = arith.constant 2 : index
    %c0_18 = arith.constant 0 : index
    %c0_19 = arith.constant 0 : index
    %18 = vector.load %arg2[%c2_17, %c0_18, %c0_19] : memref<9x8x128xbf16, #tpu.memory_space<vmem>>, vector<1x8x128xbf16>
    %19 = vector.shape_cast %18 : vector<1x8x128xbf16> to vector<8x128xbf16>
    %cst_20 = arith.constant dense<0.000000e+00> : vector<256x128xf32>
    %20 = tpu.matmul %17, %19, %cst_20 {dimension_numbers = #tpu.dot_dimension_numbers<[1], [0], [0], [1], [0, 0, 1, 1], [], []>} : vector<256x8xbf16>, vector<8x128xbf16>, vector<256x128xf32> -> vector<256x128xf32>
    %21 = arith.addf %14, %20 : vector<256x128xf32>
    %c0_21 = arith.constant 0 : index
    %c1_22 = arith.constant 1 : index
    %c0_23 = arith.constant 0 : index
    %c0_24 = arith.constant 0 : index
    %22 = vector.load %arg1[%c0_21, %c1_22, %c0_23, %c0_24] : memref<1x18x18x8xbf16, #tpu.memory_space<vmem>>, vector<1x16x16x8xbf16>
    %23 = vector.shape_cast %22 : vector<1x16x16x8xbf16> to vector<16x16x8xbf16>
    %24 = vector.shape_cast %23 : vector<16x16x8xbf16> to vector<256x8xbf16>
    %c3 = arith.constant 3 : index
    %c0_25 = arith.constant 0 : index
    %c0_26 = arith.constant 0 : index
    %25 = vector.load %arg2[%c3, %c0_25, %c0_26] : memref<9x8x128xbf16, #tpu.memory_space<vmem>>, vector<1x8x128xbf16>
    %26 = vector.shape_cast %25 : vector<1x8x128xbf16> to vector<8x128xbf16>
    %cst_27 = arith.constant dense<0.000000e+00> : vector<256x128xf32>
    %27 = tpu.matmul %24, %26, %cst_27 {dimension_numbers = #tpu.dot_dimension_numbers<[1], [0], [0], [1], [0, 0, 1, 1], [], []>} : vector<256x8xbf16>, vector<8x128xbf16>, vector<256x128xf32> -> vector<256x128xf32>
    %28 = arith.addf %21, %27 : vector<256x128xf32>
    %c0_28 = arith.constant 0 : index
    %c1_29 = arith.constant 1 : index
    %c1_30 = arith.constant 1 : index
    %c0_31 = arith.constant 0 : index
    %29 = vector.load %arg1[%c0_28, %c1_29, %c1_30, %c0_31] : memref<1x18x18x8xbf16, #tpu.memory_space<vmem>>, vector<1x16x16x8xbf16>
    %30 = vector.shape_cast %29 : vector<1x16x16x8xbf16> to vector<16x16x8xbf16>
    %31 = vector.shape_cast %30 : vector<16x16x8xbf16> to vector<256x8xbf16>
    %c4 = arith.constant 4 : index
    %c0_32 = arith.constant 0 : index
    %c0_33 = arith.constant 0 : index
    %32 = vector.load %arg2[%c4, %c0_32, %c0_33] : memref<9x8x128xbf16, #tpu.memory_space<vmem>>, vector<1x8x128xbf16>
    %33 = vector.shape_cast %32 : vector<1x8x128xbf16> to vector<8x128xbf16>
    %cst_34 = arith.constant dense<0.000000e+00> : vector<256x128xf32>
    %34 = tpu.matmul %31, %33, %cst_34 {dimension_numbers = #tpu.dot_dimension_numbers<[1], [0], [0], [1], [0, 0, 1, 1], [], []>} : vector<256x8xbf16>, vector<8x128xbf16>, vector<256x128xf32> -> vector<256x128xf32>
    %35 = arith.addf %28, %34 : vector<256x128xf32>
    %c0_35 = arith.constant 0 : index
    %c1_36 = arith.constant 1 : index
    %c2_37 = arith.constant 2 : index
    %c0_38 = arith.constant 0 : index
    %36 = vector.load %arg1[%c0_35, %c1_36, %c2_37, %c0_38] : memref<1x18x18x8xbf16, #tpu.memory_space<vmem>>, vector<1x16x16x8xbf16>
    %37 = vector.shape_cast %36 : vector<1x16x16x8xbf16> to vector<16x16x8xbf16>
    %38 = vector.shape_cast %37 : vector<16x16x8xbf16> to vector<256x8xbf16>
    %c5 = arith.constant 5 : index
    %c0_39 = arith.constant 0 : index
    %c0_40 = arith.constant 0 : index
    %39 = vector.load %arg2[%c5, %c0_39, %c0_40] : memref<9x8x128xbf16, #tpu.memory_space<vmem>>, vector<1x8x128xbf16>
    %40 = vector.shape_cast %39 : vector<1x8x128xbf16> to vector<8x128xbf16>
    %cst_41 = arith.constant dense<0.000000e+00> : vector<256x128xf32>
    %41 = tpu.matmul %38, %40, %cst_41 {dimension_numbers = #tpu.dot_dimension_numbers<[1], [0], [0], [1], [0, 0, 1, 1], [], []>} : vector<256x8xbf16>, vector<8x128xbf16>, vector<256x128xf32> -> vector<256x128xf32>
    %42 = arith.addf %35, %41 : vector<256x128xf32>
    %c0_42 = arith.constant 0 : index
    %c2_43 = arith.constant 2 : index
    %c0_44 = arith.constant 0 : index
    %c0_45 = arith.constant 0 : index
    %43 = vector.load %arg1[%c0_42, %c2_43, %c0_44, %c0_45] : memref<1x18x18x8xbf16, #tpu.memory_space<vmem>>, vector<1x16x16x8xbf16>
    %44 = vector.shape_cast %43 : vector<1x16x16x8xbf16> to vector<16x16x8xbf16>
    %45 = vector.shape_cast %44 : vector<16x16x8xbf16> to vector<256x8xbf16>
    %c6 = arith.constant 6 : index
    %c0_46 = arith.constant 0 : index
    %c0_47 = arith.constant 0 : index
    %46 = vector.load %arg2[%c6, %c0_46, %c0_47] : memref<9x8x128xbf16, #tpu.memory_space<vmem>>, vector<1x8x128xbf16>
    %47 = vector.shape_cast %46 : vector<1x8x128xbf16> to vector<8x128xbf16>
    %cst_48 = arith.constant dense<0.000000e+00> : vector<256x128xf32>
    %48 = tpu.matmul %45, %47, %cst_48 {dimension_numbers = #tpu.dot_dimension_numbers<[1], [0], [0], [1], [0, 0, 1, 1], [], []>} : vector<256x8xbf16>, vector<8x128xbf16>, vector<256x128xf32> -> vector<256x128xf32>
    %49 = arith.addf %42, %48 : vector<256x128xf32>
    %c0_49 = arith.constant 0 : index
    %c2_50 = arith.constant 2 : index
    %c1_51 = arith.constant 1 : index
    %c0_52 = arith.constant 0 : index
    %50 = vector.load %arg1[%c0_49, %c2_50, %c1_51, %c0_52] : memref<1x18x18x8xbf16, #tpu.memory_space<vmem>>, vector<1x16x16x8xbf16>
    %51 = vector.shape_cast %50 : vector<1x16x16x8xbf16> to vector<16x16x8xbf16>
    %52 = vector.shape_cast %51 : vector<16x16x8xbf16> to vector<256x8xbf16>
    %c7 = arith.constant 7 : index
    %c0_53 = arith.constant 0 : index
    %c0_54 = arith.constant 0 : index
    %53 = vector.load %arg2[%c7, %c0_53, %c0_54] : memref<9x8x128xbf16, #tpu.memory_space<vmem>>, vector<1x8x128xbf16>
    %54 = vector.shape_cast %53 : vector<1x8x128xbf16> to vector<8x128xbf16>
    %cst_55 = arith.constant dense<0.000000e+00> : vector<256x128xf32>
    %55 = tpu.matmul %52, %54, %cst_55 {dimension_numbers = #tpu.dot_dimension_numbers<[1], [0], [0], [1], [0, 0, 1, 1], [], []>} : vector<256x8xbf16>, vector<8x128xbf16>, vector<256x128xf32> -> vector<256x128xf32>
    %56 = arith.addf %49, %55 : vector<256x128xf32>
    %c0_56 = arith.constant 0 : index
    %c2_57 = arith.constant 2 : index
    %c2_58 = arith.constant 2 : index
    %c0_59 = arith.constant 0 : index
    %57 = vector.load %arg1[%c0_56, %c2_57, %c2_58, %c0_59] : memref<1x18x18x8xbf16, #tpu.memory_space<vmem>>, vector<1x16x16x8xbf16>
    %58 = vector.shape_cast %57 : vector<1x16x16x8xbf16> to vector<16x16x8xbf16>
    %59 = vector.shape_cast %58 : vector<16x16x8xbf16> to vector<256x8xbf16>
    %c8 = arith.constant 8 : index
    %c0_60 = arith.constant 0 : index
    %c0_61 = arith.constant 0 : index
    %60 = vector.load %arg2[%c8, %c0_60, %c0_61] : memref<9x8x128xbf16, #tpu.memory_space<vmem>>, vector<1x8x128xbf16>
    %61 = vector.shape_cast %60 : vector<1x8x128xbf16> to vector<8x128xbf16>
    %cst_62 = arith.constant dense<0.000000e+00> : vector<256x128xf32>
    %62 = tpu.matmul %59, %61, %cst_62 {dimension_numbers = #tpu.dot_dimension_numbers<[1], [0], [0], [1], [0, 0, 1, 1], [], []>} : vector<256x8xbf16>, vector<8x128xbf16>, vector<256x128xf32> -> vector<256x128xf32>
    %63 = arith.addf %56, %62 : vector<256x128xf32>
    %64 = vector.shape_cast %63 : vector<256x128xf32> to vector<1x16x16x128xf32>
    %c0_63 = arith.constant 0 : index
    %c0_64 = arith.constant 0 : index
    %c0_65 = arith.constant 0 : index
    %c0_66 = arith.constant 0 : index
    %65 = vector.load %arg3[%c0_63, %c0_64, %c0_65, %c0_66] : memref<1x16x16x128xf32, #tpu.memory_space<vmem>>, vector<1x16x16x128xf32>
    tpu.vector_store %arg3[%c0_63, %c0_64, %c0_65, %c0_66], %64 {strides = array<i32>} : memref<1x16x16x128xf32, #tpu.memory_space<vmem>>, vector<1x16x16x128xf32>,
    %cst_67 = arith.constant dense<0.000000e+00> : vector<128xf32>
    %66 = vector.multi_reduction <add>, %63, %cst_67 [0] : vector<256x128xf32> to vector<128xf32>
    %67 = vector.shape_cast %66 : vector<128xf32> to vector<1x128xf32>
    %68 = arith.mulf %63, %63 : vector<256x128xf32>
    %cst_68 = arith.constant dense<0.000000e+00> : vector<128xf32>
    %69 = vector.multi_reduction <add>, %68, %cst_68 [0] : vector<256x128xf32> to vector<128xf32>
    %70 = vector.shape_cast %69 : vector<128xf32> to vector<1x128xf32>
    %c0_69 = arith.constant 0 : index
    %c0_70 = arith.constant 0 : index
    %c0_71 = arith.constant 0 : index
    %71 = vector.load %arg4[%c0_69, %c0_70, %c0_71] : memref<1x2x128xf32, #tpu.memory_space<vmem>>, vector<1x1x128xf32>
    %72 = vector.shape_cast %71 : vector<1x1x128xf32> to vector<1x128xf32>
    %73 = vector.shape_cast %67 : vector<1x128xf32> to vector<1x1x128xf32>
    tpu.vector_store %arg4[%c0_69, %c0_70, %c0_71], %73 {strides = array<i32>} : memref<1x2x128xf32, #tpu.memory_space<vmem>>, vector<1x1x128xf32>,
    %c0_72 = arith.constant 0 : index
    %c1_73 = arith.constant 1 : index
    %c0_74 = arith.constant 0 : index
    %74 = vector.load %arg4[%c0_72, %c1_73, %c0_74] : memref<1x2x128xf32, #tpu.memory_space<vmem>>, vector<1x1x128xf32>
    %75 = vector.shape_cast %74 : vector<1x1x128xf32> to vector<1x128xf32>
    %76 = vector.shape_cast %70 : vector<1x128xf32> to vector<1x1x128xf32>
    tpu.vector_store %arg4[%c0_72, %c1_73, %c0_74], %76 {strides = array<i32>} : memref<1x2x128xf32, #tpu.memory_space<vmem>>, vector<1x1x128xf32>,
    return
  }
  func.func @transform_0(%arg0: i32) -> (i32, i32, i32, i32) {
    %c0_i32 = arith.constant 0 : i32
    %c0_i32_0 = arith.constant 0 : i32
    %c0_i32_1 = arith.constant 0 : i32
    %c0_i32_2 = arith.constant 0 : i32
    return %arg0, %c0_i32, %c0_i32_0, %c0_i32_1 : i32, i32, i32, i32
  }
  func.func @transform_1(%arg0: i32) -> (i32, i32, i32) {
    %c0_i32 = arith.constant 0 : i32
    %c0_i32_0 = arith.constant 0 : i32
    %c0_i32_1 = arith.constant 0 : i32
    %c0_i32_2 = arith.constant 0 : i32
    return %c0_i32, %c0_i32_0, %c0_i32_1 : i32, i32, i32
  }
  func.func @transform_2(%arg0: i32) -> (i32, i32, i32, i32) {
    %c0_i32 = arith.constant 0 : i32
    %c0_i32_0 = arith.constant 0 : i32
    %c0_i32_1 = arith.constant 0 : i32
    %c0_i32_2 = arith.constant 0 : i32
    return %arg0, %c0_i32, %c0_i32_0, %c0_i32_1 : i32, i32, i32, i32
  }
  func.func @transform_3(%arg0: i32) -> (i32, i32, i32) {
    %c0_i32 = arith.constant 0 : i32
    %c0_i32_0 = arith.constant 0 : i32
    %c0_i32_1 = arith.constant 0 : i32
    return %arg0, %c0_i32, %c0_i32_0 : i32, i32, i32
  }
}

</mosaic_0001>

<llo_original>
// kernel: tpu_custom_call.1
$region0: #{tpu_custom_call.1}
  #allocation0 [shape = 'u32[]', space=smem, size = 0x4, offset = 0x4, fixed_abs, tag = 'smem constant byte address 0x4 - core index']
  #allocation1 [shape = 'u32[144,128]{1,0:T(1,128)}', space=vmem, size = 0x12000, scoped, tag = 'internal scratch']
  %s0 = inlined_call_operand.vmem [shape: bf16[2,18,18,8], index: 0, kind: input, shape index: {}]
  %s1 = inlined_call_operand.vmem [shape: bf16[9,8,128], index: 1, kind: input, shape index: {}]
  %s2 = inlined_call_operand.hbm [shape: f32[2,16,16,128], index: 2, kind: output, shape index: {0}]
  %s3 = inlined_call_operand.hbm [shape: f32[2,2,128], index: 3, kind: output, shape index: {1}]
  %4 = xla_tuple %s2, %s3
  %s5 = sld [smem:[#allocation0]]
  $region49: #{tpu_custom_call.1} parent=0
    _
  %s7 = ssub.s32 1, %s5
  %s8 = scalar_select 0, %s7, %s5
  $region1: #{tpu_custom_call.1} parent=0
    #allocation2 [shape = 'u8[262144]{0}', space=vmem, size = 0x40000, scoped, tag = 'output window, operand 0']
    #allocation3 [shape = 's32[2]{0}', space=sflag, size = 0x8, scoped, tag = 'scoped memory for tpu_custom_call.1']
    #allocation4 [shape = 'u8[2048]{0}', space=vmem, size = 0x800, scoped, tag = 'output window, operand 1']
    #allocation5 [shape = 's32[2]{0}', space=sflag, size = 0x8, scoped, tag = 'scoped memory for tpu_custom_call.1']
    %9 = vsyncpa [#allocation3], 0
    %s10 = scalar_lea.sflag [#allocation3], 1
    %11 = vsyncpa %s10, 0
    %12 = vsyncpa [#allocation5], 0
    %s13 = scalar_lea.sflag [#allocation5], 1
    %14 = vsyncpa %s13, 0
    loop: start=0, step=1, limit=4
    $region2: #{tpu_custom_call.1} parent=1 // loop_pre_header
      _
    $region3: #{tpu_custom_call.1} parent=1 // loop_header
      %s16 = sphi 0, %s20
      %p17 = scmp.ge.s32.totalorder %s16, 4
      %s26 = sphi 0, %s28
      %s29 = sphi 0, %s26
      %s30 = sphi 0, %s29
      %s46 = sphi 0, %s30
      %s50 = sphi 0, %s50
      %s52 = sphi 0, %s50
      %s53 = sphi 0, %s52
      %s67 = sphi 0, %s53
      %s73 = sphi 0, %s75
      %s76 = sphi 0, %s73
      %s77 = sphi 0, %s76
      %s93 = sphi 0, %s77
      %s99 = sphi 0, %s101
      %s102 = sphi 0, %s99
      %s103 = sphi 0, %s102
      %s119 = sphi 0, %s103
    $region4: #{tpu_custom_call.1} parent=1 // loop_header_branch
      %19 = sbr.rel (%p17) target = $region8
    $region5: #{tpu_custom_call.1} parent=1 // loop_body
      %s21 = ssub.s32 %s16, 1
      %s22 = ssub.s32 %s16, 2
      %s23 = sadd.s32 %s16, 1
      %s24 = ssub.s32 %s16, %s23
      %p25 = scmp.eq.s32.totalorder %s24, 0
      %s27 = sadd.s32 %s26, 1
      %s28 = scalar_select %p25, %s26, %s27
      %p31 = pneg %p25
      %p32 = scmp.eq.s32.totalorder %s16, 1
      %p33 = por %p31, %p32
      %p34 = scmp.ne.s32.totalorder %s26, %s29
      %p35 = scmp.eq.s32.totalorder %s16, 0
      %p36 = por %p34, %p35
      %p37 = scmp.ne.s32.totalorder %s26, %s29
      %p38 = scmp.eq.s32.totalorder %s21, 1
      %p39 = por %p37, %p38
      %p40 = scmp.ne.s32.totalorder %s29, %s30
      %p41 = scmp.eq.s32.totalorder %s21, 0
      %p42 = por %p40, %p41
      %p43 = scmp.ne.s32.totalorder %s29, %s30
      %p44 = scmp.eq.s32.totalorder %s22, 1
      %p45 = por %p43, %p44
      %p47 = scmp.ne.s32.totalorder %s30, %s46
      %p48 = scmp.eq.s32.totalorder %s22, 0
      %p49 = por %p47, %p48
      %s51 = sadd.s32 %s50, 1
      %p54 = scmp.eq.s32.totalorder %s16, 1
      %p55 = scmp.ne.s32.totalorder %s50, %s52
      %p56 = scmp.eq.s32.totalorder %s16, 0
      %p57 = por %p55, %p56
      %p58 = scmp.ne.s32.totalorder %s50, %s52
      %p59 = scmp.eq.s32.totalorder %s21, 1
      %p60 = por %p58, %p59
      %p61 = scmp.ne.s32.totalorder %s52, %s53
      %p62 = scmp.eq.s32.totalorder %s21, 0
      %p63 = por %p61, %p62
      %p64 = scmp.ne.s32.totalorder %s52, %s53
      %p65 = scmp.eq.s32.totalorder %s22, 1
      %p66 = por %p64, %p65
      %p68 = scmp.ne.s32.totalorder %s53, %s67
      %p69 = scmp.eq.s32.totalorder %s22, 0
      %p70 = por %p68, %p69
      %s71 = ssub.s32 %s16, %s23
      %p72 = scmp.eq.s32.totalorder %s71, 0
      %s74 = sadd.s32 %s73, 1
      %s75 = scalar_select %p72, %s73, %s74
      %p78 = pneg %p72
      %p79 = scmp.eq.s32.totalorder %s16, 1
      %p80 = por %p78, %p79
      %p81 = scmp.ne.s32.totalorder %s73, %s76
      %p82 = scmp.eq.s32.totalorder %s16, 0
      %p83 = por %p81, %p82
      %p84 = scmp.ne.s32.totalorder %s73, %s76
      %p85 = scmp.eq.s32.totalorder %s21, 1
      %p86 = por %p84, %p85
      %p87 = scmp.ne.s32.totalorder %s76, %s77
      %p88 = scmp.eq.s32.totalorder %s21, 0
      %p89 = por %p87, %p88
      %p90 = scmp.ne.s32.totalorder %s76, %s77
      %p91 = scmp.eq.s32.totalorder %s22, 1
      %p92 = por %p90, %p91
      %p94 = scmp.ne.s32.totalorder %s77, %s93
      %p95 = scmp.eq.s32.totalorder %s22, 0
      %p96 = por %p94, %p95
      %s97 = ssub.s32 %s16, %s23
      %p98 = scmp.eq.s32.totalorder %s97, 0
      %s100 = sadd.s32 %s99, 1
      %s101 = scalar_select %p98, %s99, %s100
      %p104 = pneg %p98
      %p105 = scmp.eq.s32.totalorder %s16, 1
      %p106 = por %p104, %p105
      %p107 = scmp.ne.s32.totalorder %s99, %s102
      %p108 = scmp.eq.s32.totalorder %s16, 0
      %p109 = por %p107, %p108
      %p110 = scmp.ne.s32.totalorder %s99, %s102
      %p111 = scmp.eq.s32.totalorder %s21, 1
      %p112 = por %p110, %p111
      %p113 = scmp.ne.s32.totalorder %s102, %s103
      %p114 = scmp.eq.s32.totalorder %s21, 0
      %p115 = por %p113, %p114
      %p116 = scmp.ne.s32.totalorder %s102, %s103
      %p117 = scmp.eq.s32.totalorder %s22, 1
      %p118 = por %p116, %p117
      %p120 = scmp.ne.s32.totalorder %s103, %s119
      %p121 = scmp.eq.s32.totalorder %s22, 0
      %p122 = por %p120, %p121
      %p123 = scmp.le.s32.totalorder 1, %s16
      %p124 = scmp.lt.s32.totalorder %s16, 3
      %p125 = pnand %p123, %p124
      %p126 = pneg %p125
      // Predicated region
      $region9: #{tpu_custom_call.1} parent=5 // pred_check
        _
      $region10: #{tpu_custom_call.1} parent=5 // pred_check_branch
        %128 = sbr.rel (%p125) target = $region12
      $region11: #{tpu_custom_call.1} parent=5 // pred_region
        %s129 = ssub.s32 %s16, 1
        // Predicated region
        $region13: #{tpu_custom_call.1} parent=11 // pred_check
          %p130 = pneg %p63
        $region14: #{tpu_custom_call.1} parent=11 // pred_check_branch
          %132 = sbr.rel (%p130) target = $region16
        $region15: #{tpu_custom_call.1} parent=11 // pred_region
          _
        $region16: #{tpu_custom_call.1} parent=11 // pred_fallthru
          _
      $region12: #{tpu_custom_call.1} parent=5 // pred_fallthru
        _
      %p133 = scmp.lt.s32.totalorder %s16, 2
      // Predicated region
      $region17: #{tpu_custom_call.1} parent=5 // pred_check
        %p134 = pneg %p133
      $region18: #{tpu_custom_call.1} parent=5 // pred_check_branch
        %136 = sbr.rel (%p134) target = $region20
      $region19: #{tpu_custom_call.1} parent=5 // pred_region
        // Predicated region
        $region21: #{tpu_custom_call.1} parent=19 // pred_check
          %p137 = pneg %p36
        $region22: #{tpu_custom_call.1} parent=19 // pred_check_branch
          %139 = sbr.rel (%p137) target = $region24
        $region23: #{tpu_custom_call.1} parent=19 // pred_region
          %p140 = scmp.lt.s32.totalorder %s16, 1
          %s141 = scalar_select %p140, %s16, 1
          %s142 = smul.addr %s141, 54
          %s143 = smul.addr %s142, 4
          %s144 = scalar_lea.vmem %s0, %s143
        $region24: #{tpu_custom_call.1} parent=19 // pred_fallthru
          _
      $region20: #{tpu_custom_call.1} parent=5 // pred_fallthru
        _
      %p145 = scmp.le.s32.totalorder 1, %s16
      %p146 = scmp.lt.s32.totalorder %s16, 3
      %p147 = pnand %p145, %p146
      %p148 = pneg %p147
      // Predicated region
      $region25: #{tpu_custom_call.1} parent=5 // pred_check
        _
      $region26: #{tpu_custom_call.1} parent=5 // pred_check_branch
        %150 = sbr.rel (%p147) target = $region28
      $region27: #{tpu_custom_call.1} parent=5 // pred_region
        %s151 = ssub.s32 %s16, 1
        %p152 = scmp.lt.s32.totalorder %s21, 1
        %s153 = scalar_select %p152, %s21, 1
        %s154 = smul.addr %s153, 54
        %s155 = smul.addr %s154, 4
        %s156 = scalar_lea.vmem %s0, %s155
        %p157 = pneg %p42
        %p158 = pneg %p39
        %p159 = pneg %p63
        %p160 = pneg %p60
        %p161 = pneg %p89
        %p162 = pneg %p86
        %s163 = sand.u32 %s76, 1
        %s164 = scalar_lea.sflag [#allocation3], %s163
        %s165 = sand.u32 %s76, 1
        %s166 = smul.addr %s165, 256
        %s167 = scalar_lea.vmem [#allocation2], %s166
        %p168 = pneg %p115
        %p169 = pneg %p112
        %s170 = sand.u32 %s102, 1
        %s171 = scalar_lea.sflag [#allocation5], %s170
        %s172 = sand.u32 %s102, 1
        %s173 = smul.addr %s172, 2
        %s174 = scalar_lea.vmem [#allocation4], %s173
        %p175 = scmp.lt.s32.totalorder %s21, 1
        %s176 = scalar_select %p175, %s21, 1
        %s177 = smul.addr %s176, 54
        %s178 = smul.addr %s177, 4
        %s179 = scalar_lea.vmem %s0, %s178
        %v181 = vld [vmem:[%s179] sm:$0xf]
        %v182 = vld [vmem:[%s179 + $0x4] sm:$0xf]
        %v183 = vld [vmem:[%s179 + $0xc] sm:$0xf]
        %v184 = vld [vmem:[%s179 + $0x10] sm:$0xf]
        %v185 = vld [vmem:[%s179 + $0x18] sm:$0xf]
        %v186 = vld [vmem:[%s179 + $0x1c] sm:$0xf]
        %v187 = vld [vmem:[%s179 + $0x24] sm:$0xf]
        %v188 = vld [vmem:[%s179 + $0x28] sm:$0xf]
        %v189 = vld [vmem:[%s179 + $0x30] sm:$0xf]
        %v190 = vld [vmem:[%s179 + $0x34] sm:$0xf]
        %v191 = vld [vmem:[%s179 + $0x3c] sm:$0xf]
        %v192 = vld [vmem:[%s179 + $0x40] sm:$0xf]
        %v193 = vld [vmem:[%s179 + $0x48] sm:$0xf]
        %v194 = vld [vmem:[%s179 + $0x4c] sm:$0xf]
        %v195 = vld [vmem:[%s179 + $0x54] sm:$0xf]
        %v196 = vld [vmem:[%s179 + $0x58] sm:$0xf]
        %v197 = vld [vmem:[%s179 + $0x60] sm:$0xf]
        %v198 = vld [vmem:[%s179 + $0x64] sm:$0xf]
        %v199 = vld [vmem:[%s179 + $0x6c] sm:$0xf]
        %v200 = vld [vmem:[%s179 + $0x70] sm:$0xf]
        %v201 = vld [vmem:[%s179 + $0x78] sm:$0xf]
        %v202 = vld [vmem:[%s179 + $0x7c] sm:$0xf]
        %v203 = vld [vmem:[%s179 + $0x84] sm:$0xf]
        %v204 = vld [vmem:[%s179 + $0x88] sm:$0xf]
        %v205 = vld [vmem:[%s179 + $0x90] sm:$0xf]
        %v206 = vld [vmem:[%s179 + $0x94] sm:$0xf]
        %v207 = vld [vmem:[%s179 + $0x9c] sm:$0xf]
        %v208 = vld [vmem:[%s179 + $0xa0] sm:$0xf]
        %v209 = vld [vmem:[%s179 + $0xa8] sm:$0xf]
        %v210 = vld [vmem:[%s179 + $0xac] sm:$0xf]
        %v211 = vld [vmem:[%s179 + $0xb4] sm:$0xf]
        %v212 = vld [vmem:[%s179 + $0xb8] sm:$0xf]
        %v213 = vld [vmem:[%s1] sm:$0xf]
        %v214 = vld [vmem:[%s179 + $0x8] sm:$0x1]
        %v215 = vld [vmem:[%s179 + $0x14] sm:$0x1]
        %v216 = vld [vmem:[%s179 + $0x20] sm:$0x1]
        %v217 = vld [vmem:[%s179 + $0x2c] sm:$0x1]
        %v218 = vld [vmem:[%s179 + $0x38] sm:$0x1]
        %v219 = vld [vmem:[%s179 + $0x44] sm:$0x1]
        %v220 = vld [vmem:[%s179 + $0x50] sm:$0x1]
        %v221 = vld [vmem:[%s179 + $0x5c] sm:$0x1]
        %v222 = vld [vmem:[%s179 + $0x68] sm:$0x1]
        %v223 = vld [vmem:[%s179 + $0x74] sm:$0x1]
        %v224 = vld [vmem:[%s179 + $0x80] sm:$0x1]
        %v225 = vld [vmem:[%s179 + $0x8c] sm:$0x1]
        %v226 = vld [vmem:[%s179 + $0x98] sm:$0x1]
        %v227 = vld [vmem:[%s179 + $0xa4] sm:$0x1]
        %v228 = vld [vmem:[%s179 + $0xb0] sm:$0x1]
        %v229 = vld [vmem:[%s179 + $0xbc] sm:$0x1]
        %vm230 = vsmask.f32 3328
        %vm231 = vsmask.f32 7440
        %vm232 = vmor %vm230, %vm231
        %v234 = vshrl.u32 %v181, 16
        %v236 = vrot.slane %v234, 4
        %v237 = vshll.u32 %v181, 16
        %v239 = vrot.slane %v237, 5
        %v240 = vor.u32 %v236, %v239
        %v241 = vrot.slane %v240, 4
        %v243 = vshll.u32 %v182, 16
        %v245 = vrot.slane %v243, 5
        %v246 = vsel %vm232, %v241, %v245
        %v247 = vshrl.u32 %v182, 16
        %v249 = vrot.slane %v247, 4
        %v250 = vor.u32 %v249, %v245
        %v251 = vrot.slane %v250, 4
        %v253 = vshll.u32 %v214, 16
        %v255 = vrot.slane %v253, 5
        %v256 = vsel %vm232, %v251, %v255
        %v258 = vshrl.u32 %v183, 16
        %v260 = vrot.slane %v258, 4
        %v261 = vshll.u32 %v183, 16
        %v263 = vrot.slane %v261, 5
        %v264 = vor.u32 %v260, %v263
        %v265 = vrot.slane %v264, 4
        %v267 = vshll.u32 %v184, 16
        %v269 = vrot.slane %v267, 5
        %v270 = vsel %vm232, %v265, %v269
        %v271 = vshrl.u32 %v184, 16
        %v273 = vrot.slane %v271, 4
        %v274 = vor.u32 %v273, %v269
        %v275 = vrot.slane %v274, 4
        %v277 = vshll.u32 %v215, 16
        %v279 = vrot.slane %v277, 5
        %v280 = vsel %vm232, %v275, %v279
        %v282 = vshrl.u32 %v185, 16
        %v284 = vrot.slane %v282, 4
        %v285 = vshll.u32 %v185, 16
        %v287 = vrot.slane %v285, 5
        %v288 = vor.u32 %v284, %v287
        %v289 = vrot.slane %v288, 4
        %v291 = vshll.u32 %v186, 16
        %v293 = vrot.slane %v291, 5
        %v294 = vsel %vm232, %v289, %v293
        %v295 = vshrl.u32 %v186, 16
        %v297 = vrot.slane %v295, 4
        %v298 = vor.u32 %v297, %v293
        %v299 = vrot.slane %v298, 4
        %v301 = vshll.u32 %v216, 16
        %v303 = vrot.slane %v301, 5
        %v304 = vsel %vm232, %v299, %v303
        %v306 = vshrl.u32 %v187, 16
        %v308 = vrot.slane %v306, 4
        %v309 = vshll.u32 %v187, 16
        %v311 = vrot.slane %v309, 5
        %v312 = vor.u32 %v308, %v311
        %v313 = vrot.slane %v312, 4
        %v315 = vshll.u32 %v188, 16
        %v317 = vrot.slane %v315, 5
        %v318 = vsel %vm232, %v313, %v317
        %v319 = vshrl.u32 %v188, 16
        %v321 = vrot.slane %v319, 4
        %v322 = vor.u32 %v321, %v317
        %v323 = vrot.slane %v322, 4
        %v325 = vshll.u32 %v217, 16
        %v327 = vrot.slane %v325, 5
        %v328 = vsel %vm232, %v323, %v327
        %v330 = vshrl.u32 %v189, 16
        %v332 = vrot.slane %v330, 4
        %v333 = vshll.u32 %v189, 16
        %v335 = vrot.slane %v333, 5
        %v336 = vor.u32 %v332, %v335
        %v337 = vrot.slane %v336, 4
        %v339 = vshll.u32 %v190, 16
        %v341 = vrot.slane %v339, 5
        %v342 = vsel %vm232, %v337, %v341
        %v343 = vshrl.u32 %v190, 16
        %v345 = vrot.slane %v343, 4
        %v346 = vor.u32 %v345, %v341
        %v347 = vrot.slane %v346, 4
        %v349 = vshll.u32 %v218, 16
        %v351 = vrot.slane %v349, 5
        %v352 = vsel %vm232, %v347, %v351
        %v354 = vshrl.u32 %v191, 16
        %v356 = vrot.slane %v354, 4
        %v357 = vshll.u32 %v191, 16
        %v359 = vrot.slane %v357, 5
        %v360 = vor.u32 %v356, %v359
        %v361 = vrot.slane %v360, 4
        %v363 = vshll.u32 %v192, 16
        %v365 = vrot.slane %v363, 5
        %v366 = vsel %vm232, %v361, %v365
        %v367 = vshrl.u32 %v192, 16
        %v369 = vrot.slane %v367, 4
        %v370 = vor.u32 %v369, %v365
        %v371 = vrot.slane %v370, 4
        %v373 = vshll.u32 %v219, 16
        %v375 = vrot.slane %v373, 5
        %v376 = vsel %vm232, %v371, %v375
        %v378 = vshrl.u32 %v193, 16
        %v380 = vrot.slane %v378, 4
        %v381 = vshll.u32 %v193, 16
        %v383 = vrot.slane %v381, 5
        %v384 = vor.u32 %v380, %v383
        %v385 = vrot.slane %v384, 4
        %v387 = vshll.u32 %v194, 16
        %v389 = vrot.slane %v387, 5
        %v390 = vsel %vm232, %v385, %v389
        %v391 = vshrl.u32 %v194, 16
        %v393 = vrot.slane %v391, 4
        %v394 = vor.u32 %v393, %v389
        %v395 = vrot.slane %v394, 4
        %v397 = vshll.u32 %v220, 16
        %v399 = vrot.slane %v397, 5
        %v400 = vsel %vm232, %v395, %v399
        %v402 = vshrl.u32 %v195, 16
        %v404 = vrot.slane %v402, 4
        %v405 = vshll.u32 %v195, 16
        %v407 = vrot.slane %v405, 5
        %v408 = vor.u32 %v404, %v407
        %v409 = vrot.slane %v408, 4
        %v411 = vshll.u32 %v196, 16
        %v413 = vrot.slane %v411, 5
        %v414 = vsel %vm232, %v409, %v413
        %v415 = vshrl.u32 %v196, 16
        %v417 = vrot.slane %v415, 4
        %v418 = vor.u32 %v417, %v413
        %v419 = vrot.slane %v418, 4
        %v421 = vshll.u32 %v221, 16
        %v423 = vrot.slane %v421, 5
        %v424 = vsel %vm232, %v419, %v423
        %v426 = vshrl.u32 %v197, 16
        %v428 = vrot.slane %v426, 4
        %v429 = vshll.u32 %v197, 16
        %v431 = vrot.slane %v429, 5
        %v432 = vor.u32 %v428, %v431
        %v433 = vrot.slane %v432, 4
        %v435 = vshll.u32 %v198, 16
        %v437 = vrot.slane %v435, 5
        %v438 = vsel %vm232, %v433, %v437
        %v439 = vshrl.u32 %v198, 16
        %v441 = vrot.slane %v439, 4
        %v442 = vor.u32 %v441, %v437
        %v443 = vrot.slane %v442, 4
        %v445 = vshll.u32 %v222, 16
        %v447 = vrot.slane %v445, 5
        %v448 = vsel %vm232, %v443, %v447
        %v450 = vshrl.u32 %v199, 16
        %v452 = vrot.slane %v450, 4
        %v453 = vshll.u32 %v199, 16
        %v455 = vrot.slane %v453, 5
        %v456 = vor.u32 %v452, %v455
        %v457 = vrot.slane %v456, 4
        %v459 = vshll.u32 %v200, 16
        %v461 = vrot.slane %v459, 5
        %v462 = vsel %vm232, %v457, %v461
        %v463 = vshrl.u32 %v200, 16
        %v465 = vrot.slane %v463, 4
        %v466 = vor.u32 %v465, %v461
        %v467 = vrot.slane %v466, 4
        %v469 = vshll.u32 %v223, 16
        %v471 = vrot.slane %v469, 5
        %v472 = vsel %vm232, %v467, %v471
        %v474 = vshrl.u32 %v201, 16
        %v476 = vrot.slane %v474, 4
        %v477 = vshll.u32 %v201, 16
        %v479 = vrot.slane %v477, 5
        %v480 = vor.u32 %v476, %v479
        %v481 = vrot.slane %v480, 4
        %v483 = vshll.u32 %v202, 16
        %v485 = vrot.slane %v483, 5
        %v486 = vsel %vm232, %v481, %v485
        %v487 = vshrl.u32 %v202, 16
        %v489 = vrot.slane %v487, 4
        %v490 = vor.u32 %v489, %v485
        %v491 = vrot.slane %v490, 4
        %v493 = vshll.u32 %v224, 16
        %v495 = vrot.slane %v493, 5
        %v496 = vsel %vm232, %v491, %v495
        %v498 = vshrl.u32 %v203, 16
        %v500 = vrot.slane %v498, 4
        %v501 = vshll.u32 %v203, 16
        %v503 = vrot.slane %v501, 5
        %v504 = vor.u32 %v500, %v503
        %v505 = vrot.slane %v504, 4
        %v507 = vshll.u32 %v204, 16
        %v509 = vrot.slane %v507, 5
        %v510 = vsel %vm232, %v505, %v509
        %v511 = vshrl.u32 %v204, 16
        %v513 = vrot.slane %v511, 4
        %v514 = vor.u32 %v513, %v509
        %v515 = vrot.slane %v514, 4
        %v517 = vshll.u32 %v225, 16
        %v519 = vrot.slane %v517, 5
        %v520 = vsel %vm232, %v515, %v519
        %v522 = vshrl.u32 %v205, 16
        %v524 = vrot.slane %v522, 4
        %v525 = vshll.u32 %v205, 16
        %v527 = vrot.slane %v525, 5
        %v528 = vor.u32 %v524, %v527
        %v529 = vrot.slane %v528, 4
        %v531 = vshll.u32 %v206, 16
        %v533 = vrot.slane %v531, 5
        %v534 = vsel %vm232, %v529, %v533
        %v535 = vshrl.u32 %v206, 16
        %v537 = vrot.slane %v535, 4
        %v538 = vor.u32 %v537, %v533
        %v539 = vrot.slane %v538, 4
        %v541 = vshll.u32 %v226, 16
        %v543 = vrot.slane %v541, 5
        %v544 = vsel %vm232, %v539, %v543
        %v546 = vshrl.u32 %v207, 16
        %v548 = vrot.slane %v546, 4
        %v549 = vshll.u32 %v207, 16
        %v551 = vrot.slane %v549, 5
        %v552 = vor.u32 %v548, %v551
        %v553 = vrot.slane %v552, 4
        %v555 = vshll.u32 %v208, 16
        %v557 = vrot.slane %v555, 5
        %v558 = vsel %vm232, %v553, %v557
        %v559 = vshrl.u32 %v208, 16
        %v561 = vrot.slane %v559, 4
        %v562 = vor.u32 %v561, %v557
        %v563 = vrot.slane %v562, 4
        %v565 = vshll.u32 %v227, 16
        %v567 = vrot.slane %v565, 5
        %v568 = vsel %vm232, %v563, %v567
        %v570 = vshrl.u32 %v209, 16
        %v572 = vrot.slane %v570, 4
        %v573 = vshll.u32 %v209, 16
        %v575 = vrot.slane %v573, 5
        %v576 = vor.u32 %v572, %v575
        %v577 = vrot.slane %v576, 4
        %v579 = vshll.u32 %v210, 16
        %v581 = vrot.slane %v579, 5
        %v582 = vsel %vm232, %v577, %v581
        %v583 = vshrl.u32 %v210, 16
        %v585 = vrot.slane %v583, 4
        %v586 = vor.u32 %v585, %v581
        %v587 = vrot.slane %v586, 4
        %v589 = vshll.u32 %v228, 16
        %v591 = vrot.slane %v589, 5
        %v592 = vsel %vm232, %v587, %v591
        %v594 = vshrl.u32 %v211, 16
        %v596 = vrot.slane %v594, 4
        %v597 = vshll.u32 %v211, 16
        %v599 = vrot.slane %v597, 5
        %v600 = vor.u32 %v596, %v599
        %v601 = vrot.slane %v600, 4
        %v603 = vshll.u32 %v212, 16
        %v605 = vrot.slane %v603, 5
        %v606 = vsel %vm232, %v601, %v605
        %v607 = vshrl.u32 %v212, 16
        %v609 = vrot.slane %v607, 4
        %v610 = vor.u32 %v609, %v605
        %v611 = vrot.slane %v610, 4
        %v613 = vshll.u32 %v229, 16
        %v615 = vrot.slane %v613, 5
        %v616 = vsel %vm232, %v611, %v615
        %s617 = scalar_lea.vmem %s1, 4
        %v618 = vld [vmem:[%s617] sm:$0xf]
        %v619 = vunpack.c.l.b16 %v246
        %v620 = vunpack.c.l.b16 %v256
        %v621 = vunpack.c.l.b16 %v270
        %v622 = vunpack.c.l.b16 %v280
        %v623 = vunpack.c.l.b16 %v294
        %v624 = vunpack.c.l.b16 %v304
        %v625 = vunpack.c.l.b16 %v318
        %v626 = vunpack.c.l.b16 %v328
        %v627 = vunpack.c.l.b16 %v342
        %v628 = vunpack.c.l.b16 %v352
        %v629 = vunpack.c.l.b16 %v366
        %v630 = vunpack.c.l.b16 %v376
        %v631 = vunpack.c.l.b16 %v390
        %v632 = vunpack.c.l.b16 %v400
        %v633 = vunpack.c.l.b16 %v414
        %v634 = vunpack.c.l.b16 %v424
        %v635 = vunpack.c.l.b16 %v438
        %v636 = vunpack.c.l.b16 %v448
        %v637 = vunpack.c.l.b16 %v462
        %v638 = vunpack.c.l.b16 %v472
        %v639 = vunpack.c.l.b16 %v486
        %v640 = vunpack.c.l.b16 %v496
        %v641 = vunpack.c.l.b16 %v510
        %v642 = vunpack.c.l.b16 %v520
        %v643 = vunpack.c.l.b16 %v534
        %v644 = vunpack.c.l.b16 %v544
        %v645 = vunpack.c.l.b16 %v558
        %v646 = vunpack.c.l.b16 %v568
        %v647 = vunpack.c.l.b16 %v582
        %v648 = vunpack.c.l.b16 %v592
        %v649 = vunpack.c.l.b16 %v606
        %v650 = vunpack.c.l.b16 %v616
        %v651 = vpack.c.b16 %v620, %v619
        %v652 = vpack.c.b16 %v622, %v621
        %v653 = vpack.c.b16 %v624, %v623
        %v654 = vpack.c.b16 %v626, %v625
        %v655 = vpack.c.b16 %v628, %v627
        %v656 = vpack.c.b16 %v630, %v629
        %v657 = vpack.c.b16 %v632, %v631
        %v658 = vpack.c.b16 %v634, %v633
        %v659 = vpack.c.b16 %v636, %v635
        %v660 = vpack.c.b16 %v638, %v637
        %v661 = vpack.c.b16 %v640, %v639
        %v662 = vpack.c.b16 %v642, %v641
        %v663 = vpack.c.b16 %v644, %v643
        %v664 = vpack.c.b16 %v646, %v645
        %v665 = vpack.c.b16 %v648, %v647
        %v666 = vpack.c.b16 %v650, %v649
        %vm667 = vcmask 64512
        %v669 = vsel %vm667, %v651, 0
        %v672 = vsel %vm667, %v652, 0
        %v675 = vsel %vm667, %v653, 0
        %v678 = vsel %vm667, %v654, 0
        %v681 = vsel %vm667, %v655, 0
        %v684 = vsel %vm667, %v656, 0
        %v687 = vsel %vm667, %v657, 0
        %v690 = vsel %vm667, %v658, 0
        %v693 = vsel %vm667, %v659, 0
        %v696 = vsel %vm667, %v660, 0
        %v699 = vsel %vm667, %v661, 0
        %v702 = vsel %vm667, %v662, 0
        %v705 = vsel %vm667, %v663, 0
        %v708 = vsel %vm667, %v664, 0
        %v711 = vsel %vm667, %v665, 0
        %v714 = vsel %vm667, %v666, 0
        %vm716 = vcmask 1043456
        %v718 = vsel %vm716, %v618, 0
        %720 = vmatprep.subr.bf16.mxu0 0
        %721 = vmatpush1.bf16.msra.mxu0 %v718
        %722 = vmatprep.subr.bf16.mxu0 0
        %723 = vmatpush1.bf16.msra.mxu0 0
        %724 = vmatprep.subr.bf16.mxu0 0
        %725 = vmatpush1.bf16.msra.mxu0 0
        %726 = vmatprep.subr.bf16.mxu0 0
        %727 = vmatpush1.bf16.msra.mxu0 0
        %728 = vmatprep.subr.bf16.mxu0 0
        %729 = vmatpush1.bf16.msra.mxu0 0
        %730 = vmatprep.subr.bf16.mxu0 0
        %731 = vmatpush1.bf16.msra.mxu0 0
        %732 = vmatprep.subr.bf16.mxu0 0
        %733 = vmatpush1.bf16.msra.mxu0 0
        %734 = vmatprep.subr.bf16.mxu0 0
        %735 = vmatpush1.bf16.msra.mxu0 0
        %736 = vmatprep.subr.bf16.mxu0 0
        %737 = vmatpush1.bf16.msra.mxu0 0
        %738 = vmatprep.subr.bf16.mxu0 0
        %739 = vmatpush1.bf16.msra.mxu0 0
        %740 = vmatprep.subr.bf16.mxu0 0
        %741 = vmatpush1.bf16.msra.mxu0 0
        %742 = vmatprep.subr.bf16.mxu0 0
        %743 = vmatpush1.bf16.msra.mxu0 0
        %744 = vmatprep.subr.bf16.mxu0 0
        %745 = vmatpush1.bf16.msra.mxu0 0
        %746 = vmatprep.subr.bf16.mxu0 0
        %747 = vmatpush1.bf16.msra.mxu0 0
        %748 = vmatprep.subr.bf16.mxu0 0
        %749 = vmatpush1.bf16.msra.mxu0 0
        %750 = vmatprep.subr.bf16.mxu0 0
        %751 = vmatpush1.bf16.msra.mxu0 0
        %752 = vmatprep.mubr.bf16.mxu0 0
        %753 = vmatmul.mubr.bf16.gmra.mrb[0].mxu0 %v669
        %v754 = vpop.f32.mrb[0].mxu0
        %v755 = vadd.f32 0.0, %v754
        %v756 = vpop.f32.mrb[0].mxu0
        %v757 = vpop.f32.mrb[0].mxu0
        %v758 = vadd.f32 0.0, %v757
        %v759 = vpop.f32.mrb[0].mxu0
        %760 = vmatprep.mubr.bf16.mxu0 0
        %761 = vmatmul.mubr.bf16.gmra.mrb[0].mxu0 %v672
        %v762 = vpop.f32.mrb[0].mxu0
        %v763 = vadd.f32 0.0, %v762
        %v764 = vpop.f32.mrb[0].mxu0
        %v765 = vpop.f32.mrb[0].mxu0
        %v766 = vadd.f32 0.0, %v765
        %v767 = vpop.f32.mrb[0].mxu0
        %768 = vmatprep.mubr.bf16.mxu0 0
        %769 = vmatmul.mubr.bf16.gmra.mrb[0].mxu0 %v675
        %v770 = vpop.f32.mrb[0].mxu0
        %v771 = vadd.f32 0.0, %v770
        %v772 = vpop.f32.mrb[0].mxu0
        %v773 = vpop.f32.mrb[0].mxu0
        %v774 = vadd.f32 0.0, %v773
        %v775 = vpop.f32.mrb[0].mxu0
        %776 = vmatprep.mubr.bf16.mxu0 0
        %777 = vmatmul.mubr.bf16.gmra.mrb[0].mxu0 %v678
        %v778 = vpop.f32.mrb[0].mxu0
        %v779 = vadd.f32 0.0, %v778
        %v780 = vpop.f32.mrb[0].mxu0
        %v781 = vpop.f32.mrb[0].mxu0
        %v782 = vadd.f32 0.0, %v781
        %v783 = vpop.f32.mrb[0].mxu0
        %784 = vmatprep.mubr.bf16.mxu0 0
        %785 = vmatmul.mubr.bf16.gmra.mrb[0].mxu0 %v681
        %v786 = vpop.f32.mrb[0].mxu0
        %v787 = vadd.f32 0.0, %v786
        %v788 = vpop.f32.mrb[0].mxu0
        %v789 = vpop.f32.mrb[0].mxu0
        %v790 = vadd.f32 0.0, %v789
        %v791 = vpop.f32.mrb[0].mxu0
        %792 = vmatprep.mubr.bf16.mxu0 0
        %793 = vmatmul.mubr.bf16.gmra.mrb[0].mxu0 %v684
        %v794 = vpop.f32.mrb[0].mxu0
        %v795 = vadd.f32 0.0, %v794
        %v796 = vpop.f32.mrb[0].mxu0
        %v797 = vpop.f32.mrb[0].mxu0
        %v798 = vadd.f32 0.0, %v797
        %v799 = vpop.f32.mrb[0].mxu0
        %800 = vmatprep.mubr.bf16.mxu0 0
        %801 = vmatmul.mubr.bf16.gmra.mrb[0].mxu0 %v687
        %v802 = vpop.f32.mrb[0].mxu0
        %v803 = vadd.f32 0.0, %v802
        %v804 = vpop.f32.mrb[0].mxu0
        %v805 = vpop.f32.mrb[0].mxu0
        %v806 = vadd.f32 0.0, %v805
        %v807 = vpop.f32.mrb[0].mxu0
        %808 = vmatprep.mubr.bf16.mxu0 0
        %809 = vmatmul.mubr.bf16.gmra.mrb[0].mxu0 %v690
        %v810 = vpop.f32.mrb[0].mxu0
        %v811 = vadd.f32 0.0, %v810
        %v812 = vpop.f32.mrb[0].mxu0
        %v813 = vpop.f32.mrb[0].mxu0
        %v814 = vadd.f32 0.0, %v813
        %v815 = vpop.f32.mrb[0].mxu0
        %816 = vmatprep.mubr.bf16.mxu0 0
        %817 = vmatmul.mubr.bf16.gmra.mrb[0].mxu0 %v693
        %v818 = vpop.f32.mrb[0].mxu0
        %v819 = vadd.f32 0.0, %v818
        %v820 = vpop.f32.mrb[0].mxu0
        %v821 = vpop.f32.mrb[0].mxu0
        %v822 = vadd.f32 0.0, %v821
        %v823 = vpop.f32.mrb[0].mxu0
        %824 = vmatprep.mubr.bf16.mxu0 0
        %825 = vmatmul.mubr.bf16.gmra.mrb[0].mxu0 %v696
        %v826 = vpop.f32.mrb[0].mxu0
        %v827 = vadd.f32 0.0, %v826
        %v828 = vpop.f32.mrb[0].mxu0
        %v829 = vpop.f32.mrb[0].mxu0
        %v830 = vadd.f32 0.0, %v829
        %v831 = vpop.f32.mrb[0].mxu0
        %832 = vmatprep.mubr.bf16.mxu0 0
        %833 = vmatmul.mubr.bf16.gmra.mrb[0].mxu0 %v699
        %v834 = vpop.f32.mrb[0].mxu0
        %v835 = vadd.f32 0.0, %v834
        %v836 = vpop.f32.mrb[0].mxu0
        %v837 = vpop.f32.mrb[0].mxu0
        %v838 = vadd.f32 0.0, %v837
        %v839 = vpop.f32.mrb[0].mxu0
        %840 = vmatprep.mubr.bf16.mxu0 0
        %841 = vmatmul.mubr.bf16.gmra.mrb[0].mxu0 %v702
        %v842 = vpop.f32.mrb[0].mxu0
        %v843 = vadd.f32 0.0, %v842
        %v844 = vpop.f32.mrb[0].mxu0
        %v845 = vpop.f32.mrb[0].mxu0
        %v846 = vadd.f32 0.0, %v845
        %v847 = vpop.f32.mrb[0].mxu0
        %848 = vmatprep.mubr.bf16.mxu0 0
        %849 = vmatmul.mubr.bf16.gmra.mrb[0].mxu0 %v705
        %v850 = vpop.f32.mrb[0].mxu0
        %v851 = vadd.f32 0.0, %v850
        %v852 = vpop.f32.mrb[0].mxu0
        %v853 = vpop.f32.mrb[0].mxu0
        %v854 = vadd.f32 0.0, %v853
        %v855 = vpop.f32.mrb[0].mxu0
        %856 = vmatprep.mubr.bf16.mxu0 0
        %857 = vmatmul.mubr.bf16.gmra.mrb[0].mxu0 %v708
        %v858 = vpop.f32.mrb[0].mxu0
        %v859 = vadd.f32 0.0, %v858
        %v860 = vpop.f32.mrb[0].mxu0
        %v861 = vpop.f32.mrb[0].mxu0
        %v862 = vadd.f32 0.0, %v861
        %v863 = vpop.f32.mrb[0].mxu0
        %864 = vmatprep.mubr.bf16.mxu0 0
        %865 = vmatmul.mubr.bf16.gmra.mrb[0].mxu0 %v711
        %v866 = vpop.f32.mrb[0].mxu0
        %v867 = vadd.f32 0.0, %v866
        %v868 = vpop.f32.mrb[0].mxu0
        %v869 = vpop.f32.mrb[0].mxu0
        %v870 = vadd.f32 0.0, %v869
        %v871 = vpop.f32.mrb[0].mxu0
        %872 = vmatprep.mubr.bf16.mxu0 0
        %873 = vmatmul.mubr.bf16.gmra.mrb[0].mxu0 %v714
        %v874 = vpop.f32.mrb[0].mxu0
        %v875 = vadd.f32 0.0, %v874
        %v876 = vpop.f32.mrb[0].mxu0
        %v877 = vpop.f32.mrb[0].mxu0
        %v878 = vadd.f32 0.0, %v877
        %v879 = vpop.f32.mrb[0].mxu0
        %880 = vdwg.mxu0
        %v913 = vunpack.c.l.b16 %v181
        %v914 = vunpack.c.l.b16 %v182
        %v915 = vunpack.c.l.b16 %v183
        %v916 = vunpack.c.l.b16 %v184
        %v917 = vunpack.c.l.b16 %v185
        %v918 = vunpack.c.l.b16 %v186
        %v919 = vunpack.c.l.b16 %v187
        %v920 = vunpack.c.l.b16 %v188
        %v921 = vunpack.c.l.b16 %v189
        %v922 = vunpack.c.l.b16 %v190
        %v923 = vunpack.c.l.b16 %v191
        %v924 = vunpack.c.l.b16 %v192
        %v925 = vunpack.c.l.b16 %v193
        %v926 = vunpack.c.l.b16 %v194
        %v927 = vunpack.c.l.b16 %v195
        %v928 = vunpack.c.l.b16 %v196
        %v929 = vunpack.c.l.b16 %v197
        %v930 = vunpack.c.l.b16 %v198
        %v931 = vunpack.c.l.b16 %v199
        %v932 = vunpack.c.l.b16 %v200
        %v933 = vunpack.c.l.b16 %v201
        %v934 = vunpack.c.l.b16 %v202
        %v935 = vunpack.c.l.b16 %v203
        %v936 = vunpack.c.l.b16 %v204
        %v937 = vunpack.c.l.b16 %v205
        %v938 = vunpack.c.l.b16 %v206
        %v939 = vunpack.c.l.b16 %v207
        %v940 = vunpack.c.l.b16 %v208
        %v941 = vunpack.c.l.b16 %v209
        %v942 = vunpack.c.l.b16 %v210
        %v943 = vunpack.c.l.b16 %v211
        %v944 = vunpack.c.l.b16 %v212
        %v945 = vpack.c.b16 %v914, %v913
        %v946 = vpack.c.b16 %v916, %v915
        %v947 = vpack.c.b16 %v918, %v917
        %v948 = vpack.c.b16 %v920, %v919
        %v949 = vpack.c.b16 %v922, %v921
        %v950 = vpack.c.b16 %v924, %v923
        %v951 = vpack.c.b16 %v926, %v925
        %v952 = vpack.c.b16 %v928, %v927
        %v953 = vpack.c.b16 %v930, %v929
        %v954 = vpack.c.b16 %v932, %v931
        %v955 = vpack.c.b16 %v934, %v933
        %v956 = vpack.c.b16 %v936, %v935
        %v957 = vpack.c.b16 %v938, %v937
        %v958 = vpack.c.b16 %v940, %v939
        %v959 = vpack.c.b16 %v942, %v941
        %v960 = vpack.c.b16 %v944, %v943
        %v962 = vsel %vm667, %v945, 0
        %v965 = vsel %vm667, %v946, 0
        %v968 = vsel %vm667, %v947, 0
        %v971 = vsel %vm667, %v948, 0
        %v974 = vsel %vm667, %v949, 0
        %v977 = vsel %vm667, %v950, 0
        %v980 = vsel %vm667, %v951, 0
        %v983 = vsel %vm667, %v952, 0
        %v986 = vsel %vm667, %v953, 0
        %v989 = vsel %vm667, %v954, 0
        %v992 = vsel %vm667, %v955, 0
        %v995 = vsel %vm667, %v956, 0
        %v998 = vsel %vm667, %v957, 0
        %v1001 = vsel %vm667, %v958, 0
        %v1004 = vsel %vm667, %v959, 0
        %v1007 = vsel %vm667, %v960, 0
        %v1010 = vsel %vm716, %v213, 0
        %1012 = vmatprep.subr.bf16.mxu0 0
        %1013 = vmatpush1.bf16.msra.mxu0 %v1010
        %1014 = vmatprep.subr.bf16.mxu0 0
        %1015 = vmatpush1.bf16.msra.mxu0 0
        %1016 = vmatprep.subr.bf16.mxu0 0
        %1017 = vmatpush1.bf16.msra.mxu0 0
        %1018 = vmatprep.subr.bf16.mxu0 0
        %1019 = vmatpush1.bf16.msra.mxu0 0
        %1020 = vmatprep.subr.bf16.mxu0 0
        %1021 = vmatpush1.bf16.msra.mxu0 0
        %1022 = vmatprep.subr.bf16.mxu0 0
        %1023 = vmatpush1.bf16.msra.mxu0 0
        %1024 = vmatprep.subr.bf16.mxu0 0
        %1025 = vmatpush1.bf16.msra.mxu0 0
        %1026 = vmatprep.subr.bf16.mxu0 0
        %1027 = vmatpush1.bf16.msra.mxu0 0
        %1028 = vmatprep.subr.bf16.mxu0 0
        %1029 = vmatpush1.bf16.msra.mxu0 0
        %1030 = vmatprep.subr.bf16.mxu0 0
        %1031 = vmatpush1.bf16.msra.mxu0 0
        %1032 = vmatprep.subr.bf16.mxu0 0
        %1033 = vmatpush1.bf16.msra.mxu0 0
        %1034 = vmatprep.subr.bf16.mxu0 0
        %1035 = vmatpush1.bf16.msra.mxu0 0
        %1036 = vmatprep.subr.bf16.mxu0 0
        %1037 = vmatpush1.bf16.msra.mxu0 0
        %1038 = vmatprep.subr.bf16.mxu0 0
        %1039 = vmatpush1.bf16.msra.mxu0 0
        %1040 = vmatprep.subr.bf16.mxu0 0
        %1041 = vmatpush1.bf16.msra.mxu0 0
        %1042 = vmatprep.subr.bf16.mxu0 0
        %1043 = vmatpush1.bf16.msra.mxu0 0
        %1044 = vmatprep.mubr.bf16.mxu0 0
        %1045 = vmatmul.mubr.bf16.gmra.mrb[0].mxu0 %v962
        %v1046 = vpop.f32.mrb[0].mxu0
        %v1047 = vadd.f32 %v755, %v1046
        %v1048 = vpop.f32.mrb[0].mxu0
        %v1049 = vpop.f32.mrb[0].mxu0
        %v1050 = vadd.f32 %v758, %v1049
        %v1051 = vpop.f32.mrb[0].mxu0
        %1052 = vmatprep.mubr.bf16.mxu0 0
        %1053 = vmatmul.mubr.bf16.gmra.mrb[0].mxu0 %v965
        %v1054 = vpop.f32.mrb[0].mxu0
        %v1055 = vadd.f32 %v763, %v1054
        %v1056 = vpop.f32.mrb[0].mxu0
        %v1057 = vpop.f32.mrb[0].mxu0
        %v1058 = vadd.f32 %v766, %v1057
        %v1059 = vpop.f32.mrb[0].mxu0
        %1060 = vmatprep.mubr.bf16.mxu0 0
        %1061 = vmatmul.mubr.bf16.gmra.mrb[0].mxu0 %v968
        %v1062 = vpop.f32.mrb[0].mxu0
        %v1063 = vadd.f32 %v771, %v1062
        %v1064 = vpop.f32.mrb[0].mxu0
        %v1065 = vpop.f32.mrb[0].mxu0
        %v1066 = vadd.f32 %v774, %v1065
        %v1067 = vpop.f32.mrb[0].mxu0
        %1068 = vmatprep.mubr.bf16.mxu0 0
        %1069 = vmatmul.mubr.bf16.gmra.mrb[0].mxu0 %v971
        %v1070 = vpop.f32.mrb[0].mxu0
        %v1071 = vadd.f32 %v779, %v1070
        %v1072 = vpop.f32.mrb[0].mxu0
        %v1073 = vpop.f32.mrb[0].mxu0
        %v1074 = vadd.f32 %v782, %v1073
        %v1075 = vpop.f32.mrb[0].mxu0
        %1076 = vmatprep.mubr.bf16.mxu0 0
        %1077 = vmatmul.mubr.bf16.gmra.mrb[0].mxu0 %v974
        %v1078 = vpop.f32.mrb[0].mxu0
        %v1079 = vadd.f32 %v787, %v1078
        %v1080 = vpop.f32.mrb[0].mxu0
        %v1081 = vpop.f32.mrb[0].mxu0
        %v1082 = vadd.f32 %v790, %v1081
        %v1083 = vpop.f32.mrb[0].mxu0
        %1084 = vmatprep.mubr.bf16.mxu0 0
        %1085 = vmatmul.mubr.bf16.gmra.mrb[0].mxu0 %v977
        %v1086 = vpop.f32.mrb[0].mxu0
        %v1087 = vadd.f32 %v795, %v1086
        %v1088 = vpop.f32.mrb[0].mxu0
        %v1089 = vpop.f32.mrb[0].mxu0
        %v1090 = vadd.f32 %v798, %v1089
        %v1091 = vpop.f32.mrb[0].mxu0
        %1092 = vmatprep.mubr.bf16.mxu0 0
        %1093 = vmatmul.mubr.bf16.gmra.mrb[0].mxu0 %v980
        %v1094 = vpop.f32.mrb[0].mxu0
        %v1095 = vadd.f32 %v803, %v1094
        %v1096 = vpop.f32.mrb[0].mxu0
        %v1097 = vpop.f32.mrb[0].mxu0
        %v1098 = vadd.f32 %v806, %v1097
        %v1099 = vpop.f32.mrb[0].mxu0
        %1100 = vmatprep.mubr.bf16.mxu0 0
        %1101 = vmatmul.mubr.bf16.gmra.mrb[0].mxu0 %v983
        %v1102 = vpop.f32.mrb[0].mxu0
        %v1103 = vadd.f32 %v811, %v1102
        %v1104 = vpop.f32.mrb[0].mxu0
        %v1105 = vpop.f32.mrb[0].mxu0
        %v1106 = vadd.f32 %v814, %v1105
        %v1107 = vpop.f32.mrb[0].mxu0
        %1108 = vmatprep.mubr.bf16.mxu0 0
        %1109 = vmatmul.mubr.bf16.gmra.mrb[0].mxu0 %v986
        %v1110 = vpop.f32.mrb[0].mxu0
        %v1111 = vadd.f32 %v819, %v1110
        %v1112 = vpop.f32.mrb[0].mxu0
        %v1113 = vpop.f32.mrb[0].mxu0
        %v1114 = vadd.f32 %v822, %v1113
        %v1115 = vpop.f32.mrb[0].mxu0
        %1116 = vmatprep.mubr.bf16.mxu0 0
        %1117 = vmatmul.mubr.bf16.gmra.mrb[0].mxu0 %v989
        %v1118 = vpop.f32.mrb[0].mxu0
        %v1119 = vadd.f32 %v827, %v1118
        %v1120 = vpop.f32.mrb[0].mxu0
        %v1121 = vpop.f32.mrb[0].mxu0
        %v1122 = vadd.f32 %v830, %v1121
        %v1123 = vpop.f32.mrb[0].mxu0
        %1124 = vmatprep.mubr.bf16.mxu0 0
        %1125 = vmatmul.mubr.bf16.gmra.mrb[0].mxu0 %v992
        %v1126 = vpop.f32.mrb[0].mxu0
        %v1127 = vadd.f32 %v835, %v1126
        %v1128 = vpop.f32.mrb[0].mxu0
        %v1129 = vpop.f32.mrb[0].mxu0
        %v1130 = vadd.f32 %v838, %v1129
        %v1131 = vpop.f32.mrb[0].mxu0
        %1132 = vmatprep.mubr.bf16.mxu0 0
        %1133 = vmatmul.mubr.bf16.gmra.mrb[0].mxu0 %v995
        %v1134 = vpop.f32.mrb[0].mxu0
        %v1135 = vadd.f32 %v843, %v1134
        %v1136 = vpop.f32.mrb[0].mxu0
        %v1137 = vpop.f32.mrb[0].mxu0
        %v1138 = vadd.f32 %v846, %v1137
        %v1139 = vpop.f32.mrb[0].mxu0
        %1140 = vmatprep.mubr.bf16.mxu0 0
        %1141 = vmatmul.mubr.bf16.gmra.mrb[0].mxu0 %v998
        %v1142 = vpop.f32.mrb[0].mxu0
        %v1143 = vadd.f32 %v851, %v1142
        %v1144 = vpop.f32.mrb[0].mxu0
        %v1145 = vpop.f32.mrb[0].mxu0
        %v1146 = vadd.f32 %v854, %v1145
        %v1147 = vpop.f32.mrb[0].mxu0
        %1148 = vmatprep.mubr.bf16.mxu0 0
        %1149 = vmatmul.mubr.bf16.gmra.mrb[0].mxu0 %v1001
        %v1150 = vpop.f32.mrb[0].mxu0
        %v1151 = vadd.f32 %v859, %v1150
        %v1152 = vpop.f32.mrb[0].mxu0
        %v1153 = vpop.f32.mrb[0].mxu0
        %v1154 = vadd.f32 %v862, %v1153
        %v1155 = vpop.f32.mrb[0].mxu0
        %1156 = vmatprep.mubr.bf16.mxu0 0
        %1157 = vmatmul.mubr.bf16.gmra.mrb[0].mxu0 %v1004
        %v1158 = vpop.f32.mrb[0].mxu0
        %v1159 = vadd.f32 %v867, %v1158
        %v1160 = vpop.f32.mrb[0].mxu0
        %v1161 = vpop.f32.mrb[0].mxu0
        %v1162 = vadd.f32 %v870, %v1161
        %v1163 = vpop.f32.mrb[0].mxu0
        %1164 = vmatprep.mubr.bf16.mxu0 0
        %1165 = vmatmul.mubr.bf16.gmra.mrb[0].mxu0 %v1007
        %v1166 = vpop.f32.mrb[0].mxu0
        %v1167 = vadd.f32 %v875, %v1166
        %v1168 = vpop.f32.mrb[0].mxu0
        %v1169 = vpop.f32.mrb[0].mxu0
        %v1170 = vadd.f32 %v878, %v1169
        %v1171 = vpop.f32.mrb[0].mxu0
        %1172 = vdwg.mxu0
        %v1173 = vld [vmem:[%s179] sm:$0xe]
        %v1174 = vld [vmem:[%s179 + $0xc] sm:$0xe]
        %v1175 = vld [vmem:[%s179 + $0x18] sm:$0xe]
        %v1176 = vld [vmem:[%s179 + $0x24] sm:$0xe]
        %v1177 = vld [vmem:[%s179 + $0x30] sm:$0xe]
        %v1178 = vld [vmem:[%s179 + $0x3c] sm:$0xe]
        %v1179 = vld [vmem:[%s179 + $0x48] sm:$0xe]
        %v1180 = vld [vmem:[%s179 + $0x54] sm:$0xe]
        %v1181 = vld [vmem:[%s179 + $0x60] sm:$0xe]
        %v1182 = vld [vmem:[%s179 + $0x6c] sm:$0xe]
        %v1183 = vld [vmem:[%s179 + $0x78] sm:$0xe]
        %v1184 = vld [vmem:[%s179 + $0x84] sm:$0xe]
        %v1185 = vld [vmem:[%s179 + $0x90] sm:$0xe]
        %v1186 = vld [vmem:[%s179 + $0x9c] sm:$0xe]
        %v1187 = vld [vmem:[%s179 + $0xa8] sm:$0xe]
        %v1188 = vld [vmem:[%s179 + $0xb4] sm:$0xe]
        %vm1221 = vcmask 1042432
        %vm1222 = vcmask 1046532
        %vm1223 = vmor %vm1221, %vm1222
        %v1224 = vrot.slane %v1173, 5
        %v1225 = vrot.slane %v1224, 4
        %v1226 = vrot.slane %v182, 5
        %v1227 = vsel %vm1223, %v1225, %v1226
        %v1228 = vrot.slane %v1226, 4
        %v1229 = vrot.slane %v214, 5
        %v1230 = vsel %vm1223, %v1228, %v1229
        %v1231 = vrot.slane %v1174, 5
        %v1232 = vrot.slane %v1231, 4
        %v1233 = vrot.slane %v184, 5
        %v1234 = vsel %vm1223, %v1232, %v1233
        %v1235 = vrot.slane %v1233, 4
        %v1236 = vrot.slane %v215, 5
        %v1237 = vsel %vm1223, %v1235, %v1236
        %v1238 = vrot.slane %v1175, 5
        %v1239 = vrot.slane %v1238, 4
        %v1240 = vrot.slane %v186, 5
        %v1241 = vsel %vm1223, %v1239, %v1240
        %v1242 = vrot.slane %v1240, 4
        %v1243 = vrot.slane %v216, 5
        %v1244 = vsel %vm1223, %v1242, %v1243
        %v1245 = vrot.slane %v1176, 5
        %v1246 = vrot.slane %v1245, 4
        %v1247 = vrot.slane %v188, 5
        %v1248 = vsel %vm1223, %v1246, %v1247
        %v1249 = vrot.slane %v1247, 4
        %v1250 = vrot.slane %v217, 5
        %v1251 = vsel %vm1223, %v1249, %v1250
        %v1252 = vrot.slane %v1177, 5
        %v1253 = vrot.slane %v1252, 4
        %v1254 = vrot.slane %v190, 5
        %v1255 = vsel %vm1223, %v1253, %v1254
        %v1256 = vrot.slane %v1254, 4
        %v1257 = vrot.slane %v218, 5
        %v1258 = vsel %vm1223, %v1256, %v1257
        %v1259 = vrot.slane %v1178, 5
        %v1260 = vrot.slane %v1259, 4
        %v1261 = vrot.slane %v192, 5
        %v1262 = vsel %vm1223, %v1260, %v1261
        %v1263 = vrot.slane %v1261, 4
        %v1264 = vrot.slane %v219, 5
        %v1265 = vsel %vm1223, %v1263, %v1264
        %v1266 = vrot.slane %v1179, 5
        %v1267 = vrot.slane %v1266, 4
        %v1268 = vrot.slane %v194, 5
        %v1269 = vsel %vm1223, %v1267, %v1268
        %v1270 = vrot.slane %v1268, 4
        %v1271 = vrot.slane %v220, 5
        %v1272 = vsel %vm1223, %v1270, %v1271
        %v1273 = vrot.slane %v1180, 5
        %v1274 = vrot.slane %v1273, 4
        %v1275 = vrot.slane %v196, 5
        %v1276 = vsel %vm1223, %v1274, %v1275
        %v1277 = vrot.slane %v1275, 4
        %v1278 = vrot.slane %v221, 5
        %v1279 = vsel %vm1223, %v1277, %v1278
        %v1280 = vrot.slane %v1181, 5
        %v1281 = vrot.slane %v1280, 4
        %v1282 = vrot.slane %v198, 5
        %v1283 = vsel %vm1223, %v1281, %v1282
        %v1284 = vrot.slane %v1282, 4
        %v1285 = vrot.slane %v222, 5
        %v1286 = vsel %vm1223, %v1284, %v1285
        %v1287 = vrot.slane %v1182, 5
        %v1288 = vrot.slane %v1287, 4
        %v1289 = vrot.slane %v200, 5
        %v1290 = vsel %vm1223, %v1288, %v1289
        %v1291 = vrot.slane %v1289, 4
        %v1292 = vrot.slane %v223, 5
        %v1293 = vsel %vm1223, %v1291, %v1292
        %v1294 = vrot.slane %v1183, 5
        %v1295 = vrot.slane %v1294, 4
        %v1296 = vrot.slane %v202, 5
        %v1297 = vsel %vm1223, %v1295, %v1296
        %v1298 = vrot.slane %v1296, 4
        %v1299 = vrot.slane %v224, 5
        %v1300 = vsel %vm1223, %v1298, %v1299
        %v1301 = vrot.slane %v1184, 5
        %v1302 = vrot.slane %v1301, 4
        %v1303 = vrot.slane %v204, 5
        %v1304 = vsel %vm1223, %v1302, %v1303
        %v1305 = vrot.slane %v1303, 4
        %v1306 = vrot.slane %v225, 5
        %v1307 = vsel %vm1223, %v1305, %v1306
        %v1308 = vrot.slane %v1185, 5
        %v1309 = vrot.slane %v1308, 4
        %v1310 = vrot.slane %v206, 5
        %v1311 = vsel %vm1223, %v1309, %v1310
        %v1312 = vrot.slane %v1310, 4
        %v1313 = vrot.slane %v226, 5
        %v1314 = vsel %vm1223, %v1312, %v1313
        %v1315 = vrot.slane %v1186, 5
        %v1316 = vrot.slane %v1315, 4
        %v1317 = vrot.slane %v208, 5
        %v1318 = vsel %vm1223, %v1316, %v1317
        %v1319 = vrot.slane %v1317, 4
        %v1320 = vrot.slane %v227, 5
        %v1321 = vsel %vm1223, %v1319, %v1320
        %v1322 = vrot.slane %v1187, 5
        %v1323 = vrot.slane %v1322, 4
        %v1324 = vrot.slane %v210, 5
        %v1325 = vsel %vm1223, %v1323, %v1324
        %v1326 = vrot.slane %v1324, 4
        %v1327 = vrot.slane %v228, 5
        %v1328 = vsel %vm1223, %v1326, %v1327
        %v1329 = vrot.slane %v1188, 5
        %v1330 = vrot.slane %v1329, 4
        %v1331 = vrot.slane %v212, 5
        %v1332 = vsel %vm1223, %v1330, %v1331
        %v1333 = vrot.slane %v1331, 4
        %v1334 = vrot.slane %v229, 5
        %v1335 = vsel %vm1223, %v1333, %v1334
        %s1336 = scalar_lea.vmem %s1, 8
        %v1337 = vld [vmem:[%s1336] sm:$0xf]
        %v1338 = vunpack.c.l.b16 %v1227
        %v1339 = vunpack.c.l.b16 %v1230
        %v1340 = vunpack.c.l.b16 %v1234
        %v1341 = vunpack.c.l.b16 %v1237
        %v1342 = vunpack.c.l.b16 %v1241
        %v1343 = vunpack.c.l.b16 %v1244
        %v1344 = vunpack.c.l.b16 %v1248
        %v1345 = vunpack.c.l.b16 %v1251
        %v1346 = vunpack.c.l.b16 %v1255
        %v1347 = vunpack.c.l.b16 %v1258
        %v1348 = vunpack.c.l.b16 %v1262
        %v1349 = vunpack.c.l.b16 %v1265
        %v1350 = vunpack.c.l.b16 %v1269
        %v1351 = vunpack.c.l.b16 %v1272
        %v1352 = vunpack.c.l.b16 %v1276
        %v1353 = vunpack.c.l.b16 %v1279
        %v1354 = vunpack.c.l.b16 %v1283
        %v1355 = vunpack.c.l.b16 %v1286
        %v1356 = vunpack.c.l.b16 %v1290
        %v1357 = vunpack.c.l.b16 %v1293
        %v1358 = vunpack.c.l.b16 %v1297
        %v1359 = vunpack.c.l.b16 %v1300
        %v1360 = vunpack.c.l.b16 %v1304
        %v1361 = vunpack.c.l.b16 %v1307
        %v1362 = vunpack.c.l.b16 %v1311
        %v1363 = vunpack.c.l.b16 %v1314
        %v1364 = vunpack.c.l.b16 %v1318
        %v1365 = vunpack.c.l.b16 %v1321
        %v1366 = vunpack.c.l.b16 %v1325
        %v1367 = vunpack.c.l.b16 %v1328
        %v1368 = vunpack.c.l.b16 %v1332
        %v1369 = vunpack.c.l.b16 %v1335
        %v1370 = vpack.c.b16 %v1339, %v1338
        %v1371 = vpack.c.b16 %v1341, %v1340
        %v1372 = vpack.c.b16 %v1343, %v1342
        %v1373 = vpack.c.b16 %v1345, %v1344
        %v1374 = vpack.c.b16 %v1347, %v1346
        %v1375 = vpack.c.b16 %v1349, %v1348
        %v1376 = vpack.c.b16 %v1351, %v1350
        %v1377 = vpack.c.b16 %v1353, %v1352
        %v1378 = vpack.c.b16 %v1355, %v1354
        %v1379 = vpack.c.b16 %v1357, %v1356
        %v1380 = vpack.c.b16 %v1359, %v1358
        %v1381 = vpack.c.b16 %v1361, %v1360
        %v1382 = vpack.c.b16 %v1363, %v1362
        %v1383 = vpack.c.b16 %v1365, %v1364
        %v1384 = vpack.c.b16 %v1367, %v1366
        %v1385 = vpack.c.b16 %v1369, %v1368
        %v1387 = vsel %vm667, %v1370, 0
        %v1390 = vsel %vm667, %v1371, 0
        %v1393 = vsel %vm667, %v1372, 0
        %v1396 = vsel %vm667, %v1373, 0
        %v1399 = vsel %vm667, %v1374, 0
        %v1402 = vsel %vm667, %v1375, 0
        %v1405 = vsel %vm667, %v1376, 0
        %v1408 = vsel %vm667, %v1377, 0
        %v1411 = vsel %vm667, %v1378, 0
        %v1414 = vsel %vm667, %v1379, 0
        %v1417 = vsel %vm667, %v1380, 0
        %v1420 = vsel %vm667, %v1381, 0
        %v1423 = vsel %vm667, %v1382, 0
        %v1426 = vsel %vm667, %v1383, 0
        %v1429 = vsel %vm667, %v1384, 0
        %v1432 = vsel %vm667, %v1385, 0
        %v1435 = vsel %vm716, %v1337, 0
        %1437 = vmatprep.subr.bf16.mxu0 0
        %1438 = vmatpush1.bf16.msra.mxu0 %v1435
        %1439 = vmatprep.subr.bf16.mxu0 0
        %1440 = vmatpush1.bf16.msra.mxu0 0
        %1441 = vmatprep.subr.bf16.mxu0 0
        %1442 = vmatpush1.bf16.msra.mxu0 0
        %1443 = vmatprep.subr.bf16.mxu0 0
        %1444 = vmatpush1.bf16.msra.mxu0 0
        %1445 = vmatprep.subr.bf16.mxu0 0
        %1446 = vmatpush1.bf16.msra.mxu0 0
        %1447 = vmatprep.subr.bf16.mxu0 0
        %1448 = vmatpush1.bf16.msra.mxu0 0
        %1449 = vmatprep.subr.bf16.mxu0 0
        %1450 = vmatpush1.bf16.msra.mxu0 0
        %1451 = vmatprep.subr.bf16.mxu0 0
        %1452 = vmatpush1.bf16.msra.mxu0 0
        %1453 = vmatprep.subr.bf16.mxu0 0
        %1454 = vmatpush1.bf16.msra.mxu0 0
        %1455 = vmatprep.subr.bf16.mxu0 0
        %1456 = vmatpush1.bf16.msra.mxu0 0
        %1457 = vmatprep.subr.bf16.mxu0 0
        %1458 = vmatpush1.bf16.msra.mxu0 0
        %1459 = vmatprep.subr.bf16.mxu0 0
        %1460 = vmatpush1.bf16.msra.mxu0 0
        %1461 = vmatprep.subr.bf16.mxu0 0
        %1462 = vmatpush1.bf16.msra.mxu0 0
        %1463 = vmatprep.subr.bf16.mxu0 0
        %1464 = vmatpush1.bf16.msra.mxu0 0
        %1465 = vmatprep.subr.bf16.mxu0 0
        %1466 = vmatpush1.bf16.msra.mxu0 0
        %1467 = vmatprep.subr.bf16.mxu0 0
        %1468 = vmatpush1.bf16.msra.mxu0 0
        %1469 = vmatprep.mubr.bf16.mxu0 0
        %1470 = vmatmul.mubr.bf16.gmra.mrb[0].mxu0 %v1387
        %v1471 = vpop.f32.mrb[0].mxu0
        %v1472 = vadd.f32 0.0, %v1471
        %v1473 = vpop.f32.mrb[0].mxu0
        %v1474 = vpop.f32.mrb[0].mxu0
        %v1475 = vadd.f32 0.0, %v1474
        %v1476 = vpop.f32.mrb[0].mxu0
        %1477 = vmatprep.mubr.bf16.mxu0 0
        %1478 = vmatmul.mubr.bf16.gmra.mrb[0].mxu0 %v1390
        %v1479 = vpop.f32.mrb[0].mxu0
        %v1480 = vadd.f32 0.0, %v1479
        %v1481 = vpop.f32.mrb[0].mxu0
        %v1482 = vpop.f32.mrb[0].mxu0
        %v1483 = vadd.f32 0.0, %v1482
        %v1484 = vpop.f32.mrb[0].mxu0
        %1485 = vmatprep.mubr.bf16.mxu0 0
        %1486 = vmatmul.mubr.bf16.gmra.mrb[0].mxu0 %v1393
        %v1487 = vpop.f32.mrb[0].mxu0
        %v1488 = vadd.f32 0.0, %v1487
        %v1489 = vpop.f32.mrb[0].mxu0
        %v1490 = vpop.f32.mrb[0].mxu0
        %v1491 = vadd.f32 0.0, %v1490
        %v1492 = vpop.f32.mrb[0].mxu0
        %1493 = vmatprep.mubr.bf16.mxu0 0
        %1494 = vmatmul.mubr.bf16.gmra.mrb[0].mxu0 %v1396
        %v1495 = vpop.f32.mrb[0].mxu0
        %v1496 = vadd.f32 0.0, %v1495
        %v1497 = vpop.f32.mrb[0].mxu0
        %v1498 = vpop.f32.mrb[0].mxu0
        %v1499 = vadd.f32 0.0, %v1498
        %v1500 = vpop.f32.mrb[0].mxu0
        %1501 = vmatprep.mubr.bf16.mxu0 0
        %1502 = vmatmul.mubr.bf16.gmra.mrb[0].mxu0 %v1399
        %v1503 = vpop.f32.mrb[0].mxu0
        %v1504 = vadd.f32 0.0, %v1503
        %v1505 = vpop.f32.mrb[0].mxu0
        %v1506 = vpop.f32.mrb[0].mxu0
        %v1507 = vadd.f32 0.0, %v1506
        %v1508 = vpop.f32.mrb[0].mxu0
        %1509 = vmatprep.mubr.bf16.mxu0 0
        %1510 = vmatmul.mubr.bf16.gmra.mrb[0].mxu0 %v1402
        %v1511 = vpop.f32.mrb[0].mxu0
        %v1512 = vadd.f32 0.0, %v1511
        %v1513 = vpop.f32.mrb[0].mxu0
        %v1514 = vpop.f32.mrb[0].mxu0
        %v1515 = vadd.f32 0.0, %v1514
        %v1516 = vpop.f32.mrb[0].mxu0
        %1517 = vmatprep.mubr.bf16.mxu0 0
        %1518 = vmatmul.mubr.bf16.gmra.mrb[0].mxu0 %v1405
        %v1519 = vpop.f32.mrb[0].mxu0
        %v1520 = vadd.f32 0.0, %v1519
        %v1521 = vpop.f32.mrb[0].mxu0
        %v1522 = vpop.f32.mrb[0].mxu0
        %v1523 = vadd.f32 0.0, %v1522
        %v1524 = vpop.f32.mrb[0].mxu0
        %1525 = vmatprep.mubr.bf16.mxu0 0
        %1526 = vmatmul.mubr.bf16.gmra.mrb[0].mxu0 %v1408
        %v1527 = vpop.f32.mrb[0].mxu0
        %v1528 = vadd.f32 0.0, %v1527
        %v1529 = vpop.f32.mrb[0].mxu0
        %v1530 = vpop.f32.mrb[0].mxu0
        %v1531 = vadd.f32 0.0, %v1530
        %v1532 = vpop.f32.mrb[0].mxu0
        %1533 = vmatprep.mubr.bf16.mxu0 0
        %1534 = vmatmul.mubr.bf16.gmra.mrb[0].mxu0 %v1411
        %v1535 = vpop.f32.mrb[0].mxu0
        %v1536 = vadd.f32 0.0, %v1535
        %v1537 = vpop.f32.mrb[0].mxu0
        %v1538 = vpop.f32.mrb[0].mxu0
        %v1539 = vadd.f32 0.0, %v1538
        %v1540 = vpop.f32.mrb[0].mxu0
        %1541 = vmatprep.mubr.bf16.mxu0 0
        %1542 = vmatmul.mubr.bf16.gmra.mrb[0].mxu0 %v1414
        %v1543 = vpop.f32.mrb[0].mxu0
        %v1544 = vadd.f32 0.0, %v1543
        %v1545 = vpop.f32.mrb[0].mxu0
        %v1546 = vpop.f32.mrb[0].mxu0
        %v1547 = vadd.f32 0.0, %v1546
        %v1548 = vpop.f32.mrb[0].mxu0
        %1549 = vmatprep.mubr.bf16.mxu0 0
        %1550 = vmatmul.mubr.bf16.gmra.mrb[0].mxu0 %v1417
        %v1551 = vpop.f32.mrb[0].mxu0
        %v1552 = vadd.f32 0.0, %v1551
        %v1553 = vpop.f32.mrb[0].mxu0
        %v1554 = vpop.f32.mrb[0].mxu0
        %v1555 = vadd.f32 0.0, %v1554
        %v1556 = vpop.f32.mrb[0].mxu0
        %1557 = vmatprep.mubr.bf16.mxu0 0
        %1558 = vmatmul.mubr.bf16.gmra.mrb[0].mxu0 %v1420
        %v1559 = vpop.f32.mrb[0].mxu0
        %v1560 = vadd.f32 0.0, %v1559
        %v1561 = vpop.f32.mrb[0].mxu0
        %v1562 = vpop.f32.mrb[0].mxu0
        %v1563 = vadd.f32 0.0, %v1562
        %v1564 = vpop.f32.mrb[0].mxu0
        %1565 = vmatprep.mubr.bf16.mxu0 0
        %1566 = vmatmul.mubr.bf16.gmra.mrb[0].mxu0 %v1423
        %v1567 = vpop.f32.mrb[0].mxu0
        %v1568 = vadd.f32 0.0, %v1567
        %v1569 = vpop.f32.mrb[0].mxu0
        %v1570 = vpop.f32.mrb[0].mxu0
        %v1571 = vadd.f32 0.0, %v1570
        %v1572 = vpop.f32.mrb[0].mxu0
        %1573 = vmatprep.mubr.bf16.mxu0 0
        %1574 = vmatmul.mubr.bf16.gmra.mrb[0].mxu0 %v1426
        %v1575 = vpop.f32.mrb[0].mxu0
        %v1576 = vadd.f32 0.0, %v1575
        %v1577 = vpop.f32.mrb[0].mxu0
        %v1578 = vpop.f32.mrb[0].mxu0
        %v1579 = vadd.f32 0.0, %v1578
        %v1580 = vpop.f32.mrb[0].mxu0
        %1581 = vmatprep.mubr.bf16.mxu0 0
        %1582 = vmatmul.mubr.bf16.gmra.mrb[0].mxu0 %v1429
        %v1583 = vpop.f32.mrb[0].mxu0
        %v1584 = vadd.f32 0.0, %v1583
        %v1585 = vpop.f32.mrb[0].mxu0
        %v1586 = vpop.f32.mrb[0].mxu0
        %v1587 = vadd.f32 0.0, %v1586
        %v1588 = vpop.f32.mrb[0].mxu0
        %1589 = vmatprep.mubr.bf16.mxu0 0
        %1590 = vmatmul.mubr.bf16.gmra.mrb[0].mxu0 %v1432
        %v1591 = vpop.f32.mrb[0].mxu0
        %v1592 = vadd.f32 0.0, %v1591
        %v1593 = vpop.f32.mrb[0].mxu0
        %v1594 = vpop.f32.mrb[0].mxu0
        %v1595 = vadd.f32 0.0, %v1594
        %v1596 = vpop.f32.mrb[0].mxu0
        %1597 = vdwg.mxu0
        %v1598 = vadd.f32 %v1047, %v1472
        %v1599 = vadd.f32 %v1050, %v1475
        %v1600 = vadd.f32 %v1055, %v1480
        %v1601 = vadd.f32 %v1058, %v1483
        %v1602 = vadd.f32 %v1063, %v1488
        %v1603 = vadd.f32 %v1066, %v1491
        %v1604 = vadd.f32 %v1071, %v1496
        %v1605 = vadd.f32 %v1074, %v1499
        %v1606 = vadd.f32 %v1079, %v1504
        %v1607 = vadd.f32 %v1082, %v1507
        %v1608 = vadd.f32 %v1087, %v1512
        %v1609 = vadd.f32 %v1090, %v1515
        %v1610 = vadd.f32 %v1095, %v1520
        %v1611 = vadd.f32 %v1098, %v1523
        %v1612 = vadd.f32 %v1103, %v1528
        %v1613 = vadd.f32 %v1106, %v1531
        %v1614 = vadd.f32 %v1111, %v1536
        %v1615 = vadd.f32 %v1114, %v1539
        %v1616 = vadd.f32 %v1119, %v1544
        %v1617 = vadd.f32 %v1122, %v1547
        %v1618 = vadd.f32 %v1127, %v1552
        %v1619 = vadd.f32 %v1130, %v1555
        %v1620 = vadd.f32 %v1135, %v1560
        %v1621 = vadd.f32 %v1138, %v1563
        %v1622 = vadd.f32 %v1143, %v1568
        %v1623 = vadd.f32 %v1146, %v1571
        %v1624 = vadd.f32 %v1151, %v1576
        %v1625 = vadd.f32 %v1154, %v1579
        %v1626 = vadd.f32 %v1159, %v1584
        %v1627 = vadd.f32 %v1162, %v1587
        %v1628 = vadd.f32 %v1167, %v1592
        %v1629 = vadd.f32 %v1170, %v1595
        %s1630 = scalar_lea.vmem %s179, 12
        %v1631 = vld [vmem:[%s1630] sm:$0xf]
        %v1632 = vld [vmem:[%s1630 + $0x4] sm:$0xf]
        %v1633 = vld [vmem:[%s1630 + $0xc] sm:$0xf]
        %v1634 = vld [vmem:[%s1630 + $0x10] sm:$0xf]
        %v1635 = vld [vmem:[%s1630 + $0x18] sm:$0xf]
        %v1636 = vld [vmem:[%s1630 + $0x1c] sm:$0xf]
        %v1637 = vld [vmem:[%s1630 + $0x24] sm:$0xf]
        %v1638 = vld [vmem:[%s1630 + $0x28] sm:$0xf]
        %v1639 = vld [vmem:[%s1630 + $0x30] sm:$0xf]
        %v1640 = vld [vmem:[%s1630 + $0x34] sm:$0xf]
        %v1641 = vld [vmem:[%s1630 + $0x3c] sm:$0xf]
        %v1642 = vld [vmem:[%s1630 + $0x40] sm:$0xf]
        %v1643 = vld [vmem:[%s1630 + $0x48] sm:$0xf]
        %v1644 = vld [vmem:[%s1630 + $0x4c] sm:$0xf]
        %v1645 = vld [vmem:[%s1630 + $0x54] sm:$0xf]
        %v1646 = vld [vmem:[%s1630 + $0x58] sm:$0xf]
        %v1647 = vld [vmem:[%s1630 + $0x60] sm:$0xf]
        %v1648 = vld [vmem:[%s1630 + $0x64] sm:$0xf]
        %v1649 = vld [vmem:[%s1630 + $0x6c] sm:$0xf]
        %v1650 = vld [vmem:[%s1630 + $0x70] sm:$0xf]
        %v1651 = vld [vmem:[%s1630 + $0x78] sm:$0xf]
        %v1652 = vld [vmem:[%s1630 + $0x7c] sm:$0xf]
        %v1653 = vld [vmem:[%s1630 + $0x84] sm:$0xf]
        %v1654 = vld [vmem:[%s1630 + $0x88] sm:$0xf]
        %v1655 = vld [vmem:[%s1630 + $0x90] sm:$0xf]
        %v1656 = vld [vmem:[%s1630 + $0x94] sm:$0xf]
        %v1657 = vld [vmem:[%s1630 + $0x9c] sm:$0xf]
        %v1658 = vld [vmem:[%s1630 + $0xa0] sm:$0xf]
        %v1659 = vld [vmem:[%s1630 + $0xa8] sm:$0xf]
        %v1660 = vld [vmem:[%s1630 + $0xac] sm:$0xf]
        %v1661 = vld [vmem:[%s1630 + $0xb4] sm:$0xf]
        %v1662 = vld [vmem:[%s1630 + $0xb8] sm:$0xf]
        %s1663 = scalar_lea.vmem %s1, 12
        %v1664 = vld [vmem:[%s1663] sm:$0xf]
        %v1697 = vunpack.c.l.b16 %v1631
        %v1698 = vunpack.c.l.b16 %v1632
        %v1699 = vunpack.c.l.b16 %v1633
        %v1700 = vunpack.c.l.b16 %v1634
        %v1701 = vunpack.c.l.b16 %v1635
        %v1702 = vunpack.c.l.b16 %v1636
        %v1703 = vunpack.c.l.b16 %v1637
        %v1704 = vunpack.c.l.b16 %v1638
        %v1705 = vunpack.c.l.b16 %v1639
        %v1706 = vunpack.c.l.b16 %v1640
        %v1707 = vunpack.c.l.b16 %v1641
        %v1708 = vunpack.c.l.b16 %v1642
        %v1709 = vunpack.c.l.b16 %v1643
        %v1710 = vunpack.c.l.b16 %v1644
        %v1711 = vunpack.c.l.b16 %v1645
        %v1712 = vunpack.c.l.b16 %v1646
        %v1713 = vunpack.c.l.b16 %v1647
        %v1714 = vunpack.c.l.b16 %v1648
        %v1715 = vunpack.c.l.b16 %v1649
        %v1716 = vunpack.c.l.b16 %v1650
        %v1717 = vunpack.c.l.b16 %v1651
        %v1718 = vunpack.c.l.b16 %v1652
        %v1719 = vunpack.c.l.b16 %v1653
        %v1720 = vunpack.c.l.b16 %v1654
        %v1721 = vunpack.c.l.b16 %v1655
        %v1722 = vunpack.c.l.b16 %v1656
        %v1723 = vunpack.c.l.b16 %v1657
        %v1724 = vunpack.c.l.b16 %v1658
        %v1725 = vunpack.c.l.b16 %v1659
        %v1726 = vunpack.c.l.b16 %v1660
        %v1727 = vunpack.c.l.b16 %v1661
        %v1728 = vunpack.c.l.b16 %v1662
        %v1729 = vpack.c.b16 %v1698, %v1697
        %v1730 = vpack.c.b16 %v1700, %v1699
        %v1731 = vpack.c.b16 %v1702, %v1701
        %v1732 = vpack.c.b16 %v1704, %v1703
        %v1733 = vpack.c.b16 %v1706, %v1705
        %v1734 = vpack.c.b16 %v1708, %v1707
        %v1735 = vpack.c.b16 %v1710, %v1709
        %v1736 = vpack.c.b16 %v1712, %v1711
        %v1737 = vpack.c.b16 %v1714, %v1713
        %v1738 = vpack.c.b16 %v1716, %v1715
        %v1739 = vpack.c.b16 %v1718, %v1717
        %v1740 = vpack.c.b16 %v1720, %v1719
        %v1741 = vpack.c.b16 %v1722, %v1721
        %v1742 = vpack.c.b16 %v1724, %v1723
        %v1743 = vpack.c.b16 %v1726, %v1725
        %v1744 = vpack.c.b16 %v1728, %v1727
        %v1746 = vsel %vm667, %v1729, 0
        %v1749 = vsel %vm667, %v1730, 0
        %v1752 = vsel %vm667, %v1731, 0
        %v1755 = vsel %vm667, %v1732, 0
        %v1758 = vsel %vm667, %v1733, 0
        %v1761 = vsel %vm667, %v1734, 0
        %v1764 = vsel %vm667, %v1735, 0
        %v1767 = vsel %vm667, %v1736, 0
        %v1770 = vsel %vm667, %v1737, 0
        %v1773 = vsel %vm667, %v1738, 0
        %v1776 = vsel %vm667, %v1739, 0
        %v1779 = vsel %vm667, %v1740, 0
        %v1782 = vsel %vm667, %v1741, 0
        %v1785 = vsel %vm667, %v1742, 0
        %v1788 = vsel %vm667, %v1743, 0
        %v1791 = vsel %vm667, %v1744, 0
        %v1794 = vsel %vm716, %v1664, 0
        %1796 = vmatprep.subr.bf16.mxu0 0
        %1797 = vmatpush1.bf16.msra.mxu0 %v1794
        %1798 = vmatprep.subr.bf16.mxu0 0
        %1799 = vmatpush1.bf16.msra.mxu0 0
        %1800 = vmatprep.subr.bf16.mxu0 0
        %1801 = vmatpush1.bf16.msra.mxu0 0
        %1802 = vmatprep.subr.bf16.mxu0 0
        %1803 = vmatpush1.bf16.msra.mxu0 0
        %1804 = vmatprep.subr.bf16.mxu0 0
        %1805 = vmatpush1.bf16.msra.mxu0 0
        %1806 = vmatprep.subr.bf16.mxu0 0
        %1807 = vmatpush1.bf16.msra.mxu0 0
        %1808 = vmatprep.subr.bf16.mxu0 0
        %1809 = vmatpush1.bf16.msra.mxu0 0
        %1810 = vmatprep.subr.bf16.mxu0 0
        %1811 = vmatpush1.bf16.msra.mxu0 0
        %1812 = vmatprep.subr.bf16.mxu0 0
        %1813 = vmatpush1.bf16.msra.mxu0 0
        %1814 = vmatprep.subr.bf16.mxu0 0
        %1815 = vmatpush1.bf16.msra.mxu0 0
        %1816 = vmatprep.subr.bf16.mxu0 0
        %1817 = vmatpush1.bf16.msra.mxu0 0
        %1818 = vmatprep.subr.bf16.mxu0 0
        %1819 = vmatpush1.bf16.msra.mxu0 0
        %1820 = vmatprep.subr.bf16.mxu0 0
        %1821 = vmatpush1.bf16.msra.mxu0 0
        %1822 = vmatprep.subr.bf16.mxu0 0
        %1823 = vmatpush1.bf16.msra.mxu0 0
        %1824 = vmatprep.subr.bf16.mxu0 0
        %1825 = vmatpush1.bf16.msra.mxu0 0
        %1826 = vmatprep.subr.bf16.mxu0 0
        %1827 = vmatpush1.bf16.msra.mxu0 0
        %1828 = vmatprep.mubr.bf16.mxu0 0
        %1829 = vmatmul.mubr.bf16.gmra.mrb[0].mxu0 %v1746
        %v1830 = vpop.f32.mrb[0].mxu0
        %v1831 = vadd.f32 0.0, %v1830
        %v1832 = vpop.f32.mrb[0].mxu0
        %v1833 = vpop.f32.mrb[0].mxu0
        %v1834 = vadd.f32 0.0, %v1833
        %v1835 = vpop.f32.mrb[0].mxu0
        %1836 = vmatprep.mubr.bf16.mxu0 0
        %1837 = vmatmul.mubr.bf16.gmra.mrb[0].mxu0 %v1749
        %v1838 = vpop.f32.mrb[0].mxu0
        %v1839 = vadd.f32 0.0, %v1838
        %v1840 = vpop.f32.mrb[0].mxu0
        %v1841 = vpop.f32.mrb[0].mxu0
        %v1842 = vadd.f32 0.0, %v1841
        %v1843 = vpop.f32.mrb[0].mxu0
        %1844 = vmatprep.mubr.bf16.mxu0 0
        %1845 = vmatmul.mubr.bf16.gmra.mrb[0].mxu0 %v1752
        %v1846 = vpop.f32.mrb[0].mxu0
        %v1847 = vadd.f32 0.0, %v1846
        %v1848 = vpop.f32.mrb[0].mxu0
        %v1849 = vpop.f32.mrb[0].mxu0
        %v1850 = vadd.f32 0.0, %v1849
        %v1851 = vpop.f32.mrb[0].mxu0
        %1852 = vmatprep.mubr.bf16.mxu0 0
        %1853 = vmatmul.mubr.bf16.gmra.mrb[0].mxu0 %v1755
        %v1854 = vpop.f32.mrb[0].mxu0
        %v1855 = vadd.f32 0.0, %v1854
        %v1856 = vpop.f32.mrb[0].mxu0
        %v1857 = vpop.f32.mrb[0].mxu0
        %v1858 = vadd.f32 0.0, %v1857
        %v1859 = vpop.f32.mrb[0].mxu0
        %1860 = vmatprep.mubr.bf16.mxu0 0
        %1861 = vmatmul.mubr.bf16.gmra.mrb[0].mxu0 %v1758
        %v1862 = vpop.f32.mrb[0].mxu0
        %v1863 = vadd.f32 0.0, %v1862
        %v1864 = vpop.f32.mrb[0].mxu0
        %v1865 = vpop.f32.mrb[0].mxu0
        %v1866 = vadd.f32 0.0, %v1865
        %v1867 = vpop.f32.mrb[0].mxu0
        %1868 = vmatprep.mubr.bf16.mxu0 0
        %1869 = vmatmul.mubr.bf16.gmra.mrb[0].mxu0 %v1761
        %v1870 = vpop.f32.mrb[0].mxu0
        %v1871 = vadd.f32 0.0, %v1870
        %v1872 = vpop.f32.mrb[0].mxu0
        %v1873 = vpop.f32.mrb[0].mxu0
        %v1874 = vadd.f32 0.0, %v1873
        %v1875 = vpop.f32.mrb[0].mxu0
        %1876 = vmatprep.mubr.bf16.mxu0 0
        %1877 = vmatmul.mubr.bf16.gmra.mrb[0].mxu0 %v1764
        %v1878 = vpop.f32.mrb[0].mxu0
        %v1879 = vadd.f32 0.0, %v1878
        %v1880 = vpop.f32.mrb[0].mxu0
        %v1881 = vpop.f32.mrb[0].mxu0
        %v1882 = vadd.f32 0.0, %v1881
        %v1883 = vpop.f32.mrb[0].mxu0
        %1884 = vmatprep.mubr.bf16.mxu0 0
        %1885 = vmatmul.mubr.bf16.gmra.mrb[0].mxu0 %v1767
        %v1886 = vpop.f32.mrb[0].mxu0
        %v1887 = vadd.f32 0.0, %v1886
        %v1888 = vpop.f32.mrb[0].mxu0
        %v1889 = vpop.f32.mrb[0].mxu0
        %v1890 = vadd.f32 0.0, %v1889
        %v1891 = vpop.f32.mrb[0].mxu0
        %1892 = vmatprep.mubr.bf16.mxu0 0
        %1893 = vmatmul.mubr.bf16.gmra.mrb[0].mxu0 %v1770
        %v1894 = vpop.f32.mrb[0].mxu0
        %v1895 = vadd.f32 0.0, %v1894
        %v1896 = vpop.f32.mrb[0].mxu0
        %v1897 = vpop.f32.mrb[0].mxu0
        %v1898 = vadd.f32 0.0, %v1897
        %v1899 = vpop.f32.mrb[0].mxu0
        %1900 = vmatprep.mubr.bf16.mxu0 0
        %1901 = vmatmul.mubr.bf16.gmra.mrb[0].mxu0 %v1773
        %v1902 = vpop.f32.mrb[0].mxu0
        %v1903 = vadd.f32 0.0, %v1902
        %v1904 = vpop.f32.mrb[0].mxu0
        %v1905 = vpop.f32.mrb[0].mxu0
        %v1906 = vadd.f32 0.0, %v1905
        %v1907 = vpop.f32.mrb[0].mxu0
        %1908 = vmatprep.mubr.bf16.mxu0 0
        %1909 = vmatmul.mubr.bf16.gmra.mrb[0].mxu0 %v1776
        %v1910 = vpop.f32.mrb[0].mxu0
        %v1911 = vadd.f32 0.0, %v1910
        %v1912 = vpop.f32.mrb[0].mxu0
        %v1913 = vpop.f32.mrb[0].mxu0
        %v1914 = vadd.f32 0.0, %v1913
        %v1915 = vpop.f32.mrb[0].mxu0
        %1916 = vmatprep.mubr.bf16.mxu0 0
        %1917 = vmatmul.mubr.bf16.gmra.mrb[0].mxu0 %v1779
        %v1918 = vpop.f32.mrb[0].mxu0
        %v1919 = vadd.f32 0.0, %v1918
        %v1920 = vpop.f32.mrb[0].mxu0
        %v1921 = vpop.f32.mrb[0].mxu0
        %v1922 = vadd.f32 0.0, %v1921
        %v1923 = vpop.f32.mrb[0].mxu0
        %1924 = vmatprep.mubr.bf16.mxu0 0
        %1925 = vmatmul.mubr.bf16.gmra.mrb[0].mxu0 %v1782
        %v1926 = vpop.f32.mrb[0].mxu0
        %v1927 = vadd.f32 0.0, %v1926
        %v1928 = vpop.f32.mrb[0].mxu0
        %v1929 = vpop.f32.mrb[0].mxu0
        %v1930 = vadd.f32 0.0, %v1929
        %v1931 = vpop.f32.mrb[0].mxu0
        %1932 = vmatprep.mubr.bf16.mxu0 0
        %1933 = vmatmul.mubr.bf16.gmra.mrb[0].mxu0 %v1785
        %v1934 = vpop.f32.mrb[0].mxu0
        %v1935 = vadd.f32 0.0, %v1934
        %v1936 = vpop.f32.mrb[0].mxu0
        %v1937 = vpop.f32.mrb[0].mxu0
        %v1938 = vadd.f32 0.0, %v1937
        %v1939 = vpop.f32.mrb[0].mxu0
        %1940 = vmatprep.mubr.bf16.mxu0 0
        %1941 = vmatmul.mubr.bf16.gmra.mrb[0].mxu0 %v1788
        %v1942 = vpop.f32.mrb[0].mxu0
        %v1943 = vadd.f32 0.0, %v1942
        %v1944 = vpop.f32.mrb[0].mxu0
        %v1945 = vpop.f32.mrb[0].mxu0
        %v1946 = vadd.f32 0.0, %v1945
        %v1947 = vpop.f32.mrb[0].mxu0
        %1948 = vmatprep.mubr.bf16.mxu0 0
        %1949 = vmatmul.mubr.bf16.gmra.mrb[0].mxu0 %v1791
        %v1950 = vpop.f32.mrb[0].mxu0
        %v1951 = vadd.f32 0.0, %v1950
        %v1952 = vpop.f32.mrb[0].mxu0
        %v1953 = vpop.f32.mrb[0].mxu0
        %v1954 = vadd.f32 0.0, %v1953
        %v1955 = vpop.f32.mrb[0].mxu0
        %1956 = vdwg.mxu0
        %v1957 = vadd.f32 %v1598, %v1831
        %v1958 = vadd.f32 %v1599, %v1834
        %v1959 = vadd.f32 %v1600, %v1839
        %v1960 = vadd.f32 %v1601, %v1842
        %v1961 = vadd.f32 %v1602, %v1847
        %v1962 = vadd.f32 %v1603, %v1850
        %v1963 = vadd.f32 %v1604, %v1855
        %v1964 = vadd.f32 %v1605, %v1858
        %v1965 = vadd.f32 %v1606, %v1863
        %v1966 = vadd.f32 %v1607, %v1866
        %v1967 = vadd.f32 %v1608, %v1871
        %v1968 = vadd.f32 %v1609, %v1874
        %v1969 = vadd.f32 %v1610, %v1879
        %v1970 = vadd.f32 %v1611, %v1882
        %v1971 = vadd.f32 %v1612, %v1887
        %v1972 = vadd.f32 %v1613, %v1890
        %v1973 = vadd.f32 %v1614, %v1895
        %v1974 = vadd.f32 %v1615, %v1898
        %v1975 = vadd.f32 %v1616, %v1903
        %v1976 = vadd.f32 %v1617, %v1906
        %v1977 = vadd.f32 %v1618, %v1911
        %v1978 = vadd.f32 %v1619, %v1914
        %v1979 = vadd.f32 %v1620, %v1919
        %v1980 = vadd.f32 %v1621, %v1922
        %v1981 = vadd.f32 %v1622, %v1927
        %v1982 = vadd.f32 %v1623, %v1930
        %v1983 = vadd.f32 %v1624, %v1935
        %v1984 = vadd.f32 %v1625, %v1938
        %v1985 = vadd.f32 %v1626, %v1943
        %v1986 = vadd.f32 %v1627, %v1946
        %v1987 = vadd.f32 %v1628, %v1951
        %v1988 = vadd.f32 %v1629, %v1954
        %v1989 = vld [vmem:[%s1630] sm:$0xf]
        %v1990 = vld [vmem:[%s1630 + $0x4] sm:$0xf]
        %v1991 = vld [vmem:[%s1630 + $0x8] sm:$0x1]
        %v1992 = vld [vmem:[%s1630 + $0xc] sm:$0xf]
        %v1993 = vld [vmem:[%s1630 + $0x10] sm:$0xf]
        %v1994 = vld [vmem:[%s1630 + $0x14] sm:$0x1]
        %v1995 = vld [vmem:[%s1630 + $0x18] sm:$0xf]
        %v1996 = vld [vmem:[%s1630 + $0x1c] sm:$0xf]
        %v1997 = vld [vmem:[%s1630 + $0x20] sm:$0x1]
        %v1998 = vld [vmem:[%s1630 + $0x24] sm:$0xf]
        %v1999 = vld [vmem:[%s1630 + $0x28] sm:$0xf]
        %v2000 = vld [vmem:[%s1630 + $0x2c] sm:$0x1]
        %v2001 = vld [vmem:[%s1630 + $0x30] sm:$0xf]
        %v2002 = vld [vmem:[%s1630 + $0x34] sm:$0xf]
        %v2003 = vld [vmem:[%s1630 + $0x38] sm:$0x1]
        %v2004 = vld [vmem:[%s1630 + $0x3c] sm:$0xf]
        %v2005 = vld [vmem:[%s1630 + $0x40] sm:$0xf]
        %v2006 = vld [vmem:[%s1630 + $0x44] sm:$0x1]
        %v2007 = vld [vmem:[%s1630 + $0x48] sm:$0xf]
        %v2008 = vld [vmem:[%s1630 + $0x4c] sm:$0xf]
        %v2009 = vld [vmem:[%s1630 + $0x50] sm:$0x1]
        %v2010 = vld [vmem:[%s1630 + $0x54] sm:$0xf]
        %v2011 = vld [vmem:[%s1630 + $0x58] sm:$0xf]
        %v2012 = vld [vmem:[%s1630 + $0x5c] sm:$0x1]
        %v2013 = vld [vmem:[%s1630 + $0x60] sm:$0xf]
        %v2014 = vld [vmem:[%s1630 + $0x64] sm:$0xf]
        %v2015 = vld [vmem:[%s1630 + $0x68] sm:$0x1]
        %v2016 = vld [vmem:[%s1630 + $0x6c] sm:$0xf]
        %v2017 = vld [vmem:[%s1630 + $0x70] sm:$0xf]
        %v2018 = vld [vmem:[%s1630 + $0x74] sm:$0x1]
        %v2019 = vld [vmem:[%s1630 + $0x78] sm:$0xf]
        %v2020 = vld [vmem:[%s1630 + $0x7c] sm:$0xf]
        %v2021 = vld [vmem:[%s1630 + $0x80] sm:$0x1]
        %v2022 = vld [vmem:[%s1630 + $0x84] sm:$0xf]
        %v2023 = vld [vmem:[%s1630 + $0x88] sm:$0xf]
        %v2024 = vld [vmem:[%s1630 + $0x8c] sm:$0x1]
        %v2025 = vld [vmem:[%s1630 + $0x90] sm:$0xf]
        %v2026 = vld [vmem:[%s1630 + $0x94] sm:$0xf]
        %v2027 = vld [vmem:[%s1630 + $0x98] sm:$0x1]
        %v2028 = vld [vmem:[%s1630 + $0x9c] sm:$0xf]
        %v2029 = vld [vmem:[%s1630 + $0xa0] sm:$0xf]
        %v2030 = vld [vmem:[%s1630 + $0xa4] sm:$0x1]
        %v2031 = vld [vmem:[%s1630 + $0xa8] sm:$0xf]
        %v2032 = vld [vmem:[%s1630 + $0xac] sm:$0xf]
        %v2033 = vld [vmem:[%s1630 + $0xb0] sm:$0x1]
        %v2034 = vld [vmem:[%s1630 + $0xb4] sm:$0xf]
        %v2035 = vld [vmem:[%s1630 + $0xb8] sm:$0xf]
        %v2036 = vld [vmem:[%s1630 + $0xbc] sm:$0x1]
        %v2038 = vshrl.u32 %v1989, 16
        %v2040 = vrot.slane %v2038, 4
        %v2041 = vshll.u32 %v1989, 16
        %v2043 = vrot.slane %v2041, 5
        %v2044 = vor.u32 %v2040, %v2043
        %v2045 = vrot.slane %v2044, 4
        %v2047 = vshll.u32 %v1990, 16
        %v2049 = vrot.slane %v2047, 5
        %v2050 = vsel %vm232, %v2045, %v2049
        %v2051 = vshrl.u32 %v1990, 16
        %v2053 = vrot.slane %v2051, 4
        %v2054 = vor.u32 %v2053, %v2049
        %v2055 = vrot.slane %v2054, 4
        %v2057 = vshll.u32 %v1991, 16
        %v2059 = vrot.slane %v2057, 5
        %v2060 = vsel %vm232, %v2055, %v2059
        %v2062 = vshrl.u32 %v1992, 16
        %v2064 = vrot.slane %v2062, 4
        %v2065 = vshll.u32 %v1992, 16
        %v2067 = vrot.slane %v2065, 5
        %v2068 = vor.u32 %v2064, %v2067
        %v2069 = vrot.slane %v2068, 4
        %v2071 = vshll.u32 %v1993, 16
        %v2073 = vrot.slane %v2071, 5
        %v2074 = vsel %vm232, %v2069, %v2073
        %v2075 = vshrl.u32 %v1993, 16
        %v2077 = vrot.slane %v2075, 4
        %v2078 = vor.u32 %v2077, %v2073
        %v2079 = vrot.slane %v2078, 4
        %v2081 = vshll.u32 %v1994, 16
        %v2083 = vrot.slane %v2081, 5
        %v2084 = vsel %vm232, %v2079, %v2083
        %v2086 = vshrl.u32 %v1995, 16
        %v2088 = vrot.slane %v2086, 4
        %v2089 = vshll.u32 %v1995, 16
        %v2091 = vrot.slane %v2089, 5
        %v2092 = vor.u32 %v2088, %v2091
        %v2093 = vrot.slane %v2092, 4
        %v2095 = vshll.u32 %v1996, 16
        %v2097 = vrot.slane %v2095, 5
        %v2098 = vsel %vm232, %v2093, %v2097
        %v2099 = vshrl.u32 %v1996, 16
        %v2101 = vrot.slane %v2099, 4
        %v2102 = vor.u32 %v2101, %v2097
        %v2103 = vrot.slane %v2102, 4
        %v2105 = vshll.u32 %v1997, 16
        %v2107 = vrot.slane %v2105, 5
        %v2108 = vsel %vm232, %v2103, %v2107
        %v2110 = vshrl.u32 %v1998, 16
        %v2112 = vrot.slane %v2110, 4
        %v2113 = vshll.u32 %v1998, 16
        %v2115 = vrot.slane %v2113, 5
        %v2116 = vor.u32 %v2112, %v2115
        %v2117 = vrot.slane %v2116, 4
        %v2119 = vshll.u32 %v1999, 16
        %v2121 = vrot.slane %v2119, 5
        %v2122 = vsel %vm232, %v2117, %v2121
        %v2123 = vshrl.u32 %v1999, 16
        %v2125 = vrot.slane %v2123, 4
        %v2126 = vor.u32 %v2125, %v2121
        %v2127 = vrot.slane %v2126, 4
        %v2129 = vshll.u32 %v2000, 16
        %v2131 = vrot.slane %v2129, 5
        %v2132 = vsel %vm232, %v2127, %v2131
        %v2134 = vshrl.u32 %v2001, 16
        %v2136 = vrot.slane %v2134, 4
        %v2137 = vshll.u32 %v2001, 16
        %v2139 = vrot.slane %v2137, 5
        %v2140 = vor.u32 %v2136, %v2139
        %v2141 = vrot.slane %v2140, 4
        %v2143 = vshll.u32 %v2002, 16
        %v2145 = vrot.slane %v2143, 5
        %v2146 = vsel %vm232, %v2141, %v2145
        %v2147 = vshrl.u32 %v2002, 16
        %v2149 = vrot.slane %v2147, 4
        %v2150 = vor.u32 %v2149, %v2145
        %v2151 = vrot.slane %v2150, 4
        %v2153 = vshll.u32 %v2003, 16
        %v2155 = vrot.slane %v2153, 5
        %v2156 = vsel %vm232, %v2151, %v2155
        %v2158 = vshrl.u32 %v2004, 16
        %v2160 = vrot.slane %v2158, 4
        %v2161 = vshll.u32 %v2004, 16
        %v2163 = vrot.slane %v2161, 5
        %v2164 = vor.u32 %v2160, %v2163
        %v2165 = vrot.slane %v2164, 4
        %v2167 = vshll.u32 %v2005, 16
        %v2169 = vrot.slane %v2167, 5
        %v2170 = vsel %vm232, %v2165, %v2169
        %v2171 = vshrl.u32 %v2005, 16
        %v2173 = vrot.slane %v2171, 4
        %v2174 = vor.u32 %v2173, %v2169
        %v2175 = vrot.slane %v2174, 4
        %v2177 = vshll.u32 %v2006, 16
        %v2179 = vrot.slane %v2177, 5
        %v2180 = vsel %vm232, %v2175, %v2179
        %v2182 = vshrl.u32 %v2007, 16
        %v2184 = vrot.slane %v2182, 4
        %v2185 = vshll.u32 %v2007, 16
        %v2187 = vrot.slane %v2185, 5
        %v2188 = vor.u32 %v2184, %v2187
        %v2189 = vrot.slane %v2188, 4
        %v2191 = vshll.u32 %v2008, 16
        %v2193 = vrot.slane %v2191, 5
        %v2194 = vsel %vm232, %v2189, %v2193
        %v2195 = vshrl.u32 %v2008, 16
        %v2197 = vrot.slane %v2195, 4
        %v2198 = vor.u32 %v2197, %v2193
        %v2199 = vrot.slane %v2198, 4
        %v2201 = vshll.u32 %v2009, 16
        %v2203 = vrot.slane %v2201, 5
        %v2204 = vsel %vm232, %v2199, %v2203
        %v2206 = vshrl.u32 %v2010, 16
        %v2208 = vrot.slane %v2206, 4
        %v2209 = vshll.u32 %v2010, 16
        %v2211 = vrot.slane %v2209, 5
        %v2212 = vor.u32 %v2208, %v2211
        %v2213 = vrot.slane %v2212, 4
        %v2215 = vshll.u32 %v2011, 16
        %v2217 = vrot.slane %v2215, 5
        %v2218 = vsel %vm232, %v2213, %v2217
        %v2219 = vshrl.u32 %v2011, 16
        %v2221 = vrot.slane %v2219, 4
        %v2222 = vor.u32 %v2221, %v2217
        %v2223 = vrot.slane %v2222, 4
        %v2225 = vshll.u32 %v2012, 16
        %v2227 = vrot.slane %v2225, 5
        %v2228 = vsel %vm232, %v2223, %v2227
        %v2230 = vshrl.u32 %v2013, 16
        %v2232 = vrot.slane %v2230, 4
        %v2233 = vshll.u32 %v2013, 16
        %v2235 = vrot.slane %v2233, 5
        %v2236 = vor.u32 %v2232, %v2235
        %v2237 = vrot.slane %v2236, 4
        %v2239 = vshll.u32 %v2014, 16
        %v2241 = vrot.slane %v2239, 5
        %v2242 = vsel %vm232, %v2237, %v2241
        %v2243 = vshrl.u32 %v2014, 16
        %v2245 = vrot.slane %v2243, 4
        %v2246 = vor.u32 %v2245, %v2241
        %v2247 = vrot.slane %v2246, 4
        %v2249 = vshll.u32 %v2015, 16
        %v2251 = vrot.slane %v2249, 5
        %v2252 = vsel %vm232, %v2247, %v2251
        %v2254 = vshrl.u32 %v2016, 16
        %v2256 = vrot.slane %v2254, 4
        %v2257 = vshll.u32 %v2016, 16
        %v2259 = vrot.slane %v2257, 5
        %v2260 = vor.u32 %v2256, %v2259
        %v2261 = vrot.slane %v2260, 4
        %v2263 = vshll.u32 %v2017, 16
        %v2265 = vrot.slane %v2263, 5
        %v2266 = vsel %vm232, %v2261, %v2265
        %v2267 = vshrl.u32 %v2017, 16
        %v2269 = vrot.slane %v2267, 4
        %v2270 = vor.u32 %v2269, %v2265
        %v2271 = vrot.slane %v2270, 4
        %v2273 = vshll.u32 %v2018, 16
        %v2275 = vrot.slane %v2273, 5
        %v2276 = vsel %vm232, %v2271, %v2275
        %v2278 = vshrl.u32 %v2019, 16
        %v2280 = vrot.slane %v2278, 4
        %v2281 = vshll.u32 %v2019, 16
        %v2283 = vrot.slane %v2281, 5
        %v2284 = vor.u32 %v2280, %v2283
        %v2285 = vrot.slane %v2284, 4
        %v2287 = vshll.u32 %v2020, 16
        %v2289 = vrot.slane %v2287, 5
        %v2290 = vsel %vm232, %v2285, %v2289
        %v2291 = vshrl.u32 %v2020, 16
        %v2293 = vrot.slane %v2291, 4
        %v2294 = vor.u32 %v2293, %v2289
        %v2295 = vrot.slane %v2294, 4
        %v2297 = vshll.u32 %v2021, 16
        %v2299 = vrot.slane %v2297, 5
        %v2300 = vsel %vm232, %v2295, %v2299
        %v2302 = vshrl.u32 %v2022, 16
        %v2304 = vrot.slane %v2302, 4
        %v2305 = vshll.u32 %v2022, 16
        %v2307 = vrot.slane %v2305, 5
        %v2308 = vor.u32 %v2304, %v2307
        %v2309 = vrot.slane %v2308, 4
        %v2311 = vshll.u32 %v2023, 16
        %v2313 = vrot.slane %v2311, 5
        %v2314 = vsel %vm232, %v2309, %v2313
        %v2315 = vshrl.u32 %v2023, 16
        %v2317 = vrot.slane %v2315, 4
        %v2318 = vor.u32 %v2317, %v2313
        %v2319 = vrot.slane %v2318, 4
        %v2321 = vshll.u32 %v2024, 16
        %v2323 = vrot.slane %v2321, 5
        %v2324 = vsel %vm232, %v2319, %v2323
        %v2326 = vshrl.u32 %v2025, 16
        %v2328 = vrot.slane %v2326, 4
        %v2329 = vshll.u32 %v2025, 16
        %v2331 = vrot.slane %v2329, 5
        %v2332 = vor.u32 %v2328, %v2331
        %v2333 = vrot.slane %v2332, 4
        %v2335 = vshll.u32 %v2026, 16
        %v2337 = vrot.slane %v2335, 5
        %v2338 = vsel %vm232, %v2333, %v2337
        %v2339 = vshrl.u32 %v2026, 16
        %v2341 = vrot.slane %v2339, 4
        %v2342 = vor.u32 %v2341, %v2337
        %v2343 = vrot.slane %v2342, 4
        %v2345 = vshll.u32 %v2027, 16
        %v2347 = vrot.slane %v2345, 5
        %v2348 = vsel %vm232, %v2343, %v2347
        %v2350 = vshrl.u32 %v2028, 16
        %v2352 = vrot.slane %v2350, 4
        %v2353 = vshll.u32 %v2028, 16
        %v2355 = vrot.slane %v2353, 5
        %v2356 = vor.u32 %v2352, %v2355
        %v2357 = vrot.slane %v2356, 4
        %v2359 = vshll.u32 %v2029, 16
        %v2361 = vrot.slane %v2359, 5
        %v2362 = vsel %vm232, %v2357, %v2361
        %v2363 = vshrl.u32 %v2029, 16
        %v2365 = vrot.slane %v2363, 4
        %v2366 = vor.u32 %v2365, %v2361
        %v2367 = vrot.slane %v2366, 4
        %v2369 = vshll.u32 %v2030, 16
        %v2371 = vrot.slane %v2369, 5
        %v2372 = vsel %vm232, %v2367, %v2371
        %v2374 = vshrl.u32 %v2031, 16
        %v2376 = vrot.slane %v2374, 4
        %v2377 = vshll.u32 %v2031, 16
        %v2379 = vrot.slane %v2377, 5
        %v2380 = vor.u32 %v2376, %v2379
        %v2381 = vrot.slane %v2380, 4
        %v2383 = vshll.u32 %v2032, 16
        %v2385 = vrot.slane %v2383, 5
        %v2386 = vsel %vm232, %v2381, %v2385
        %v2387 = vshrl.u32 %v2032, 16
        %v2389 = vrot.slane %v2387, 4
        %v2390 = vor.u32 %v2389, %v2385
        %v2391 = vrot.slane %v2390, 4
        %v2393 = vshll.u32 %v2033, 16
        %v2395 = vrot.slane %v2393, 5
        %v2396 = vsel %vm232, %v2391, %v2395
        %v2398 = vshrl.u32 %v2034, 16
        %v2400 = vrot.slane %v2398, 4
        %v2401 = vshll.u32 %v2034, 16
        %v2403 = vrot.slane %v2401, 5
        %v2404 = vor.u32 %v2400, %v2403
        %v2405 = vrot.slane %v2404, 4
        %v2407 = vshll.u32 %v2035, 16
        %v2409 = vrot.slane %v2407, 5
        %v2410 = vsel %vm232, %v2405, %v2409
        %v2411 = vshrl.u32 %v2035, 16
        %v2413 = vrot.slane %v2411, 4
        %v2414 = vor.u32 %v2413, %v2409
        %v2415 = vrot.slane %v2414, 4
        %v2417 = vshll.u32 %v2036, 16
        %v2419 = vrot.slane %v2417, 5
        %v2420 = vsel %vm232, %v2415, %v2419
        %s2421 = scalar_lea.vmem %s1, 16
        %v2422 = vld [vmem:[%s2421] sm:$0xf]
        %v2423 = vunpack.c.l.b16 %v2050
        %v2424 = vunpack.c.l.b16 %v2060
        %v2425 = vunpack.c.l.b16 %v2074
        %v2426 = vunpack.c.l.b16 %v2084
        %v2427 = vunpack.c.l.b16 %v2098
        %v2428 = vunpack.c.l.b16 %v2108
        %v2429 = vunpack.c.l.b16 %v2122
        %v2430 = vunpack.c.l.b16 %v2132
        %v2431 = vunpack.c.l.b16 %v2146
        %v2432 = vunpack.c.l.b16 %v2156
        %v2433 = vunpack.c.l.b16 %v2170
        %v2434 = vunpack.c.l.b16 %v2180
        %v2435 = vunpack.c.l.b16 %v2194
        %v2436 = vunpack.c.l.b16 %v2204
        %v2437 = vunpack.c.l.b16 %v2218
        %v2438 = vunpack.c.l.b16 %v2228
        %v2439 = vunpack.c.l.b16 %v2242
        %v2440 = vunpack.c.l.b16 %v2252
        %v2441 = vunpack.c.l.b16 %v2266
        %v2442 = vunpack.c.l.b16 %v2276
        %v2443 = vunpack.c.l.b16 %v2290
        %v2444 = vunpack.c.l.b16 %v2300
        %v2445 = vunpack.c.l.b16 %v2314
        %v2446 = vunpack.c.l.b16 %v2324
        %v2447 = vunpack.c.l.b16 %v2338
        %v2448 = vunpack.c.l.b16 %v2348
        %v2449 = vunpack.c.l.b16 %v2362
        %v2450 = vunpack.c.l.b16 %v2372
        %v2451 = vunpack.c.l.b16 %v2386
        %v2452 = vunpack.c.l.b16 %v2396
        %v2453 = vunpack.c.l.b16 %v2410
        %v2454 = vunpack.c.l.b16 %v2420
        %v2455 = vpack.c.b16 %v2424, %v2423
        %v2456 = vpack.c.b16 %v2426, %v2425
        %v2457 = vpack.c.b16 %v2428, %v2427
        %v2458 = vpack.c.b16 %v2430, %v2429
        %v2459 = vpack.c.b16 %v2432, %v2431
        %v2460 = vpack.c.b16 %v2434, %v2433
        %v2461 = vpack.c.b16 %v2436, %v2435
        %v2462 = vpack.c.b16 %v2438, %v2437
        %v2463 = vpack.c.b16 %v2440, %v2439
        %v2464 = vpack.c.b16 %v2442, %v2441
        %v2465 = vpack.c.b16 %v2444, %v2443
        %v2466 = vpack.c.b16 %v2446, %v2445
        %v2467 = vpack.c.b16 %v2448, %v2447
        %v2468 = vpack.c.b16 %v2450, %v2449
        %v2469 = vpack.c.b16 %v2452, %v2451
        %v2470 = vpack.c.b16 %v2454, %v2453
        %v2472 = vsel %vm667, %v2455, 0
        %v2475 = vsel %vm667, %v2456, 0
        %v2478 = vsel %vm667, %v2457, 0
        %v2481 = vsel %vm667, %v2458, 0
        %v2484 = vsel %vm667, %v2459, 0
        %v2487 = vsel %vm667, %v2460, 0
        %v2490 = vsel %vm667, %v2461, 0
        %v2493 = vsel %vm667, %v2462, 0
        %v2496 = vsel %vm667, %v2463, 0
        %v2499 = vsel %vm667, %v2464, 0
        %v2502 = vsel %vm667, %v2465, 0
        %v2505 = vsel %vm667, %v2466, 0
        %v2508 = vsel %vm667, %v2467, 0
        %v2511 = vsel %vm667, %v2468, 0
        %v2514 = vsel %vm667, %v2469, 0
        %v2517 = vsel %vm667, %v2470, 0
        %v2520 = vsel %vm716, %v2422, 0
        %2522 = vmatprep.subr.bf16.mxu0 0
        %2523 = vmatpush1.bf16.msra.mxu0 %v2520
        %2524 = vmatprep.subr.bf16.mxu0 0
        %2525 = vmatpush1.bf16.msra.mxu0 0
        %2526 = vmatprep.subr.bf16.mxu0 0
        %2527 = vmatpush1.bf16.msra.mxu0 0
        %2528 = vmatprep.subr.bf16.mxu0 0
        %2529 = vmatpush1.bf16.msra.mxu0 0
        %2530 = vmatprep.subr.bf16.mxu0 0
        %2531 = vmatpush1.bf16.msra.mxu0 0
        %2532 = vmatprep.subr.bf16.mxu0 0
        %2533 = vmatpush1.bf16.msra.mxu0 0
        %2534 = vmatprep.subr.bf16.mxu0 0
        %2535 = vmatpush1.bf16.msra.mxu0 0
        %2536 = vmatprep.subr.bf16.mxu0 0
        %2537 = vmatpush1.bf16.msra.mxu0 0
        %2538 = vmatprep.subr.bf16.mxu0 0
        %2539 = vmatpush1.bf16.msra.mxu0 0
        %2540 = vmatprep.subr.bf16.mxu0 0
        %2541 = vmatpush1.bf16.msra.mxu0 0
        %2542 = vmatprep.subr.bf16.mxu0 0
        %2543 = vmatpush1.bf16.msra.mxu0 0
        %2544 = vmatprep.subr.bf16.mxu0 0
        %2545 = vmatpush1.bf16.msra.mxu0 0
        %2546 = vmatprep.subr.bf16.mxu0 0
        %2547 = vmatpush1.bf16.msra.mxu0 0
        %2548 = vmatprep.subr.bf16.mxu0 0
        %2549 = vmatpush1.bf16.msra.mxu0 0
        %2550 = vmatprep.subr.bf16.mxu0 0
        %2551 = vmatpush1.bf16.msra.mxu0 0
        %2552 = vmatprep.subr.bf16.mxu0 0
        %2553 = vmatpush1.bf16.msra.mxu0 0
        %2554 = vmatprep.mubr.bf16.mxu0 0
        %2555 = vmatmul.mubr.bf16.gmra.mrb[0].mxu0 %v2472
        %v2556 = vpop.f32.mrb[0].mxu0
        %v2557 = vadd.f32 0.0, %v2556
        %v2558 = vpop.f32.mrb[0].mxu0
        %v2559 = vpop.f32.mrb[0].mxu0
        %v2560 = vadd.f32 0.0, %v2559
        %v2561 = vpop.f32.mrb[0].mxu0
        %2562 = vmatprep.mubr.bf16.mxu0 0
        %2563 = vmatmul.mubr.bf16.gmra.mrb[0].mxu0 %v2475
        %v2564 = vpop.f32.mrb[0].mxu0
        %v2565 = vadd.f32 0.0, %v2564
        %v2566 = vpop.f32.mrb[0].mxu0
        %v2567 = vpop.f32.mrb[0].mxu0
        %v2568 = vadd.f32 0.0, %v2567
        %v2569 = vpop.f32.mrb[0].mxu0
        %2570 = vmatprep.mubr.bf16.mxu0 0
        %2571 = vmatmul.mubr.bf16.gmra.mrb[0].mxu0 %v2478
        %v2572 = vpop.f32.mrb[0].mxu0
        %v2573 = vadd.f32 0.0, %v2572
        %v2574 = vpop.f32.mrb[0].mxu0
        %v2575 = vpop.f32.mrb[0].mxu0
        %v2576 = vadd.f32 0.0, %v2575
        %v2577 = vpop.f32.mrb[0].mxu0
        %2578 = vmatprep.mubr.bf16.mxu0 0
        %2579 = vmatmul.mubr.bf16.gmra.mrb[0].mxu0 %v2481
        %v2580 = vpop.f32.mrb[0].mxu0
        %v2581 = vadd.f32 0.0, %v2580
        %v2582 = vpop.f32.mrb[0].mxu0
        %v2583 = vpop.f32.mrb[0].mxu0
        %v2584 = vadd.f32 0.0, %v2583
        %v2585 = vpop.f32.mrb[0].mxu0
        %2586 = vmatprep.mubr.bf16.mxu0 0
        %2587 = vmatmul.mubr.bf16.gmra.mrb[0].mxu0 %v2484
        %v2588 = vpop.f32.mrb[0].mxu0
        %v2589 = vadd.f32 0.0, %v2588
        %v2590 = vpop.f32.mrb[0].mxu0
        %v2591 = vpop.f32.mrb[0].mxu0
        %v2592 = vadd.f32 0.0, %v2591
        %v2593 = vpop.f32.mrb[0].mxu0
        %2594 = vmatprep.mubr.bf16.mxu0 0
        %2595 = vmatmul.mubr.bf16.gmra.mrb[0].mxu0 %v2487
        %v2596 = vpop.f32.mrb[0].mxu0
        %v2597 = vadd.f32 0.0, %v2596
        %v2598 = vpop.f32.mrb[0].mxu0
        %v2599 = vpop.f32.mrb[0].mxu0
        %v2600 = vadd.f32 0.0, %v2599
        %v2601 = vpop.f32.mrb[0].mxu0
        %2602 = vmatprep.mubr.bf16.mxu0 0
        %2603 = vmatmul.mubr.bf16.gmra.mrb[0].mxu0 %v2490
        %v2604 = vpop.f32.mrb[0].mxu0
        %v2605 = vadd.f32 0.0, %v2604
        %v2606 = vpop.f32.mrb[0].mxu0
        %v2607 = vpop.f32.mrb[0].mxu0
        %v2608 = vadd.f32 0.0, %v2607
        %v2609 = vpop.f32.mrb[0].mxu0
        %2610 = vmatprep.mubr.bf16.mxu0 0
        %2611 = vmatmul.mubr.bf16.gmra.mrb[0].mxu0 %v2493
        %v2612 = vpop.f32.mrb[0].mxu0
        %v2613 = vadd.f32 0.0, %v2612
        %v2614 = vpop.f32.mrb[0].mxu0
        %v2615 = vpop.f32.mrb[0].mxu0
        %v2616 = vadd.f32 0.0, %v2615
        %v2617 = vpop.f32.mrb[0].mxu0
        %2618 = vmatprep.mubr.bf16.mxu0 0
        %2619 = vmatmul.mubr.bf16.gmra.mrb[0].mxu0 %v2496
        %v2620 = vpop.f32.mrb[0].mxu0
        %v2621 = vadd.f32 0.0, %v2620
        %v2622 = vpop.f32.mrb[0].mxu0
        %v2623 = vpop.f32.mrb[0].mxu0
        %v2624 = vadd.f32 0.0, %v2623
        %v2625 = vpop.f32.mrb[0].mxu0
        %2626 = vmatprep.mubr.bf16.mxu0 0
        %2627 = vmatmul.mubr.bf16.gmra.mrb[0].mxu0 %v2499
        %v2628 = vpop.f32.mrb[0].mxu0
        %v2629 = vadd.f32 0.0, %v2628
        %v2630 = vpop.f32.mrb[0].mxu0
        %v2631 = vpop.f32.mrb[0].mxu0
        %v2632 = vadd.f32 0.0, %v2631
        %v2633 = vpop.f32.mrb[0].mxu0
        %2634 = vmatprep.mubr.bf16.mxu0 0
        %2635 = vmatmul.mubr.bf16.gmra.mrb[0].mxu0 %v2502
        %v2636 = vpop.f32.mrb[0].mxu0
        %v2637 = vadd.f32 0.0, %v2636
        %v2638 = vpop.f32.mrb[0].mxu0
        %v2639 = vpop.f32.mrb[0].mxu0
        %v2640 = vadd.f32 0.0, %v2639
        %v2641 = vpop.f32.mrb[0].mxu0
        %2642 = vmatprep.mubr.bf16.mxu0 0
        %2643 = vmatmul.mubr.bf16.gmra.mrb[0].mxu0 %v2505
        %v2644 = vpop.f32.mrb[0].mxu0
        %v2645 = vadd.f32 0.0, %v2644
        %v2646 = vpop.f32.mrb[0].mxu0
        %v2647 = vpop.f32.mrb[0].mxu0
        %v2648 = vadd.f32 0.0, %v2647
        %v2649 = vpop.f32.mrb[0].mxu0
        %2650 = vmatprep.mubr.bf16.mxu0 0
        %2651 = vmatmul.mubr.bf16.gmra.mrb[0].mxu0 %v2508
        %v2652 = vpop.f32.mrb[0].mxu0
        %v2653 = vadd.f32 0.0, %v2652
        %v2654 = vpop.f32.mrb[0].mxu0
        %v2655 = vpop.f32.mrb[0].mxu0
        %v2656 = vadd.f32 0.0, %v2655
        %v2657 = vpop.f32.mrb[0].mxu0
        %2658 = vmatprep.mubr.bf16.mxu0 0
        %2659 = vmatmul.mubr.bf16.gmra.mrb[0].mxu0 %v2511
        %v2660 = vpop.f32.mrb[0].mxu0
        %v2661 = vadd.f32 0.0, %v2660
        %v2662 = vpop.f32.mrb[0].mxu0
        %v2663 = vpop.f32.mrb[0].mxu0
        %v2664 = vadd.f32 0.0, %v2663
        %v2665 = vpop.f32.mrb[0].mxu0
        %2666 = vmatprep.mubr.bf16.mxu0 0
        %2667 = vmatmul.mubr.bf16.gmra.mrb[0].mxu0 %v2514
        %v2668 = vpop.f32.mrb[0].mxu0
        %v2669 = vadd.f32 0.0, %v2668
        %v2670 = vpop.f32.mrb[0].mxu0
        %v2671 = vpop.f32.mrb[0].mxu0
        %v2672 = vadd.f32 0.0, %v2671
        %v2673 = vpop.f32.mrb[0].mxu0
        %2674 = vmatprep.mubr.bf16.mxu0 0
        %2675 = vmatmul.mubr.bf16.gmra.mrb[0].mxu0 %v2517
        %v2676 = vpop.f32.mrb[0].mxu0
        %v2677 = vadd.f32 0.0, %v2676
        %v2678 = vpop.f32.mrb[0].mxu0
        %v2679 = vpop.f32.mrb[0].mxu0
        %v2680 = vadd.f32 0.0, %v2679
        %v2681 = vpop.f32.mrb[0].mxu0
        %2682 = vdwg.mxu0
        %v2683 = vadd.f32 %v1957, %v2557
        %v2684 = vadd.f32 %v1958, %v2560
        %v2685 = vadd.f32 %v1959, %v2565
        %v2686 = vadd.f32 %v1960, %v2568
        %v2687 = vadd.f32 %v1961, %v2573
        %v2688 = vadd.f32 %v1962, %v2576
        %v2689 = vadd.f32 %v1963, %v2581
        %v2690 = vadd.f32 %v1964, %v2584
        %v2691 = vadd.f32 %v1965, %v2589
        %v2692 = vadd.f32 %v1966, %v2592
        %v2693 = vadd.f32 %v1967, %v2597
        %v2694 = vadd.f32 %v1968, %v2600
        %v2695 = vadd.f32 %v1969, %v2605
        %v2696 = vadd.f32 %v1970, %v2608
        %v2697 = vadd.f32 %v1971, %v2613
        %v2698 = vadd.f32 %v1972, %v2616
        %v2699 = vadd.f32 %v1973, %v2621
        %v2700 = vadd.f32 %v1974, %v2624
        %v2701 = vadd.f32 %v1975, %v2629
        %v2702 = vadd.f32 %v1976, %v2632
        %v2703 = vadd.f32 %v1977, %v2637
        %v2704 = vadd.f32 %v1978, %v2640
        %v2705 = vadd.f32 %v1979, %v2645
        %v2706 = vadd.f32 %v1980, %v2648
        %v2707 = vadd.f32 %v1981, %v2653
        %v2708 = vadd.f32 %v1982, %v2656
        %v2709 = vadd.f32 %v1983, %v2661
        %v2710 = vadd.f32 %v1984, %v2664
        %v2711 = vadd.f32 %v1985, %v2669
        %v2712 = vadd.f32 %v1986, %v2672
        %v2713 = vadd.f32 %v1987, %v2677
        %v2714 = vadd.f32 %v1988, %v2680
        %v2715 = vld [vmem:[%s1630] sm:$0xe]
        %v2716 = vld [vmem:[%s1630 + $0xc] sm:$0xe]
        %v2717 = vld [vmem:[%s1630 + $0x18] sm:$0xe]
        %v2718 = vld [vmem:[%s1630 + $0x24] sm:$0xe]
        %v2719 = vld [vmem:[%s1630 + $0x30] sm:$0xe]
        %v2720 = vld [vmem:[%s1630 + $0x3c] sm:$0xe]
        %v2721 = vld [vmem:[%s1630 + $0x48] sm:$0xe]
        %v2722 = vld [vmem:[%s1630 + $0x54] sm:$0xe]
        %v2723 = vld [vmem:[%s1630 + $0x60] sm:$0xe]
        %v2724 = vld [vmem:[%s1630 + $0x6c] sm:$0xe]
        %v2725 = vld [vmem:[%s1630 + $0x78] sm:$0xe]
        %v2726 = vld [vmem:[%s1630 + $0x84] sm:$0xe]
        %v2727 = vld [vmem:[%s1630 + $0x90] sm:$0xe]
        %v2728 = vld [vmem:[%s1630 + $0x9c] sm:$0xe]
        %v2729 = vld [vmem:[%s1630 + $0xa8] sm:$0xe]
        %v2730 = vld [vmem:[%s1630 + $0xb4] sm:$0xe]
        %v2779 = vrot.slane %v2715, 5
        %v2780 = vrot.slane %v2779, 4
        %v2781 = vrot.slane %v1990, 5
        %v2782 = vsel %vm1223, %v2780, %v2781
        %v2783 = vrot.slane %v2781, 4
        %v2784 = vrot.slane %v1991, 5
        %v2785 = vsel %vm1223, %v2783, %v2784
        %v2786 = vrot.slane %v2716, 5
        %v2787 = vrot.slane %v2786, 4
        %v2788 = vrot.slane %v1993, 5
        %v2789 = vsel %vm1223, %v2787, %v2788
        %v2790 = vrot.slane %v2788, 4
        %v2791 = vrot.slane %v1994, 5
        %v2792 = vsel %vm1223, %v2790, %v2791
        %v2793 = vrot.slane %v2717, 5
        %v2794 = vrot.slane %v2793, 4
        %v2795 = vrot.slane %v1996, 5
        %v2796 = vsel %vm1223, %v2794, %v2795
        %v2797 = vrot.slane %v2795, 4
        %v2798 = vrot.slane %v1997, 5
        %v2799 = vsel %vm1223, %v2797, %v2798
        %v2800 = vrot.slane %v2718, 5
        %v2801 = vrot.slane %v2800, 4
        %v2802 = vrot.slane %v1999, 5
        %v2803 = vsel %vm1223, %v2801, %v2802
        %v2804 = vrot.slane %v2802, 4
        %v2805 = vrot.slane %v2000, 5
        %v2806 = vsel %vm1223, %v2804, %v2805
        %v2807 = vrot.slane %v2719, 5
        %v2808 = vrot.slane %v2807, 4
        %v2809 = vrot.slane %v2002, 5
        %v2810 = vsel %vm1223, %v2808, %v2809
        %v2811 = vrot.slane %v2809, 4
        %v2812 = vrot.slane %v2003, 5
        %v2813 = vsel %vm1223, %v2811, %v2812
        %v2814 = vrot.slane %v2720, 5
        %v2815 = vrot.slane %v2814, 4
        %v2816 = vrot.slane %v2005, 5
        %v2817 = vsel %vm1223, %v2815, %v2816
        %v2818 = vrot.slane %v2816, 4
        %v2819 = vrot.slane %v2006, 5
        %v2820 = vsel %vm1223, %v2818, %v2819
        %v2821 = vrot.slane %v2721, 5
        %v2822 = vrot.slane %v2821, 4
        %v2823 = vrot.slane %v2008, 5
        %v2824 = vsel %vm1223, %v2822, %v2823
        %v2825 = vrot.slane %v2823, 4
        %v2826 = vrot.slane %v2009, 5
        %v2827 = vsel %vm1223, %v2825, %v2826
        %v2828 = vrot.slane %v2722, 5
        %v2829 = vrot.slane %v2828, 4
        %v2830 = vrot.slane %v2011, 5
        %v2831 = vsel %vm1223, %v2829, %v2830
        %v2832 = vrot.slane %v2830, 4
        %v2833 = vrot.slane %v2012, 5
        %v2834 = vsel %vm1223, %v2832, %v2833
        %v2835 = vrot.slane %v2723, 5
        %v2836 = vrot.slane %v2835, 4
        %v2837 = vrot.slane %v2014, 5
        %v2838 = vsel %vm1223, %v2836, %v2837
        %v2839 = vrot.slane %v2837, 4
        %v2840 = vrot.slane %v2015, 5
        %v2841 = vsel %vm1223, %v2839, %v2840
        %v2842 = vrot.slane %v2724, 5
        %v2843 = vrot.slane %v2842, 4
        %v2844 = vrot.slane %v2017, 5
        %v2845 = vsel %vm1223, %v2843, %v2844
        %v2846 = vrot.slane %v2844, 4
        %v2847 = vrot.slane %v2018, 5
        %v2848 = vsel %vm1223, %v2846, %v2847
        %v2849 = vrot.slane %v2725, 5
        %v2850 = vrot.slane %v2849, 4
        %v2851 = vrot.slane %v2020, 5
        %v2852 = vsel %vm1223, %v2850, %v2851
        %v2853 = vrot.slane %v2851, 4
        %v2854 = vrot.slane %v2021, 5
        %v2855 = vsel %vm1223, %v2853, %v2854
        %v2856 = vrot.slane %v2726, 5
        %v2857 = vrot.slane %v2856, 4
        %v2858 = vrot.slane %v2023, 5
        %v2859 = vsel %vm1223, %v2857, %v2858
        %v2860 = vrot.slane %v2858, 4
        %v2861 = vrot.slane %v2024, 5
        %v2862 = vsel %vm1223, %v2860, %v2861
        %v2863 = vrot.slane %v2727, 5
        %v2864 = vrot.slane %v2863, 4
        %v2865 = vrot.slane %v2026, 5
        %v2866 = vsel %vm1223, %v2864, %v2865
        %v2867 = vrot.slane %v2865, 4
        %v2868 = vrot.slane %v2027, 5
        %v2869 = vsel %vm1223, %v2867, %v2868
        %v2870 = vrot.slane %v2728, 5
        %v2871 = vrot.slane %v2870, 4
        %v2872 = vrot.slane %v2029, 5
        %v2873 = vsel %vm1223, %v2871, %v2872
        %v2874 = vrot.slane %v2872, 4
        %v2875 = vrot.slane %v2030, 5
        %v2876 = vsel %vm1223, %v2874, %v2875
        %v2877 = vrot.slane %v2729, 5
        %v2878 = vrot.slane %v2877, 4
        %v2879 = vrot.slane %v2032, 5
        %v2880 = vsel %vm1223, %v2878, %v2879
        %v2881 = vrot.slane %v2879, 4
        %v2882 = vrot.slane %v2033, 5
        %v2883 = vsel %vm1223, %v2881, %v2882
        %v2884 = vrot.slane %v2730, 5
        %v2885 = vrot.slane %v2884, 4
        %v2886 = vrot.slane %v2035, 5
        %v2887 = vsel %vm1223, %v2885, %v2886
        %v2888 = vrot.slane %v2886, 4
        %v2889 = vrot.slane %v2036, 5
        %v2890 = vsel %vm1223, %v2888, %v2889
        %s2891 = scalar_lea.vmem %s1, 20
        %v2892 = vld [vmem:[%s2891] sm:$0xf]
        %v2893 = vunpack.c.l.b16 %v2782
        %v2894 = vunpack.c.l.b16 %v2785
        %v2895 = vunpack.c.l.b16 %v2789
        %v2896 = vunpack.c.l.b16 %v2792
        %v2897 = vunpack.c.l.b16 %v2796
        %v2898 = vunpack.c.l.b16 %v2799
        %v2899 = vunpack.c.l.b16 %v2803
        %v2900 = vunpack.c.l.b16 %v2806
        %v2901 = vunpack.c.l.b16 %v2810
        %v2902 = vunpack.c.l.b16 %v2813
        %v2903 = vunpack.c.l.b16 %v2817
        %v2904 = vunpack.c.l.b16 %v2820
        %v2905 = vunpack.c.l.b16 %v2824
        %v2906 = vunpack.c.l.b16 %v2827
        %v2907 = vunpack.c.l.b16 %v2831
        %v2908 = vunpack.c.l.b16 %v2834
        %v2909 = vunpack.c.l.b16 %v2838
        %v2910 = vunpack.c.l.b16 %v2841
        %v2911 = vunpack.c.l.b16 %v2845
        %v2912 = vunpack.c.l.b16 %v2848
        %v2913 = vunpack.c.l.b16 %v2852
        %v2914 = vunpack.c.l.b16 %v2855
        %v2915 = vunpack.c.l.b16 %v2859
        %v2916 = vunpack.c.l.b16 %v2862
        %v2917 = vunpack.c.l.b16 %v2866
        %v2918 = vunpack.c.l.b16 %v2869
        %v2919 = vunpack.c.l.b16 %v2873
        %v2920 = vunpack.c.l.b16 %v2876
        %v2921 = vunpack.c.l.b16 %v2880
        %v2922 = vunpack.c.l.b16 %v2883
        %v2923 = vunpack.c.l.b16 %v2887
        %v2924 = vunpack.c.l.b16 %v2890
        %v2925 = vpack.c.b16 %v2894, %v2893
        %v2926 = vpack.c.b16 %v2896, %v2895
        %v2927 = vpack.c.b16 %v2898, %v2897
        %v2928 = vpack.c.b16 %v2900, %v2899
        %v2929 = vpack.c.b16 %v2902, %v2901
        %v2930 = vpack.c.b16 %v2904, %v2903
        %v2931 = vpack.c.b16 %v2906, %v2905
        %v2932 = vpack.c.b16 %v2908, %v2907
        %v2933 = vpack.c.b16 %v2910, %v2909
        %v2934 = vpack.c.b16 %v2912, %v2911
        %v2935 = vpack.c.b16 %v2914, %v2913
        %v2936 = vpack.c.b16 %v2916, %v2915
        %v2937 = vpack.c.b16 %v2918, %v2917
        %v2938 = vpack.c.b16 %v2920, %v2919
        %v2939 = vpack.c.b16 %v2922, %v2921
        %v2940 = vpack.c.b16 %v2924, %v2923
        %v2942 = vsel %vm667, %v2925, 0
        %v2945 = vsel %vm667, %v2926, 0
        %v2948 = vsel %vm667, %v2927, 0
        %v2951 = vsel %vm667, %v2928, 0
        %v2954 = vsel %vm667, %v2929, 0
        %v2957 = vsel %vm667, %v2930, 0
        %v2960 = vsel %vm667, %v2931, 0
        %v2963 = vsel %vm667, %v2932, 0
        %v2966 = vsel %vm667, %v2933, 0
        %v2969 = vsel %vm667, %v2934, 0
        %v2972 = vsel %vm667, %v2935, 0
        %v2975 = vsel %vm667, %v2936, 0
        %v2978 = vsel %vm667, %v2937, 0
        %v2981 = vsel %vm667, %v2938, 0
        %v2984 = vsel %vm667, %v2939, 0
        %v2987 = vsel %vm667, %v2940, 0
        %v2990 = vsel %vm716, %v2892, 0
        %2992 = vmatprep.subr.bf16.mxu0 0
        %2993 = vmatpush1.bf16.msra.mxu0 %v2990
        %2994 = vmatprep.subr.bf16.mxu0 0
        %2995 = vmatpush1.bf16.msra.mxu0 0
        %2996 = vmatprep.subr.bf16.mxu0 0
        %2997 = vmatpush1.bf16.msra.mxu0 0
        %2998 = vmatprep.subr.bf16.mxu0 0
        %2999 = vmatpush1.bf16.msra.mxu0 0
        %3000 = vmatprep.subr.bf16.mxu0 0
        %3001 = vmatpush1.bf16.msra.mxu0 0
        %3002 = vmatprep.subr.bf16.mxu0 0
        %3003 = vmatpush1.bf16.msra.mxu0 0
        %3004 = vmatprep.subr.bf16.mxu0 0
        %3005 = vmatpush1.bf16.msra.mxu0 0
        %3006 = vmatprep.subr.bf16.mxu0 0
        %3007 = vmatpush1.bf16.msra.mxu0 0
        %3008 = vmatprep.subr.bf16.mxu0 0
        %3009 = vmatpush1.bf16.msra.mxu0 0
        %3010 = vmatprep.subr.bf16.mxu0 0
        %3011 = vmatpush1.bf16.msra.mxu0 0
        %3012 = vmatprep.subr.bf16.mxu0 0
        %3013 = vmatpush1.bf16.msra.mxu0 0
        %3014 = vmatprep.subr.bf16.mxu0 0
        %3015 = vmatpush1.bf16.msra.mxu0 0
        %3016 = vmatprep.subr.bf16.mxu0 0
        %3017 = vmatpush1.bf16.msra.mxu0 0
        %3018 = vmatprep.subr.bf16.mxu0 0
        %3019 = vmatpush1.bf16.msra.mxu0 0
        %3020 = vmatprep.subr.bf16.mxu0 0
        %3021 = vmatpush1.bf16.msra.mxu0 0
        %3022 = vmatprep.subr.bf16.mxu0 0
        %3023 = vmatpush1.bf16.msra.mxu0 0
        %3024 = vmatprep.mubr.bf16.mxu0 0
        %3025 = vmatmul.mubr.bf16.gmra.mrb[0].mxu0 %v2942
        %v3026 = vpop.f32.mrb[0].mxu0
        %v3027 = vadd.f32 0.0, %v3026
        %v3028 = vpop.f32.mrb[0].mxu0
        %v3029 = vpop.f32.mrb[0].mxu0
        %v3030 = vadd.f32 0.0, %v3029
        %v3031 = vpop.f32.mrb[0].mxu0
        %3032 = vmatprep.mubr.bf16.mxu0 0
        %3033 = vmatmul.mubr.bf16.gmra.mrb[0].mxu0 %v2945
        %v3034 = vpop.f32.mrb[0].mxu0
        %v3035 = vadd.f32 0.0, %v3034
        %v3036 = vpop.f32.mrb[0].mxu0
        %v3037 = vpop.f32.mrb[0].mxu0
        %v3038 = vadd.f32 0.0, %v3037
        %v3039 = vpop.f32.mrb[0].mxu0
        %3040 = vmatprep.mubr.bf16.mxu0 0
        %3041 = vmatmul.mubr.bf16.gmra.mrb[0].mxu0 %v2948
        %v3042 = vpop.f32.mrb[0].mxu0
        %v3043 = vadd.f32 0.0, %v3042
        %v3044 = vpop.f32.mrb[0].mxu0
        %v3045 = vpop.f32.mrb[0].mxu0
        %v3046 = vadd.f32 0.0, %v3045
        %v3047 = vpop.f32.mrb[0].mxu0
        %3048 = vmatprep.mubr.bf16.mxu0 0
        %3049 = vmatmul.mubr.bf16.gmra.mrb[0].mxu0 %v2951
        %v3050 = vpop.f32.mrb[0].mxu0
        %v3051 = vadd.f32 0.0, %v3050
        %v3052 = vpop.f32.mrb[0].mxu0
        %v3053 = vpop.f32.mrb[0].mxu0
        %v3054 = vadd.f32 0.0, %v3053
        %v3055 = vpop.f32.mrb[0].mxu0
        %3056 = vmatprep.mubr.bf16.mxu0 0
        %3057 = vmatmul.mubr.bf16.gmra.mrb[0].mxu0 %v2954
        %v3058 = vpop.f32.mrb[0].mxu0
        %v3059 = vadd.f32 0.0, %v3058
        %v3060 = vpop.f32.mrb[0].mxu0
        %v3061 = vpop.f32.mrb[0].mxu0
        %v3062 = vadd.f32 0.0, %v3061
        %v3063 = vpop.f32.mrb[0].mxu0
        %3064 = vmatprep.mubr.bf16.mxu0 0
        %3065 = vmatmul.mubr.bf16.gmra.mrb[0].mxu0 %v2957
        %v3066 = vpop.f32.mrb[0].mxu0
        %v3067 = vadd.f32 0.0, %v3066
        %v3068 = vpop.f32.mrb[0].mxu0
        %v3069 = vpop.f32.mrb[0].mxu0
        %v3070 = vadd.f32 0.0, %v3069
        %v3071 = vpop.f32.mrb[0].mxu0
        %3072 = vmatprep.mubr.bf16.mxu0 0
        %3073 = vmatmul.mubr.bf16.gmra.mrb[0].mxu0 %v2960
        %v3074 = vpop.f32.mrb[0].mxu0
        %v3075 = vadd.f32 0.0, %v3074
        %v3076 = vpop.f32.mrb[0].mxu0
        %v3077 = vpop.f32.mrb[0].mxu0
        %v3078 = vadd.f32 0.0, %v3077
        %v3079 = vpop.f32.mrb[0].mxu0
        %3080 = vmatprep.mubr.bf16.mxu0 0
        %3081 = vmatmul.mubr.bf16.gmra.mrb[0].mxu0 %v2963
        %v3082 = vpop.f32.mrb[0].mxu0
        %v3083 = vadd.f32 0.0, %v3082
        %v3084 = vpop.f32.mrb[0].mxu0
        %v3085 = vpop.f32.mrb[0].mxu0
        %v3086 = vadd.f32 0.0, %v3085
        %v3087 = vpop.f32.mrb[0].mxu0
        %3088 = vmatprep.mubr.bf16.mxu0 0
        %3089 = vmatmul.mubr.bf16.gmra.mrb[0].mxu0 %v2966
        %v3090 = vpop.f32.mrb[0].mxu0
        %v3091 = vadd.f32 0.0, %v3090
        %v3092 = vpop.f32.mrb[0].mxu0
        %v3093 = vpop.f32.mrb[0].mxu0
        %v3094 = vadd.f32 0.0, %v3093
        %v3095 = vpop.f32.mrb[0].mxu0
        %3096 = vmatprep.mubr.bf16.mxu0 0
        %3097 = vmatmul.mubr.bf16.gmra.mrb[0].mxu0 %v2969
        %v3098 = vpop.f32.mrb[0].mxu0
        %v3099 = vadd.f32 0.0, %v3098
        %v3100 = vpop.f32.mrb[0].mxu0
        %v3101 = vpop.f32.mrb[0].mxu0
        %v3102 = vadd.f32 0.0, %v3101
        %v3103 = vpop.f32.mrb[0].mxu0
        %3104 = vmatprep.mubr.bf16.mxu0 0
        %3105 = vmatmul.mubr.bf16.gmra.mrb[0].mxu0 %v2972
        %v3106 = vpop.f32.mrb[0].mxu0
        %v3107 = vadd.f32 0.0, %v3106
        %v3108 = vpop.f32.mrb[0].mxu0
        %v3109 = vpop.f32.mrb[0].mxu0
        %v3110 = vadd.f32 0.0, %v3109
        %v3111 = vpop.f32.mrb[0].mxu0
        %3112 = vmatprep.mubr.bf16.mxu0 0
        %3113 = vmatmul.mubr.bf16.gmra.mrb[0].mxu0 %v2975
        %v3114 = vpop.f32.mrb[0].mxu0
        %v3115 = vadd.f32 0.0, %v3114
        %v3116 = vpop.f32.mrb[0].mxu0
        %v3117 = vpop.f32.mrb[0].mxu0
        %v3118 = vadd.f32 0.0, %v3117
        %v3119 = vpop.f32.mrb[0].mxu0
        %3120 = vmatprep.mubr.bf16.mxu0 0
        %3121 = vmatmul.mubr.bf16.gmra.mrb[0].mxu0 %v2978
        %v3122 = vpop.f32.mrb[0].mxu0
        %v3123 = vadd.f32 0.0, %v3122
        %v3124 = vpop.f32.mrb[0].mxu0
        %v3125 = vpop.f32.mrb[0].mxu0
        %v3126 = vadd.f32 0.0, %v3125
        %v3127 = vpop.f32.mrb[0].mxu0
        %3128 = vmatprep.mubr.bf16.mxu0 0
        %3129 = vmatmul.mubr.bf16.gmra.mrb[0].mxu0 %v2981
        %v3130 = vpop.f32.mrb[0].mxu0
        %v3131 = vadd.f32 0.0, %v3130
        %v3132 = vpop.f32.mrb[0].mxu0
        %v3133 = vpop.f32.mrb[0].mxu0
        %v3134 = vadd.f32 0.0, %v3133
        %v3135 = vpop.f32.mrb[0].mxu0
        %3136 = vmatprep.mubr.bf16.mxu0 0
        %3137 = vmatmul.mubr.bf16.gmra.mrb[0].mxu0 %v2984
        %v3138 = vpop.f32.mrb[0].mxu0
        %v3139 = vadd.f32 0.0, %v3138
        %v3140 = vpop.f32.mrb[0].mxu0
        %v3141 = vpop.f32.mrb[0].mxu0
        %v3142 = vadd.f32 0.0, %v3141
        %v3143 = vpop.f32.mrb[0].mxu0
        %3144 = vmatprep.mubr.bf16.mxu0 0
        %3145 = vmatmul.mubr.bf16.gmra.mrb[0].mxu0 %v2987
        %v3146 = vpop.f32.mrb[0].mxu0
        %v3147 = vadd.f32 0.0, %v3146
        %v3148 = vpop.f32.mrb[0].mxu0
        %v3149 = vpop.f32.mrb[0].mxu0
        %v3150 = vadd.f32 0.0, %v3149
        %v3151 = vpop.f32.mrb[0].mxu0
        %3152 = vdwg.mxu0
        %v3153 = vadd.f32 %v2683, %v3027
        %v3154 = vadd.f32 %v2684, %v3030
        %v3155 = vadd.f32 %v2685, %v3035
        %v3156 = vadd.f32 %v2686, %v3038
        %v3157 = vadd.f32 %v2687, %v3043
        %v3158 = vadd.f32 %v2688, %v3046
        %v3159 = vadd.f32 %v2689, %v3051
        %v3160 = vadd.f32 %v2690, %v3054
        %v3161 = vadd.f32 %v2691, %v3059
        %v3162 = vadd.f32 %v2692, %v3062
        %v3163 = vadd.f32 %v2693, %v3067
        %v3164 = vadd.f32 %v2694, %v3070
        %v3165 = vadd.f32 %v2695, %v3075
        %v3166 = vadd.f32 %v2696, %v3078
        %v3167 = vadd.f32 %v2697, %v3083
        %v3168 = vadd.f32 %v2698, %v3086
        %v3169 = vadd.f32 %v2699, %v3091
        %v3170 = vadd.f32 %v2700, %v3094
        %v3171 = vadd.f32 %v2701, %v3099
        %v3172 = vadd.f32 %v2702, %v3102
        %v3173 = vadd.f32 %v2703, %v3107
        %v3174 = vadd.f32 %v2704, %v3110
        %v3175 = vadd.f32 %v2705, %v3115
        %v3176 = vadd.f32 %v2706, %v3118
        %v3177 = vadd.f32 %v2707, %v3123
        %v3178 = vadd.f32 %v2708, %v3126
        %v3179 = vadd.f32 %v2709, %v3131
        %v3180 = vadd.f32 %v2710, %v3134
        %v3181 = vadd.f32 %v2711, %v3139
        %v3182 = vadd.f32 %v2712, %v3142
        %v3183 = vadd.f32 %v2713, %v3147
        %v3184 = vadd.f32 %v2714, %v3150
        %s3185 = scalar_lea.vmem %s179, 24
        %v3186 = vld [vmem:[%s3185] sm:$0xf]
        %v3187 = vld [vmem:[%s3185 + $0x4] sm:$0xf]
        %v3188 = vld [vmem:[%s3185 + $0xc] sm:$0xf]
        %v3189 = vld [vmem:[%s3185 + $0x10] sm:$0xf]
        %v3190 = vld [vmem:[%s3185 + $0x18] sm:$0xf]
        %v3191 = vld [vmem:[%s3185 + $0x1c] sm:$0xf]
        %v3192 = vld [vmem:[%s3185 + $0x24] sm:$0xf]
        %v3193 = vld [vmem:[%s3185 + $0x28] sm:$0xf]
        %v3194 = vld [vmem:[%s3185 + $0x30] sm:$0xf]
        %v3195 = vld [vmem:[%s3185 + $0x34] sm:$0xf]
        %v3196 = vld [vmem:[%s3185 + $0x3c] sm:$0xf]
        %v3197 = vld [vmem:[%s3185 + $0x40] sm:$0xf]
        %v3198 = vld [vmem:[%s3185 + $0x48] sm:$0xf]
        %v3199 = vld [vmem:[%s3185 + $0x4c] sm:$0xf]
        %v3200 = vld [vmem:[%s3185 + $0x54] sm:$0xf]
        %v3201 = vld [vmem:[%s3185 + $0x58] sm:$0xf]
        %v3202 = vld [vmem:[%s3185 + $0x60] sm:$0xf]
        %v3203 = vld [vmem:[%s3185 + $0x64] sm:$0xf]
        %v3204 = vld [vmem:[%s3185 + $0x6c] sm:$0xf]
        %v3205 = vld [vmem:[%s3185 + $0x70] sm:$0xf]
        %v3206 = vld [vmem:[%s3185 + $0x78] sm:$0xf]
        %v3207 = vld [vmem:[%s3185 + $0x7c] sm:$0xf]
        %v3208 = vld [vmem:[%s3185 + $0x84] sm:$0xf]
        %v3209 = vld [vmem:[%s3185 + $0x88] sm:$0xf]
        %v3210 = vld [vmem:[%s3185 + $0x90] sm:$0xf]
        %v3211 = vld [vmem:[%s3185 + $0x94] sm:$0xf]
        %v3212 = vld [vmem:[%s3185 + $0x9c] sm:$0xf]
        %v3213 = vld [vmem:[%s3185 + $0xa0] sm:$0xf]
        %v3214 = vld [vmem:[%s3185 + $0xa8] sm:$0xf]
        %v3215 = vld [vmem:[%s3185 + $0xac] sm:$0xf]
        %v3216 = vld [vmem:[%s3185 + $0xb4] sm:$0xf]
        %v3217 = vld [vmem:[%s3185 + $0xb8] sm:$0xf]
        %s3218 = scalar_lea.vmem %s1, 24
        %v3219 = vld [vmem:[%s3218] sm:$0xf]
        %v3252 = vunpack.c.l.b16 %v3186
        %v3253 = vunpack.c.l.b16 %v3187
        %v3254 = vunpack.c.l.b16 %v3188
        %v3255 = vunpack.c.l.b16 %v3189
        %v3256 = vunpack.c.l.b16 %v3190
        %v3257 = vunpack.c.l.b16 %v3191
        %v3258 = vunpack.c.l.b16 %v3192
        %v3259 = vunpack.c.l.b16 %v3193
        %v3260 = vunpack.c.l.b16 %v3194
        %v3261 = vunpack.c.l.b16 %v3195
        %v3262 = vunpack.c.l.b16 %v3196
        %v3263 = vunpack.c.l.b16 %v3197
        %v3264 = vunpack.c.l.b16 %v3198
        %v3265 = vunpack.c.l.b16 %v3199
        %v3266 = vunpack.c.l.b16 %v3200
        %v3267 = vunpack.c.l.b16 %v3201
        %v3268 = vunpack.c.l.b16 %v3202
        %v3269 = vunpack.c.l.b16 %v3203
        %v3270 = vunpack.c.l.b16 %v3204
        %v3271 = vunpack.c.l.b16 %v3205
        %v3272 = vunpack.c.l.b16 %v3206
        %v3273 = vunpack.c.l.b16 %v3207
        %v3274 = vunpack.c.l.b16 %v3208
        %v3275 = vunpack.c.l.b16 %v3209
        %v3276 = vunpack.c.l.b16 %v3210
        %v3277 = vunpack.c.l.b16 %v3211
        %v3278 = vunpack.c.l.b16 %v3212
        %v3279 = vunpack.c.l.b16 %v3213
        %v3280 = vunpack.c.l.b16 %v3214
        %v3281 = vunpack.c.l.b16 %v3215
        %v3282 = vunpack.c.l.b16 %v3216
        %v3283 = vunpack.c.l.b16 %v3217
        %v3284 = vpack.c.b16 %v3253, %v3252
        %v3285 = vpack.c.b16 %v3255, %v3254
        %v3286 = vpack.c.b16 %v3257, %v3256
        %v3287 = vpack.c.b16 %v3259, %v3258
        %v3288 = vpack.c.b16 %v3261, %v3260
        %v3289 = vpack.c.b16 %v3263, %v3262
        %v3290 = vpack.c.b16 %v3265, %v3264
        %v3291 = vpack.c.b16 %v3267, %v3266
        %v3292 = vpack.c.b16 %v3269, %v3268
        %v3293 = vpack.c.b16 %v3271, %v3270
        %v3294 = vpack.c.b16 %v3273, %v3272
        %v3295 = vpack.c.b16 %v3275, %v3274
        %v3296 = vpack.c.b16 %v3277, %v3276
        %v3297 = vpack.c.b16 %v3279, %v3278
        %v3298 = vpack.c.b16 %v3281, %v3280
        %v3299 = vpack.c.b16 %v3283, %v3282
        %v3301 = vsel %vm667, %v3284, 0
        %v3304 = vsel %vm667, %v3285, 0
        %v3307 = vsel %vm667, %v3286, 0
        %v3310 = vsel %vm667, %v3287, 0
        %v3313 = vsel %vm667, %v3288, 0
        %v3316 = vsel %vm667, %v3289, 0
        %v3319 = vsel %vm667, %v3290, 0
        %v3322 = vsel %vm667, %v3291, 0
        %v3325 = vsel %vm667, %v3292, 0
        %v3328 = vsel %vm667, %v3293, 0
        %v3331 = vsel %vm667, %v3294, 0
        %v3334 = vsel %vm667, %v3295, 0
        %v3337 = vsel %vm667, %v3296, 0
        %v3340 = vsel %vm667, %v3297, 0
        %v3343 = vsel %vm667, %v3298, 0
        %v3346 = vsel %vm667, %v3299, 0
        %v3349 = vsel %vm716, %v3219, 0
        %3351 = vmatprep.subr.bf16.mxu0 0
        %3352 = vmatpush1.bf16.msra.mxu0 %v3349
        %3353 = vmatprep.subr.bf16.mxu0 0
        %3354 = vmatpush1.bf16.msra.mxu0 0
        %3355 = vmatprep.subr.bf16.mxu0 0
        %3356 = vmatpush1.bf16.msra.mxu0 0
        %3357 = vmatprep.subr.bf16.mxu0 0
        %3358 = vmatpush1.bf16.msra.mxu0 0
        %3359 = vmatprep.subr.bf16.mxu0 0
        %3360 = vmatpush1.bf16.msra.mxu0 0
        %3361 = vmatprep.subr.bf16.mxu0 0
        %3362 = vmatpush1.bf16.msra.mxu0 0
        %3363 = vmatprep.subr.bf16.mxu0 0
        %3364 = vmatpush1.bf16.msra.mxu0 0
        %3365 = vmatprep.subr.bf16.mxu0 0
        %3366 = vmatpush1.bf16.msra.mxu0 0
        %3367 = vmatprep.subr.bf16.mxu0 0
        %3368 = vmatpush1.bf16.msra.mxu0 0
        %3369 = vmatprep.subr.bf16.mxu0 0
        %3370 = vmatpush1.bf16.msra.mxu0 0
        %3371 = vmatprep.subr.bf16.mxu0 0
        %3372 = vmatpush1.bf16.msra.mxu0 0
        %3373 = vmatprep.subr.bf16.mxu0 0
        %3374 = vmatpush1.bf16.msra.mxu0 0
        %3375 = vmatprep.subr.bf16.mxu0 0
        %3376 = vmatpush1.bf16.msra.mxu0 0
        %3377 = vmatprep.subr.bf16.mxu0 0
        %3378 = vmatpush1.bf16.msra.mxu0 0
        %3379 = vmatprep.subr.bf16.mxu0 0
        %3380 = vmatpush1.bf16.msra.mxu0 0
        %3381 = vmatprep.subr.bf16.mxu0 0
        %3382 = vmatpush1.bf16.msra.mxu0 0
        %3383 = vmatprep.mubr.bf16.mxu0 0
        %3384 = vmatmul.mubr.bf16.gmra.mrb[0].mxu0 %v3301
        %v3385 = vpop.f32.mrb[0].mxu0
        %v3386 = vadd.f32 0.0, %v3385
        %v3387 = vpop.f32.mrb[0].mxu0
        %v3388 = vpop.f32.mrb[0].mxu0
        %v3389 = vadd.f32 0.0, %v3388
        %v3390 = vpop.f32.mrb[0].mxu0
        %3391 = vmatprep.mubr.bf16.mxu0 0
        %3392 = vmatmul.mubr.bf16.gmra.mrb[0].mxu0 %v3304
        %v3393 = vpop.f32.mrb[0].mxu0
        %v3394 = vadd.f32 0.0, %v3393
        %v3395 = vpop.f32.mrb[0].mxu0
        %v3396 = vpop.f32.mrb[0].mxu0
        %v3397 = vadd.f32 0.0, %v3396
        %v3398 = vpop.f32.mrb[0].mxu0
        %3399 = vmatprep.mubr.bf16.mxu0 0
        %3400 = vmatmul.mubr.bf16.gmra.mrb[0].mxu0 %v3307
        %v3401 = vpop.f32.mrb[0].mxu0
        %v3402 = vadd.f32 0.0, %v3401
        %v3403 = vpop.f32.mrb[0].mxu0
        %v3404 = vpop.f32.mrb[0].mxu0
        %v3405 = vadd.f32 0.0, %v3404
        %v3406 = vpop.f32.mrb[0].mxu0
        %3407 = vmatprep.mubr.bf16.mxu0 0
        %3408 = vmatmul.mubr.bf16.gmra.mrb[0].mxu0 %v3310
        %v3409 = vpop.f32.mrb[0].mxu0
        %v3410 = vadd.f32 0.0, %v3409
        %v3411 = vpop.f32.mrb[0].mxu0
        %v3412 = vpop.f32.mrb[0].mxu0
        %v3413 = vadd.f32 0.0, %v3412
        %v3414 = vpop.f32.mrb[0].mxu0
        %3415 = vmatprep.mubr.bf16.mxu0 0
        %3416 = vmatmul.mubr.bf16.gmra.mrb[0].mxu0 %v3313
        %v3417 = vpop.f32.mrb[0].mxu0
        %v3418 = vadd.f32 0.0, %v3417
        %v3419 = vpop.f32.mrb[0].mxu0
        %v3420 = vpop.f32.mrb[0].mxu0
        %v3421 = vadd.f32 0.0, %v3420
        %v3422 = vpop.f32.mrb[0].mxu0
        %3423 = vmatprep.mubr.bf16.mxu0 0
        %3424 = vmatmul.mubr.bf16.gmra.mrb[0].mxu0 %v3316
        %v3425 = vpop.f32.mrb[0].mxu0
        %v3426 = vadd.f32 0.0, %v3425
        %v3427 = vpop.f32.mrb[0].mxu0
        %v3428 = vpop.f32.mrb[0].mxu0
        %v3429 = vadd.f32 0.0, %v3428
        %v3430 = vpop.f32.mrb[0].mxu0
        %3431 = vmatprep.mubr.bf16.mxu0 0
        %3432 = vmatmul.mubr.bf16.gmra.mrb[0].mxu0 %v3319
        %v3433 = vpop.f32.mrb[0].mxu0
        %v3434 = vadd.f32 0.0, %v3433
        %v3435 = vpop.f32.mrb[0].mxu0
        %v3436 = vpop.f32.mrb[0].mxu0
        %v3437 = vadd.f32 0.0, %v3436
        %v3438 = vpop.f32.mrb[0].mxu0
        %3439 = vmatprep.mubr.bf16.mxu0 0
        %3440 = vmatmul.mubr.bf16.gmra.mrb[0].mxu0 %v3322
        %v3441 = vpop.f32.mrb[0].mxu0
        %v3442 = vadd.f32 0.0, %v3441
        %v3443 = vpop.f32.mrb[0].mxu0
        %v3444 = vpop.f32.mrb[0].mxu0
        %v3445 = vadd.f32 0.0, %v3444
        %v3446 = vpop.f32.mrb[0].mxu0
        %3447 = vmatprep.mubr.bf16.mxu0 0
        %3448 = vmatmul.mubr.bf16.gmra.mrb[0].mxu0 %v3325
        %v3449 = vpop.f32.mrb[0].mxu0
        %v3450 = vadd.f32 0.0, %v3449
        %v3451 = vpop.f32.mrb[0].mxu0
        %v3452 = vpop.f32.mrb[0].mxu0
        %v3453 = vadd.f32 0.0, %v3452
        %v3454 = vpop.f32.mrb[0].mxu0
        %3455 = vmatprep.mubr.bf16.mxu0 0
        %3456 = vmatmul.mubr.bf16.gmra.mrb[0].mxu0 %v3328
        %v3457 = vpop.f32.mrb[0].mxu0
        %v3458 = vadd.f32 0.0, %v3457
        %v3459 = vpop.f32.mrb[0].mxu0
        %v3460 = vpop.f32.mrb[0].mxu0
        %v3461 = vadd.f32 0.0, %v3460
        %v3462 = vpop.f32.mrb[0].mxu0
        %3463 = vmatprep.mubr.bf16.mxu0 0
        %3464 = vmatmul.mubr.bf16.gmra.mrb[0].mxu0 %v3331
        %v3465 = vpop.f32.mrb[0].mxu0
        %v3466 = vadd.f32 0.0, %v3465
        %v3467 = vpop.f32.mrb[0].mxu0
        %v3468 = vpop.f32.mrb[0].mxu0
        %v3469 = vadd.f32 0.0, %v3468
        %v3470 = vpop.f32.mrb[0].mxu0
        %3471 = vmatprep.mubr.bf16.mxu0 0
        %3472 = vmatmul.mubr.bf16.gmra.mrb[0].mxu0 %v3334
        %v3473 = vpop.f32.mrb[0].mxu0
        %v3474 = vadd.f32 0.0, %v3473
        %v3475 = vpop.f32.mrb[0].mxu0
        %v3476 = vpop.f32.mrb[0].mxu0
        %v3477 = vadd.f32 0.0, %v3476
        %v3478 = vpop.f32.mrb[0].mxu0
        %3479 = vmatprep.mubr.bf16.mxu0 0
        %3480 = vmatmul.mubr.bf16.gmra.mrb[0].mxu0 %v3337
        %v3481 = vpop.f32.mrb[0].mxu0
        %v3482 = vadd.f32 0.0, %v3481
        %v3483 = vpop.f32.mrb[0].mxu0
        %v3484 = vpop.f32.mrb[0].mxu0
        %v3485 = vadd.f32 0.0, %v3484
        %v3486 = vpop.f32.mrb[0].mxu0
        %3487 = vmatprep.mubr.bf16.mxu0 0
        %3488 = vmatmul.mubr.bf16.gmra.mrb[0].mxu0 %v3340
        %v3489 = vpop.f32.mrb[0].mxu0
        %v3490 = vadd.f32 0.0, %v3489
        %v3491 = vpop.f32.mrb[0].mxu0
        %v3492 = vpop.f32.mrb[0].mxu0
        %v3493 = vadd.f32 0.0, %v3492
        %v3494 = vpop.f32.mrb[0].mxu0
        %3495 = vmatprep.mubr.bf16.mxu0 0
        %3496 = vmatmul.mubr.bf16.gmra.mrb[0].mxu0 %v3343
        %v3497 = vpop.f32.mrb[0].mxu0
        %v3498 = vadd.f32 0.0, %v3497
        %v3499 = vpop.f32.mrb[0].mxu0
        %v3500 = vpop.f32.mrb[0].mxu0
        %v3501 = vadd.f32 0.0, %v3500
        %v3502 = vpop.f32.mrb[0].mxu0
        %3503 = vmatprep.mubr.bf16.mxu0 0
        %3504 = vmatmul.mubr.bf16.gmra.mrb[0].mxu0 %v3346
        %v3505 = vpop.f32.mrb[0].mxu0
        %v3506 = vadd.f32 0.0, %v3505
        %v3507 = vpop.f32.mrb[0].mxu0
        %v3508 = vpop.f32.mrb[0].mxu0
        %v3509 = vadd.f32 0.0, %v3508
        %v3510 = vpop.f32.mrb[0].mxu0
        %3511 = vdwg.mxu0
        %v3512 = vadd.f32 %v3153, %v3386
        %v3513 = vadd.f32 %v3154, %v3389
        %v3514 = vadd.f32 %v3155, %v3394
        %v3515 = vadd.f32 %v3156, %v3397
        %v3516 = vadd.f32 %v3157, %v3402
        %v3517 = vadd.f32 %v3158, %v3405
        %v3518 = vadd.f32 %v3159, %v3410
        %v3519 = vadd.f32 %v3160, %v3413
        %v3520 = vadd.f32 %v3161, %v3418
        %v3521 = vadd.f32 %v3162, %v3421
        %v3522 = vadd.f32 %v3163, %v3426
        %v3523 = vadd.f32 %v3164, %v3429
        %v3524 = vadd.f32 %v3165, %v3434
        %v3525 = vadd.f32 %v3166, %v3437
        %v3526 = vadd.f32 %v3167, %v3442
        %v3527 = vadd.f32 %v3168, %v3445
        %v3528 = vadd.f32 %v3169, %v3450
        %v3529 = vadd.f32 %v3170, %v3453
        %v3530 = vadd.f32 %v3171, %v3458
        %v3531 = vadd.f32 %v3172, %v3461
        %v3532 = vadd.f32 %v3173, %v3466
        %v3533 = vadd.f32 %v3174, %v3469
        %v3534 = vadd.f32 %v3175, %v3474
        %v3535 = vadd.f32 %v3176, %v3477
        %v3536 = vadd.f32 %v3177, %v3482
        %v3537 = vadd.f32 %v3178, %v3485
        %v3538 = vadd.f32 %v3179, %v3490
        %v3539 = vadd.f32 %v3180, %v3493
        %v3540 = vadd.f32 %v3181, %v3498
        %v3541 = vadd.f32 %v3182, %v3501
        %v3542 = vadd.f32 %v3183, %v3506
        %v3543 = vadd.f32 %v3184, %v3509
        %v3544 = vld [vmem:[%s3185] sm:$0xf]
        %v3545 = vld [vmem:[%s3185 + $0x4] sm:$0xf]
        %v3546 = vld [vmem:[%s3185 + $0x8] sm:$0x1]
        %v3547 = vld [vmem:[%s3185 + $0xc] sm:$0xf]
        %v3548 = vld [vmem:[%s3185 + $0x10] sm:$0xf]
        %v3549 = vld [vmem:[%s3185 + $0x14] sm:$0x1]
        %v3550 = vld [vmem:[%s3185 + $0x18] sm:$0xf]
        %v3551 = vld [vmem:[%s3185 + $0x1c] sm:$0xf]
        %v3552 = vld [vmem:[%s3185 + $0x20] sm:$0x1]
        %v3553 = vld [vmem:[%s3185 + $0x24] sm:$0xf]
        %v3554 = vld [vmem:[%s3185 + $0x28] sm:$0xf]
        %v3555 = vld [vmem:[%s3185 + $0x2c] sm:$0x1]
        %v3556 = vld [vmem:[%s3185 + $0x30] sm:$0xf]
        %v3557 = vld [vmem:[%s3185 + $0x34] sm:$0xf]
        %v3558 = vld [vmem:[%s3185 + $0x38] sm:$0x1]
        %v3559 = vld [vmem:[%s3185 + $0x3c] sm:$0xf]
        %v3560 = vld [vmem:[%s3185 + $0x40] sm:$0xf]
        %v3561 = vld [vmem:[%s3185 + $0x44] sm:$0x1]
        %v3562 = vld [vmem:[%s3185 + $0x48] sm:$0xf]
        %v3563 = vld [vmem:[%s3185 + $0x4c] sm:$0xf]
        %v3564 = vld [vmem:[%s3185 + $0x50] sm:$0x1]
        %v3565 = vld [vmem:[%s3185 + $0x54] sm:$0xf]
        %v3566 = vld [vmem:[%s3185 + $0x58] sm:$0xf]
        %v3567 = vld [vmem:[%s3185 + $0x5c] sm:$0x1]
        %v3568 = vld [vmem:[%s3185 + $0x60] sm:$0xf]
        %v3569 = vld [vmem:[%s3185 + $0x64] sm:$0xf]
        %v3570 = vld [vmem:[%s3185 + $0x68] sm:$0x1]
        %v3571 = vld [vmem:[%s3185 + $0x6c] sm:$0xf]
        %v3572 = vld [vmem:[%s3185 + $0x70] sm:$0xf]
        %v3573 = vld [vmem:[%s3185 + $0x74] sm:$0x1]
        %v3574 = vld [vmem:[%s3185 + $0x78] sm:$0xf]
        %v3575 = vld [vmem:[%s3185 + $0x7c] sm:$0xf]
        %v3576 = vld [vmem:[%s3185 + $0x80] sm:$0x1]
        %v3577 = vld [vmem:[%s3185 + $0x84] sm:$0xf]
        %v3578 = vld [vmem:[%s3185 + $0x88] sm:$0xf]
        %v3579 = vld [vmem:[%s3185 + $0x8c] sm:$0x1]
        %v3580 = vld [vmem:[%s3185 + $0x90] sm:$0xf]
        %v3581 = vld [vmem:[%s3185 + $0x94] sm:$0xf]
        %v3582 = vld [vmem:[%s3185 + $0x98] sm:$0x1]
        %v3583 = vld [vmem:[%s3185 + $0x9c] sm:$0xf]
        %v3584 = vld [vmem:[%s3185 + $0xa0] sm:$0xf]
        %v3585 = vld [vmem:[%s3185 + $0xa4] sm:$0x1]
        %v3586 = vld [vmem:[%s3185 + $0xa8] sm:$0xf]
        %v3587 = vld [vmem:[%s3185 + $0xac] sm:$0xf]
        %v3588 = vld [vmem:[%s3185 + $0xb0] sm:$0x1]
        %v3589 = vld [vmem:[%s3185 + $0xb4] sm:$0xf]
        %v3590 = vld [vmem:[%s3185 + $0xb8] sm:$0xf]
        %v3591 = vld [vmem:[%s3185 + $0xbc] sm:$0x1]
        %v3593 = vshrl.u32 %v3544, 16
        %v3595 = vrot.slane %v3593, 4
        %v3596 = vshll.u32 %v3544, 16
        %v3598 = vrot.slane %v3596, 5
        %v3599 = vor.u32 %v3595, %v3598
        %v3600 = vrot.slane %v3599, 4
        %v3602 = vshll.u32 %v3545, 16
        %v3604 = vrot.slane %v3602, 5
        %v3605 = vsel %vm232, %v3600, %v3604
        %v3606 = vshrl.u32 %v3545, 16
        %v3608 = vrot.slane %v3606, 4
        %v3609 = vor.u32 %v3608, %v3604
        %v3610 = vrot.slane %v3609, 4
        %v3612 = vshll.u32 %v3546, 16
        %v3614 = vrot.slane %v3612, 5
        %v3615 = vsel %vm232, %v3610, %v3614
        %v3617 = vshrl.u32 %v3547, 16
        %v3619 = vrot.slane %v3617, 4
        %v3620 = vshll.u32 %v3547, 16
        %v3622 = vrot.slane %v3620, 5
        %v3623 = vor.u32 %v3619, %v3622
        %v3624 = vrot.slane %v3623, 4
        %v3626 = vshll.u32 %v3548, 16
        %v3628 = vrot.slane %v3626, 5
        %v3629 = vsel %vm232, %v3624, %v3628
        %v3630 = vshrl.u32 %v3548, 16
        %v3632 = vrot.slane %v3630, 4
        %v3633 = vor.u32 %v3632, %v3628
        %v3634 = vrot.slane %v3633, 4
        %v3636 = vshll.u32 %v3549, 16
        %v3638 = vrot.slane %v3636, 5
        %v3639 = vsel %vm232, %v3634, %v3638
        %v3641 = vshrl.u32 %v3550, 16
        %v3643 = vrot.slane %v3641, 4
        %v3644 = vshll.u32 %v3550, 16
        %v3646 = vrot.slane %v3644, 5
        %v3647 = vor.u32 %v3643, %v3646
        %v3648 = vrot.slane %v3647, 4
        %v3650 = vshll.u32 %v3551, 16
        %v3652 = vrot.slane %v3650, 5
        %v3653 = vsel %vm232, %v3648, %v3652
        %v3654 = vshrl.u32 %v3551, 16
        %v3656 = vrot.slane %v3654, 4
        %v3657 = vor.u32 %v3656, %v3652
        %v3658 = vrot.slane %v3657, 4
        %v3660 = vshll.u32 %v3552, 16
        %v3662 = vrot.slane %v3660, 5
        %v3663 = vsel %vm232, %v3658, %v3662
        %v3665 = vshrl.u32 %v3553, 16
        %v3667 = vrot.slane %v3665, 4
        %v3668 = vshll.u32 %v3553, 16
        %v3670 = vrot.slane %v3668, 5
        %v3671 = vor.u32 %v3667, %v3670
        %v3672 = vrot.slane %v3671, 4
        %v3674 = vshll.u32 %v3554, 16
        %v3676 = vrot.slane %v3674, 5
        %v3677 = vsel %vm232, %v3672, %v3676
        %v3678 = vshrl.u32 %v3554, 16
        %v3680 = vrot.slane %v3678, 4
        %v3681 = vor.u32 %v3680, %v3676
        %v3682 = vrot.slane %v3681, 4
        %v3684 = vshll.u32 %v3555, 16
        %v3686 = vrot.slane %v3684, 5
        %v3687 = vsel %vm232, %v3682, %v3686
        %v3689 = vshrl.u32 %v3556, 16
        %v3691 = vrot.slane %v3689, 4
        %v3692 = vshll.u32 %v3556, 16
        %v3694 = vrot.slane %v3692, 5
        %v3695 = vor.u32 %v3691, %v3694
        %v3696 = vrot.slane %v3695, 4
        %v3698 = vshll.u32 %v3557, 16
        %v3700 = vrot.slane %v3698, 5
        %v3701 = vsel %vm232, %v3696, %v3700
        %v3702 = vshrl.u32 %v3557, 16
        %v3704 = vrot.slane %v3702, 4
        %v3705 = vor.u32 %v3704, %v3700
        %v3706 = vrot.slane %v3705, 4
        %v3708 = vshll.u32 %v3558, 16
        %v3710 = vrot.slane %v3708, 5
        %v3711 = vsel %vm232, %v3706, %v3710
        %v3713 = vshrl.u32 %v3559, 16
        %v3715 = vrot.slane %v3713, 4
        %v3716 = vshll.u32 %v3559, 16
        %v3718 = vrot.slane %v3716, 5
        %v3719 = vor.u32 %v3715, %v3718
        %v3720 = vrot.slane %v3719, 4
        %v3722 = vshll.u32 %v3560, 16
        %v3724 = vrot.slane %v3722, 5
        %v3725 = vsel %vm232, %v3720, %v3724
        %v3726 = vshrl.u32 %v3560, 16
        %v3728 = vrot.slane %v3726, 4
        %v3729 = vor.u32 %v3728, %v3724
        %v3730 = vrot.slane %v3729, 4
        %v3732 = vshll.u32 %v3561, 16
        %v3734 = vrot.slane %v3732, 5
        %v3735 = vsel %vm232, %v3730, %v3734
        %v3737 = vshrl.u32 %v3562, 16
        %v3739 = vrot.slane %v3737, 4
        %v3740 = vshll.u32 %v3562, 16
        %v3742 = vrot.slane %v3740, 5
        %v3743 = vor.u32 %v3739, %v3742
        %v3744 = vrot.slane %v3743, 4
        %v3746 = vshll.u32 %v3563, 16
        %v3748 = vrot.slane %v3746, 5
        %v3749 = vsel %vm232, %v3744, %v3748
        %v3750 = vshrl.u32 %v3563, 16
        %v3752 = vrot.slane %v3750, 4
        %v3753 = vor.u32 %v3752, %v3748
        %v3754 = vrot.slane %v3753, 4
        %v3756 = vshll.u32 %v3564, 16
        %v3758 = vrot.slane %v3756, 5
        %v3759 = vsel %vm232, %v3754, %v3758
        %v3761 = vshrl.u32 %v3565, 16
        %v3763 = vrot.slane %v3761, 4
        %v3764 = vshll.u32 %v3565, 16
        %v3766 = vrot.slane %v3764, 5
        %v3767 = vor.u32 %v3763, %v3766
        %v3768 = vrot.slane %v3767, 4
        %v3770 = vshll.u32 %v3566, 16
        %v3772 = vrot.slane %v3770, 5
        %v3773 = vsel %vm232, %v3768, %v3772
        %v3774 = vshrl.u32 %v3566, 16
        %v3776 = vrot.slane %v3774, 4
        %v3777 = vor.u32 %v3776, %v3772
        %v3778 = vrot.slane %v3777, 4
        %v3780 = vshll.u32 %v3567, 16
        %v3782 = vrot.slane %v3780, 5
        %v3783 = vsel %vm232, %v3778, %v3782
        %v3785 = vshrl.u32 %v3568, 16
        %v3787 = vrot.slane %v3785, 4
        %v3788 = vshll.u32 %v3568, 16
        %v3790 = vrot.slane %v3788, 5
        %v3791 = vor.u32 %v3787, %v3790
        %v3792 = vrot.slane %v3791, 4
        %v3794 = vshll.u32 %v3569, 16
        %v3796 = vrot.slane %v3794, 5
        %v3797 = vsel %vm232, %v3792, %v3796
        %v3798 = vshrl.u32 %v3569, 16
        %v3800 = vrot.slane %v3798, 4
        %v3801 = vor.u32 %v3800, %v3796
        %v3802 = vrot.slane %v3801, 4
        %v3804 = vshll.u32 %v3570, 16
        %v3806 = vrot.slane %v3804, 5
        %v3807 = vsel %vm232, %v3802, %v3806
        %v3809 = vshrl.u32 %v3571, 16
        %v3811 = vrot.slane %v3809, 4
        %v3812 = vshll.u32 %v3571, 16
        %v3814 = vrot.slane %v3812, 5
        %v3815 = vor.u32 %v3811, %v3814
        %v3816 = vrot.slane %v3815, 4
        %v3818 = vshll.u32 %v3572, 16
        %v3820 = vrot.slane %v3818, 5
        %v3821 = vsel %vm232, %v3816, %v3820
        %v3822 = vshrl.u32 %v3572, 16
        %v3824 = vrot.slane %v3822, 4
        %v3825 = vor.u32 %v3824, %v3820
        %v3826 = vrot.slane %v3825, 4
        %v3828 = vshll.u32 %v3573, 16
        %v3830 = vrot.slane %v3828, 5
        %v3831 = vsel %vm232, %v3826, %v3830
        %v3833 = vshrl.u32 %v3574, 16
        %v3835 = vrot.slane %v3833, 4
        %v3836 = vshll.u32 %v3574, 16
        %v3838 = vrot.slane %v3836, 5
        %v3839 = vor.u32 %v3835, %v3838
        %v3840 = vrot.slane %v3839, 4
        %v3842 = vshll.u32 %v3575, 16
        %v3844 = vrot.slane %v3842, 5
        %v3845 = vsel %vm232, %v3840, %v3844
        %v3846 = vshrl.u32 %v3575, 16
        %v3848 = vrot.slane %v3846, 4
        %v3849 = vor.u32 %v3848, %v3844
        %v3850 = vrot.slane %v3849, 4
        %v3852 = vshll.u32 %v3576, 16
        %v3854 = vrot.slane %v3852, 5
        %v3855 = vsel %vm232, %v3850, %v3854
        %v3857 = vshrl.u32 %v3577, 16
        %v3859 = vrot.slane %v3857, 4
        %v3860 = vshll.u32 %v3577, 16
        %v3862 = vrot.slane %v3860, 5
        %v3863 = vor.u32 %v3859, %v3862
        %v3864 = vrot.slane %v3863, 4
        %v3866 = vshll.u32 %v3578, 16
        %v3868 = vrot.slane %v3866, 5
        %v3869 = vsel %vm232, %v3864, %v3868
        %v3870 = vshrl.u32 %v3578, 16
        %v3872 = vrot.slane %v3870, 4
        %v3873 = vor.u32 %v3872, %v3868
        %v3874 = vrot.slane %v3873, 4
        %v3876 = vshll.u32 %v3579, 16
        %v3878 = vrot.slane %v3876, 5
        %v3879 = vsel %vm232, %v3874, %v3878
        %v3881 = vshrl.u32 %v3580, 16
        %v3883 = vrot.slane %v3881, 4
        %v3884 = vshll.u32 %v3580, 16
        %v3886 = vrot.slane %v3884, 5
        %v3887 = vor.u32 %v3883, %v3886
        %v3888 = vrot.slane %v3887, 4
        %v3890 = vshll.u32 %v3581, 16
        %v3892 = vrot.slane %v3890, 5
        %v3893 = vsel %vm232, %v3888, %v3892
        %v3894 = vshrl.u32 %v3581, 16
        %v3896 = vrot.slane %v3894, 4
        %v3897 = vor.u32 %v3896, %v3892
        %v3898 = vrot.slane %v3897, 4
        %v3900 = vshll.u32 %v3582, 16
        %v3902 = vrot.slane %v3900, 5
        %v3903 = vsel %vm232, %v3898, %v3902
        %v3905 = vshrl.u32 %v3583, 16
        %v3907 = vrot.slane %v3905, 4
        %v3908 = vshll.u32 %v3583, 16
        %v3910 = vrot.slane %v3908, 5
        %v3911 = vor.u32 %v3907, %v3910
        %v3912 = vrot.slane %v3911, 4
        %v3914 = vshll.u32 %v3584, 16
        %v3916 = vrot.slane %v3914, 5
        %v3917 = vsel %vm232, %v3912, %v3916
        %v3918 = vshrl.u32 %v3584, 16
        %v3920 = vrot.slane %v3918, 4
        %v3921 = vor.u32 %v3920, %v3916
        %v3922 = vrot.slane %v3921, 4
        %v3924 = vshll.u32 %v3585, 16
        %v3926 = vrot.slane %v3924, 5
        %v3927 = vsel %vm232, %v3922, %v3926
        %v3929 = vshrl.u32 %v3586, 16
        %v3931 = vrot.slane %v3929, 4
        %v3932 = vshll.u32 %v3586, 16
        %v3934 = vrot.slane %v3932, 5
        %v3935 = vor.u32 %v3931, %v3934
        %v3936 = vrot.slane %v3935, 4
        %v3938 = vshll.u32 %v3587, 16
        %v3940 = vrot.slane %v3938, 5
        %v3941 = vsel %vm232, %v3936, %v3940
        %v3942 = vshrl.u32 %v3587, 16
        %v3944 = vrot.slane %v3942, 4
        %v3945 = vor.u32 %v3944, %v3940
        %v3946 = vrot.slane %v3945, 4
        %v3948 = vshll.u32 %v3588, 16
        %v3950 = vrot.slane %v3948, 5
        %v3951 = vsel %vm232, %v3946, %v3950
        %v3953 = vshrl.u32 %v3589, 16
        %v3955 = vrot.slane %v3953, 4
        %v3956 = vshll.u32 %v3589, 16
        %v3958 = vrot.slane %v3956, 5
        %v3959 = vor.u32 %v3955, %v3958
        %v3960 = vrot.slane %v3959, 4
        %v3962 = vshll.u32 %v3590, 16
        %v3964 = vrot.slane %v3962, 5
        %v3965 = vsel %vm232, %v3960, %v3964
        %v3966 = vshrl.u32 %v3590, 16
        %v3968 = vrot.slane %v3966, 4
        %v3969 = vor.u32 %v3968, %v3964
        %v3970 = vrot.slane %v3969, 4
        %v3972 = vshll.u32 %v3591, 16
        %v3974 = vrot.slane %v3972, 5
        %v3975 = vsel %vm232, %v3970, %v3974
        %s3976 = scalar_lea.vmem %s1, 28
        %v3977 = vld [vmem:[%s3976] sm:$0xf]
        %v3978 = vunpack.c.l.b16 %v3605
        %v3979 = vunpack.c.l.b16 %v3615
        %v3980 = vunpack.c.l.b16 %v3629
        %v3981 = vunpack.c.l.b16 %v3639
        %v3982 = vunpack.c.l.b16 %v3653
        %v3983 = vunpack.c.l.b16 %v3663
        %v3984 = vunpack.c.l.b16 %v3677
        %v3985 = vunpack.c.l.b16 %v3687
        %v3986 = vunpack.c.l.b16 %v3701
        %v3987 = vunpack.c.l.b16 %v3711
        %v3988 = vunpack.c.l.b16 %v3725
        %v3989 = vunpack.c.l.b16 %v3735
        %v3990 = vunpack.c.l.b16 %v3749
        %v3991 = vunpack.c.l.b16 %v3759
        %v3992 = vunpack.c.l.b16 %v3773
        %v3993 = vunpack.c.l.b16 %v3783
        %v3994 = vunpack.c.l.b16 %v3797
        %v3995 = vunpack.c.l.b16 %v3807
        %v3996 = vunpack.c.l.b16 %v3821
        %v3997 = vunpack.c.l.b16 %v3831
        %v3998 = vunpack.c.l.b16 %v3845
        %v3999 = vunpack.c.l.b16 %v3855
        %v4000 = vunpack.c.l.b16 %v3869
        %v4001 = vunpack.c.l.b16 %v3879
        %v4002 = vunpack.c.l.b16 %v3893
        %v4003 = vunpack.c.l.b16 %v3903
        %v4004 = vunpack.c.l.b16 %v3917
        %v4005 = vunpack.c.l.b16 %v3927
        %v4006 = vunpack.c.l.b16 %v3941
        %v4007 = vunpack.c.l.b16 %v3951
        %v4008 = vunpack.c.l.b16 %v3965
        %v4009 = vunpack.c.l.b16 %v3975
        %v4010 = vpack.c.b16 %v3979, %v3978
        %v4011 = vpack.c.b16 %v3981, %v3980
        %v4012 = vpack.c.b16 %v3983, %v3982
        %v4013 = vpack.c.b16 %v3985, %v3984
        %v4014 = vpack.c.b16 %v3987, %v3986
        %v4015 = vpack.c.b16 %v3989, %v3988
        %v4016 = vpack.c.b16 %v3991, %v3990
        %v4017 = vpack.c.b16 %v3993, %v3992
        %v4018 = vpack.c.b16 %v3995, %v3994
        %v4019 = vpack.c.b16 %v3997, %v3996
        %v4020 = vpack.c.b16 %v3999, %v3998
        %v4021 = vpack.c.b16 %v4001, %v4000
        %v4022 = vpack.c.b16 %v4003, %v4002
        %v4023 = vpack.c.b16 %v4005, %v4004
        %v4024 = vpack.c.b16 %v4007, %v4006
        %v4025 = vpack.c.b16 %v4009, %v4008
        %v4027 = vsel %vm667, %v4010, 0
        %v4030 = vsel %vm667, %v4011, 0
        %v4033 = vsel %vm667, %v4012, 0
        %v4036 = vsel %vm667, %v4013, 0
        %v4039 = vsel %vm667, %v4014, 0
        %v4042 = vsel %vm667, %v4015, 0
        %v4045 = vsel %vm667, %v4016, 0
        %v4048 = vsel %vm667, %v4017, 0
        %v4051 = vsel %vm667, %v4018, 0
        %v4054 = vsel %vm667, %v4019, 0
        %v4057 = vsel %vm667, %v4020, 0
        %v4060 = vsel %vm667, %v4021, 0
        %v4063 = vsel %vm667, %v4022, 0
        %v4066 = vsel %vm667, %v4023, 0
        %v4069 = vsel %vm667, %v4024, 0
        %v4072 = vsel %vm667, %v4025, 0
        %v4075 = vsel %vm716, %v3977, 0
        %4077 = vmatprep.subr.bf16.mxu0 0
        %4078 = vmatpush1.bf16.msra.mxu0 %v4075
        %4079 = vmatprep.subr.bf16.mxu0 0
        %4080 = vmatpush1.bf16.msra.mxu0 0
        %4081 = vmatprep.subr.bf16.mxu0 0
        %4082 = vmatpush1.bf16.msra.mxu0 0
        %4083 = vmatprep.subr.bf16.mxu0 0
        %4084 = vmatpush1.bf16.msra.mxu0 0
        %4085 = vmatprep.subr.bf16.mxu0 0
        %4086 = vmatpush1.bf16.msra.mxu0 0
        %4087 = vmatprep.subr.bf16.mxu0 0
        %4088 = vmatpush1.bf16.msra.mxu0 0
        %4089 = vmatprep.subr.bf16.mxu0 0
        %4090 = vmatpush1.bf16.msra.mxu0 0
        %4091 = vmatprep.subr.bf16.mxu0 0
        %4092 = vmatpush1.bf16.msra.mxu0 0
        %4093 = vmatprep.subr.bf16.mxu0 0
        %4094 = vmatpush1.bf16.msra.mxu0 0
        %4095 = vmatprep.subr.bf16.mxu0 0
        %4096 = vmatpush1.bf16.msra.mxu0 0
        %4097 = vmatprep.subr.bf16.mxu0 0
        %4098 = vmatpush1.bf16.msra.mxu0 0
        %4099 = vmatprep.subr.bf16.mxu0 0
        %4100 = vmatpush1.bf16.msra.mxu0 0
        %4101 = vmatprep.subr.bf16.mxu0 0
        %4102 = vmatpush1.bf16.msra.mxu0 0
        %4103 = vmatprep.subr.bf16.mxu0 0
        %4104 = vmatpush1.bf16.msra.mxu0 0
        %4105 = vmatprep.subr.bf16.mxu0 0
        %4106 = vmatpush1.bf16.msra.mxu0 0
        %4107 = vmatprep.subr.bf16.mxu0 0
        %4108 = vmatpush1.bf16.msra.mxu0 0
        %4109 = vmatprep.mubr.bf16.mxu0 0
        %4110 = vmatmul.mubr.bf16.gmra.mrb[0].mxu0 %v4027
        %v4111 = vpop.f32.mrb[0].mxu0
        %v4112 = vadd.f32 0.0, %v4111
        %v4113 = vpop.f32.mrb[0].mxu0
        %v4114 = vpop.f32.mrb[0].mxu0
        %v4115 = vadd.f32 0.0, %v4114
        %v4116 = vpop.f32.mrb[0].mxu0
        %4117 = vmatprep.mubr.bf16.mxu0 0
        %4118 = vmatmul.mubr.bf16.gmra.mrb[0].mxu0 %v4030
        %v4119 = vpop.f32.mrb[0].mxu0
        %v4120 = vadd.f32 0.0, %v4119
        %v4121 = vpop.f32.mrb[0].mxu0
        %v4122 = vpop.f32.mrb[0].mxu0
        %v4123 = vadd.f32 0.0, %v4122
        %v4124 = vpop.f32.mrb[0].mxu0
        %4125 = vmatprep.mubr.bf16.mxu0 0
        %4126 = vmatmul.mubr.bf16.gmra.mrb[0].mxu0 %v4033
        %v4127 = vpop.f32.mrb[0].mxu0
        %v4128 = vadd.f32 0.0, %v4127
        %v4129 = vpop.f32.mrb[0].mxu0
        %v4130 = vpop.f32.mrb[0].mxu0
        %v4131 = vadd.f32 0.0, %v4130
        %v4132 = vpop.f32.mrb[0].mxu0
        %4133 = vmatprep.mubr.bf16.mxu0 0
        %4134 = vmatmul.mubr.bf16.gmra.mrb[0].mxu0 %v4036
        %v4135 = vpop.f32.mrb[0].mxu0
        %v4136 = vadd.f32 0.0, %v4135
        %v4137 = vpop.f32.mrb[0].mxu0
        %v4138 = vpop.f32.mrb[0].mxu0
        %v4139 = vadd.f32 0.0, %v4138
        %v4140 = vpop.f32.mrb[0].mxu0
        %4141 = vmatprep.mubr.bf16.mxu0 0
        %4142 = vmatmul.mubr.bf16.gmra.mrb[0].mxu0 %v4039
        %v4143 = vpop.f32.mrb[0].mxu0
        %v4144 = vadd.f32 0.0, %v4143
        %v4145 = vpop.f32.mrb[0].mxu0
        %v4146 = vpop.f32.mrb[0].mxu0
        %v4147 = vadd.f32 0.0, %v4146
        %v4148 = vpop.f32.mrb[0].mxu0
        %4149 = vmatprep.mubr.bf16.mxu0 0
        %4150 = vmatmul.mubr.bf16.gmra.mrb[0].mxu0 %v4042
        %v4151 = vpop.f32.mrb[0].mxu0
        %v4152 = vadd.f32 0.0, %v4151
        %v4153 = vpop.f32.mrb[0].mxu0
        %v4154 = vpop.f32.mrb[0].mxu0
        %v4155 = vadd.f32 0.0, %v4154
        %v4156 = vpop.f32.mrb[0].mxu0
        %4157 = vmatprep.mubr.bf16.mxu0 0
        %4158 = vmatmul.mubr.bf16.gmra.mrb[0].mxu0 %v4045
        %v4159 = vpop.f32.mrb[0].mxu0
        %v4160 = vadd.f32 0.0, %v4159
        %v4161 = vpop.f32.mrb[0].mxu0
        %v4162 = vpop.f32.mrb[0].mxu0
        %v4163 = vadd.f32 0.0, %v4162
        %v4164 = vpop.f32.mrb[0].mxu0
        %4165 = vmatprep.mubr.bf16.mxu0 0
        %4166 = vmatmul.mubr.bf16.gmra.mrb[0].mxu0 %v4048
        %v4167 = vpop.f32.mrb[0].mxu0
        %v4168 = vadd.f32 0.0, %v4167
        %v4169 = vpop.f32.mrb[0].mxu0
        %v4170 = vpop.f32.mrb[0].mxu0
        %v4171 = vadd.f32 0.0, %v4170
        %v4172 = vpop.f32.mrb[0].mxu0
        %4173 = vmatprep.mubr.bf16.mxu0 0
        %4174 = vmatmul.mubr.bf16.gmra.mrb[0].mxu0 %v4051
        %v4175 = vpop.f32.mrb[0].mxu0
        %v4176 = vadd.f32 0.0, %v4175
        %v4177 = vpop.f32.mrb[0].mxu0
        %v4178 = vpop.f32.mrb[0].mxu0
        %v4179 = vadd.f32 0.0, %v4178
        %v4180 = vpop.f32.mrb[0].mxu0
        %4181 = vmatprep.mubr.bf16.mxu0 0
        %4182 = vmatmul.mubr.bf16.gmra.mrb[0].mxu0 %v4054
        %v4183 = vpop.f32.mrb[0].mxu0
        %v4184 = vadd.f32 0.0, %v4183
        %v4185 = vpop.f32.mrb[0].mxu0
        %v4186 = vpop.f32.mrb[0].mxu0
        %v4187 = vadd.f32 0.0, %v4186
        %v4188 = vpop.f32.mrb[0].mxu0
        %4189 = vmatprep.mubr.bf16.mxu0 0
        %4190 = vmatmul.mubr.bf16.gmra.mrb[0].mxu0 %v4057
        %v4191 = vpop.f32.mrb[0].mxu0
        %v4192 = vadd.f32 0.0, %v4191
        %v4193 = vpop.f32.mrb[0].mxu0
        %v4194 = vpop.f32.mrb[0].mxu0
        %v4195 = vadd.f32 0.0, %v4194
        %v4196 = vpop.f32.mrb[0].mxu0
        %4197 = vmatprep.mubr.bf16.mxu0 0
        %4198 = vmatmul.mubr.bf16.gmra.mrb[0].mxu0 %v4060
        %v4199 = vpop.f32.mrb[0].mxu0
        %v4200 = vadd.f32 0.0, %v4199
        %v4201 = vpop.f32.mrb[0].mxu0
        %v4202 = vpop.f32.mrb[0].mxu0
        %v4203 = vadd.f32 0.0, %v4202
        %v4204 = vpop.f32.mrb[0].mxu0
        %4205 = vmatprep.mubr.bf16.mxu0 0
        %4206 = vmatmul.mubr.bf16.gmra.mrb[0].mxu0 %v4063
        %v4207 = vpop.f32.mrb[0].mxu0
        %v4208 = vadd.f32 0.0, %v4207
        %v4209 = vpop.f32.mrb[0].mxu0
        %v4210 = vpop.f32.mrb[0].mxu0
        %v4211 = vadd.f32 0.0, %v4210
        %v4212 = vpop.f32.mrb[0].mxu0
        %4213 = vmatprep.mubr.bf16.mxu0 0
        %4214 = vmatmul.mubr.bf16.gmra.mrb[0].mxu0 %v4066
        %v4215 = vpop.f32.mrb[0].mxu0
        %v4216 = vadd.f32 0.0, %v4215
        %v4217 = vpop.f32.mrb[0].mxu0
        %v4218 = vpop.f32.mrb[0].mxu0
        %v4219 = vadd.f32 0.0, %v4218
        %v4220 = vpop.f32.mrb[0].mxu0
        %4221 = vmatprep.mubr.bf16.mxu0 0
        %4222 = vmatmul.mubr.bf16.gmra.mrb[0].mxu0 %v4069
        %v4223 = vpop.f32.mrb[0].mxu0
        %v4224 = vadd.f32 0.0, %v4223
        %v4225 = vpop.f32.mrb[0].mxu0
        %v4226 = vpop.f32.mrb[0].mxu0
        %v4227 = vadd.f32 0.0, %v4226
        %v4228 = vpop.f32.mrb[0].mxu0
        %4229 = vmatprep.mubr.bf16.mxu0 0
        %4230 = vmatmul.mubr.bf16.gmra.mrb[0].mxu0 %v4072
        %v4231 = vpop.f32.mrb[0].mxu0
        %v4232 = vadd.f32 0.0, %v4231
        %v4233 = vpop.f32.mrb[0].mxu0
        %v4234 = vpop.f32.mrb[0].mxu0
        %v4235 = vadd.f32 0.0, %v4234
        %v4236 = vpop.f32.mrb[0].mxu0
        %4237 = vdwg.mxu0
        %v4238 = vadd.f32 %v3512, %v4112
        %v4239 = vadd.f32 %v3513, %v4115
        %v4240 = vadd.f32 %v3514, %v4120
        %v4241 = vadd.f32 %v3515, %v4123
        %v4242 = vadd.f32 %v3516, %v4128
        %v4243 = vadd.f32 %v3517, %v4131
        %v4244 = vadd.f32 %v3518, %v4136
        %v4245 = vadd.f32 %v3519, %v4139
        %v4246 = vadd.f32 %v3520, %v4144
        %v4247 = vadd.f32 %v3521, %v4147
        %v4248 = vadd.f32 %v3522, %v4152
        %v4249 = vadd.f32 %v3523, %v4155
        %v4250 = vadd.f32 %v3524, %v4160
        %v4251 = vadd.f32 %v3525, %v4163
        %v4252 = vadd.f32 %v3526, %v4168
        %v4253 = vadd.f32 %v3527, %v4171
        %v4254 = vadd.f32 %v3528, %v4176
        %v4255 = vadd.f32 %v3529, %v4179
        %v4256 = vadd.f32 %v3530, %v4184
        %v4257 = vadd.f32 %v3531, %v4187
        %v4258 = vadd.f32 %v3532, %v4192
        %v4259 = vadd.f32 %v3533, %v4195
        %v4260 = vadd.f32 %v3534, %v4200
        %v4261 = vadd.f32 %v3535, %v4203
        %v4262 = vadd.f32 %v3536, %v4208
        %v4263 = vadd.f32 %v3537, %v4211
        %v4264 = vadd.f32 %v3538, %v4216
        %v4265 = vadd.f32 %v3539, %v4219
        %v4266 = vadd.f32 %v3540, %v4224
        %v4267 = vadd.f32 %v3541, %v4227
        %v4268 = vadd.f32 %v3542, %v4232
        %v4269 = vadd.f32 %v3543, %v4235
        %v4270 = vld [vmem:[%s3185] sm:$0xe]
        %v4271 = vld [vmem:[%s3185 + $0xc] sm:$0xe]
        %v4272 = vld [vmem:[%s3185 + $0x18] sm:$0xe]
        %v4273 = vld [vmem:[%s3185 + $0x24] sm:$0xe]
        %v4274 = vld [vmem:[%s3185 + $0x30] sm:$0xe]
        %v4275 = vld [vmem:[%s3185 + $0x3c] sm:$0xe]
        %v4276 = vld [vmem:[%s3185 + $0x48] sm:$0xe]
        %v4277 = vld [vmem:[%s3185 + $0x54] sm:$0xe]
        %v4278 = vld [vmem:[%s3185 + $0x60] sm:$0xe]
        %v4279 = vld [vmem:[%s3185 + $0x6c] sm:$0xe]
        %v4280 = vld [vmem:[%s3185 + $0x78] sm:$0xe]
        %v4281 = vld [vmem:[%s3185 + $0x84] sm:$0xe]
        %v4282 = vld [vmem:[%s3185 + $0x90] sm:$0xe]
        %v4283 = vld [vmem:[%s3185 + $0x9c] sm:$0xe]
        %v4284 = vld [vmem:[%s3185 + $0xa8] sm:$0xe]
        %v4285 = vld [vmem:[%s3185 + $0xb4] sm:$0xe]
        %v4334 = vrot.slane %v4270, 5
        %v4335 = vrot.slane %v4334, 4
        %v4336 = vrot.slane %v3545, 5
        %v4337 = vsel %vm1223, %v4335, %v4336
        %v4338 = vrot.slane %v4336, 4
        %v4339 = vrot.slane %v3546, 5
        %v4340 = vsel %vm1223, %v4338, %v4339
        %v4341 = vrot.slane %v4271, 5
        %v4342 = vrot.slane %v4341, 4
        %v4343 = vrot.slane %v3548, 5
        %v4344 = vsel %vm1223, %v4342, %v4343
        %v4345 = vrot.slane %v4343, 4
        %v4346 = vrot.slane %v3549, 5
        %v4347 = vsel %vm1223, %v4345, %v4346
        %v4348 = vrot.slane %v4272, 5
        %v4349 = vrot.slane %v4348, 4
        %v4350 = vrot.slane %v3551, 5
        %v4351 = vsel %vm1223, %v4349, %v4350
        %v4352 = vrot.slane %v4350, 4
        %v4353 = vrot.slane %v3552, 5
        %v4354 = vsel %vm1223, %v4352, %v4353
        %v4355 = vrot.slane %v4273, 5
        %v4356 = vrot.slane %v4355, 4
        %v4357 = vrot.slane %v3554, 5
        %v4358 = vsel %vm1223, %v4356, %v4357
        %v4359 = vrot.slane %v4357, 4
        %v4360 = vrot.slane %v3555, 5
        %v4361 = vsel %vm1223, %v4359, %v4360
        %v4362 = vrot.slane %v4274, 5
        %v4363 = vrot.slane %v4362, 4
        %v4364 = vrot.slane %v3557, 5
        %v4365 = vsel %vm1223, %v4363, %v4364
        %v4366 = vrot.slane %v4364, 4
        %v4367 = vrot.slane %v3558, 5
        %v4368 = vsel %vm1223, %v4366, %v4367
        %v4369 = vrot.slane %v4275, 5
        %v4370 = vrot.slane %v4369, 4
        %v4371 = vrot.slane %v3560, 5
        %v4372 = vsel %vm1223, %v4370, %v4371
        %v4373 = vrot.slane %v4371, 4
        %v4374 = vrot.slane %v3561, 5
        %v4375 = vsel %vm1223, %v4373, %v4374
        %v4376 = vrot.slane %v4276, 5
        %v4377 = vrot.slane %v4376, 4
        %v4378 = vrot.slane %v3563, 5
        %v4379 = vsel %vm1223, %v4377, %v4378
        %v4380 = vrot.slane %v4378, 4
        %v4381 = vrot.slane %v3564, 5
        %v4382 = vsel %vm1223, %v4380, %v4381
        %v4383 = vrot.slane %v4277, 5
        %v4384 = vrot.slane %v4383, 4
        %v4385 = vrot.slane %v3566, 5
        %v4386 = vsel %vm1223, %v4384, %v4385
        %v4387 = vrot.slane %v4385, 4
        %v4388 = vrot.slane %v3567, 5
        %v4389 = vsel %vm1223, %v4387, %v4388
        %v4390 = vrot.slane %v4278, 5
        %v4391 = vrot.slane %v4390, 4
        %v4392 = vrot.slane %v3569, 5
        %v4393 = vsel %vm1223, %v4391, %v4392
        %v4394 = vrot.slane %v4392, 4
        %v4395 = vrot.slane %v3570, 5
        %v4396 = vsel %vm1223, %v4394, %v4395
        %v4397 = vrot.slane %v4279, 5
        %v4398 = vrot.slane %v4397, 4
        %v4399 = vrot.slane %v3572, 5
        %v4400 = vsel %vm1223, %v4398, %v4399
        %v4401 = vrot.slane %v4399, 4
        %v4402 = vrot.slane %v3573, 5
        %v4403 = vsel %vm1223, %v4401, %v4402
        %v4404 = vrot.slane %v4280, 5
        %v4405 = vrot.slane %v4404, 4
        %v4406 = vrot.slane %v3575, 5
        %v4407 = vsel %vm1223, %v4405, %v4406
        %v4408 = vrot.slane %v4406, 4
        %v4409 = vrot.slane %v3576, 5
        %v4410 = vsel %vm1223, %v4408, %v4409
        %v4411 = vrot.slane %v4281, 5
        %v4412 = vrot.slane %v4411, 4
        %v4413 = vrot.slane %v3578, 5
        %v4414 = vsel %vm1223, %v4412, %v4413
        %v4415 = vrot.slane %v4413, 4
        %v4416 = vrot.slane %v3579, 5
        %v4417 = vsel %vm1223, %v4415, %v4416
        %v4418 = vrot.slane %v4282, 5
        %v4419 = vrot.slane %v4418, 4
        %v4420 = vrot.slane %v3581, 5
        %v4421 = vsel %vm1223, %v4419, %v4420
        %v4422 = vrot.slane %v4420, 4
        %v4423 = vrot.slane %v3582, 5
        %v4424 = vsel %vm1223, %v4422, %v4423
        %v4425 = vrot.slane %v4283, 5
        %v4426 = vrot.slane %v4425, 4
        %v4427 = vrot.slane %v3584, 5
        %v4428 = vsel %vm1223, %v4426, %v4427
        %v4429 = vrot.slane %v4427, 4
        %v4430 = vrot.slane %v3585, 5
        %v4431 = vsel %vm1223, %v4429, %v4430
        %v4432 = vrot.slane %v4284, 5
        %v4433 = vrot.slane %v4432, 4
        %v4434 = vrot.slane %v3587, 5
        %v4435 = vsel %vm1223, %v4433, %v4434
        %v4436 = vrot.slane %v4434, 4
        %v4437 = vrot.slane %v3588, 5
        %v4438 = vsel %vm1223, %v4436, %v4437
        %v4439 = vrot.slane %v4285, 5
        %v4440 = vrot.slane %v4439, 4
        %v4441 = vrot.slane %v3590, 5
        %v4442 = vsel %vm1223, %v4440, %v4441
        %v4443 = vrot.slane %v4441, 4
        %v4444 = vrot.slane %v3591, 5
        %v4445 = vsel %vm1223, %v4443, %v4444
        %s4446 = scalar_lea.vmem %s1, 32
        %v4447 = vld [vmem:[%s4446] sm:$0xf]
        %v4448 = vunpack.c.l.b16 %v4337
        %v4449 = vunpack.c.l.b16 %v4340
        %v4450 = vunpack.c.l.b16 %v4344
        %v4451 = vunpack.c.l.b16 %v4347
        %v4452 = vunpack.c.l.b16 %v4351
        %v4453 = vunpack.c.l.b16 %v4354
        %v4454 = vunpack.c.l.b16 %v4358
        %v4455 = vunpack.c.l.b16 %v4361
        %v4456 = vunpack.c.l.b16 %v4365
        %v4457 = vunpack.c.l.b16 %v4368
        %v4458 = vunpack.c.l.b16 %v4372
        %v4459 = vunpack.c.l.b16 %v4375
        %v4460 = vunpack.c.l.b16 %v4379
        %v4461 = vunpack.c.l.b16 %v4382
        %v4462 = vunpack.c.l.b16 %v4386
        %v4463 = vunpack.c.l.b16 %v4389
        %v4464 = vunpack.c.l.b16 %v4393
        %v4465 = vunpack.c.l.b16 %v4396
        %v4466 = vunpack.c.l.b16 %v4400
        %v4467 = vunpack.c.l.b16 %v4403
        %v4468 = vunpack.c.l.b16 %v4407
        %v4469 = vunpack.c.l.b16 %v4410
        %v4470 = vunpack.c.l.b16 %v4414
        %v4471 = vunpack.c.l.b16 %v4417
        %v4472 = vunpack.c.l.b16 %v4421
        %v4473 = vunpack.c.l.b16 %v4424
        %v4474 = vunpack.c.l.b16 %v4428
        %v4475 = vunpack.c.l.b16 %v4431
        %v4476 = vunpack.c.l.b16 %v4435
        %v4477 = vunpack.c.l.b16 %v4438
        %v4478 = vunpack.c.l.b16 %v4442
        %v4479 = vunpack.c.l.b16 %v4445
        %v4480 = vpack.c.b16 %v4449, %v4448
        %v4481 = vpack.c.b16 %v4451, %v4450
        %v4482 = vpack.c.b16 %v4453, %v4452
        %v4483 = vpack.c.b16 %v4455, %v4454
        %v4484 = vpack.c.b16 %v4457, %v4456
        %v4485 = vpack.c.b16 %v4459, %v4458
        %v4486 = vpack.c.b16 %v4461, %v4460
        %v4487 = vpack.c.b16 %v4463, %v4462
        %v4488 = vpack.c.b16 %v4465, %v4464
        %v4489 = vpack.c.b16 %v4467, %v4466
        %v4490 = vpack.c.b16 %v4469, %v4468
        %v4491 = vpack.c.b16 %v4471, %v4470
        %v4492 = vpack.c.b16 %v4473, %v4472
        %v4493 = vpack.c.b16 %v4475, %v4474
        %v4494 = vpack.c.b16 %v4477, %v4476
        %v4495 = vpack.c.b16 %v4479, %v4478
        %v4497 = vsel %vm667, %v4480, 0
        %v4500 = vsel %vm667, %v4481, 0
        %v4503 = vsel %vm667, %v4482, 0
        %v4506 = vsel %vm667, %v4483, 0
        %v4509 = vsel %vm667, %v4484, 0
        %v4512 = vsel %vm667, %v4485, 0
        %v4515 = vsel %vm667, %v4486, 0
        %v4518 = vsel %vm667, %v4487, 0
        %v4521 = vsel %vm667, %v4488, 0
        %v4524 = vsel %vm667, %v4489, 0
        %v4527 = vsel %vm667, %v4490, 0
        %v4530 = vsel %vm667, %v4491, 0
        %v4533 = vsel %vm667, %v4492, 0
        %v4536 = vsel %vm667, %v4493, 0
        %v4539 = vsel %vm667, %v4494, 0
        %v4542 = vsel %vm667, %v4495, 0
        %v4545 = vsel %vm716, %v4447, 0
        %4547 = vmatprep.subr.bf16.mxu0 0
        %4548 = vmatpush1.bf16.msra.mxu0 %v4545
        %4549 = vmatprep.subr.bf16.mxu0 0
        %4550 = vmatpush1.bf16.msra.mxu0 0
        %4551 = vmatprep.subr.bf16.mxu0 0
        %4552 = vmatpush1.bf16.msra.mxu0 0
        %4553 = vmatprep.subr.bf16.mxu0 0
        %4554 = vmatpush1.bf16.msra.mxu0 0
        %4555 = vmatprep.subr.bf16.mxu0 0
        %4556 = vmatpush1.bf16.msra.mxu0 0
        %4557 = vmatprep.subr.bf16.mxu0 0
        %4558 = vmatpush1.bf16.msra.mxu0 0
        %4559 = vmatprep.subr.bf16.mxu0 0
        %4560 = vmatpush1.bf16.msra.mxu0 0
        %4561 = vmatprep.subr.bf16.mxu0 0
        %4562 = vmatpush1.bf16.msra.mxu0 0
        %4563 = vmatprep.subr.bf16.mxu0 0
        %4564 = vmatpush1.bf16.msra.mxu0 0
        %4565 = vmatprep.subr.bf16.mxu0 0
        %4566 = vmatpush1.bf16.msra.mxu0 0
        %4567 = vmatprep.subr.bf16.mxu0 0
        %4568 = vmatpush1.bf16.msra.mxu0 0
        %4569 = vmatprep.subr.bf16.mxu0 0
        %4570 = vmatpush1.bf16.msra.mxu0 0
        %4571 = vmatprep.subr.bf16.mxu0 0
        %4572 = vmatpush1.bf16.msra.mxu0 0
        %4573 = vmatprep.subr.bf16.mxu0 0
        %4574 = vmatpush1.bf16.msra.mxu0 0
        %4575 = vmatprep.subr.bf16.mxu0 0
        %4576 = vmatpush1.bf16.msra.mxu0 0
        %4577 = vmatprep.subr.bf16.mxu0 0
        %4578 = vmatpush1.bf16.msra.mxu0 0
        %4579 = vmatprep.mubr.bf16.mxu0 0
        %4580 = vmatmul.mubr.bf16.gmra.mrb[0].mxu0 %v4497
        %v4581 = vpop.f32.mrb[0].mxu0
        %v4582 = vadd.f32 0.0, %v4581
        %v4583 = vpop.f32.mrb[0].mxu0
        %v4584 = vpop.f32.mrb[0].mxu0
        %v4585 = vadd.f32 0.0, %v4584
        %v4586 = vpop.f32.mrb[0].mxu0
        %4587 = vmatprep.mubr.bf16.mxu0 0
        %4588 = vmatmul.mubr.bf16.gmra.mrb[0].mxu0 %v4500
        %v4589 = vpop.f32.mrb[0].mxu0
        %v4590 = vadd.f32 0.0, %v4589
        %v4591 = vpop.f32.mrb[0].mxu0
        %v4592 = vpop.f32.mrb[0].mxu0
        %v4593 = vadd.f32 0.0, %v4592
        %v4594 = vpop.f32.mrb[0].mxu0
        %4595 = vmatprep.mubr.bf16.mxu0 0
        %4596 = vmatmul.mubr.bf16.gmra.mrb[0].mxu0 %v4503
        %v4597 = vpop.f32.mrb[0].mxu0
        %v4598 = vadd.f32 0.0, %v4597
        %v4599 = vpop.f32.mrb[0].mxu0
        %v4600 = vpop.f32.mrb[0].mxu0
        %v4601 = vadd.f32 0.0, %v4600
        %v4602 = vpop.f32.mrb[0].mxu0
        %4603 = vmatprep.mubr.bf16.mxu0 0
        %4604 = vmatmul.mubr.bf16.gmra.mrb[0].mxu0 %v4506
        %v4605 = vpop.f32.mrb[0].mxu0
        %v4606 = vadd.f32 0.0, %v4605
        %v4607 = vpop.f32.mrb[0].mxu0
        %v4608 = vpop.f32.mrb[0].mxu0
        %v4609 = vadd.f32 0.0, %v4608
        %v4610 = vpop.f32.mrb[0].mxu0
        %4611 = vmatprep.mubr.bf16.mxu0 0
        %4612 = vmatmul.mubr.bf16.gmra.mrb[0].mxu0 %v4509
        %v4613 = vpop.f32.mrb[0].mxu0
        %v4614 = vadd.f32 0.0, %v4613
        %v4615 = vpop.f32.mrb[0].mxu0
        %v4616 = vpop.f32.mrb[0].mxu0
        %v4617 = vadd.f32 0.0, %v4616
        %v4618 = vpop.f32.mrb[0].mxu0
        %4619 = vmatprep.mubr.bf16.mxu0 0
        %4620 = vmatmul.mubr.bf16.gmra.mrb[0].mxu0 %v4512
        %v4621 = vpop.f32.mrb[0].mxu0
        %v4622 = vadd.f32 0.0, %v4621
        %v4623 = vpop.f32.mrb[0].mxu0
        %v4624 = vpop.f32.mrb[0].mxu0
        %v4625 = vadd.f32 0.0, %v4624
        %v4626 = vpop.f32.mrb[0].mxu0
        %4627 = vmatprep.mubr.bf16.mxu0 0
        %4628 = vmatmul.mubr.bf16.gmra.mrb[0].mxu0 %v4515
        %v4629 = vpop.f32.mrb[0].mxu0
        %v4630 = vadd.f32 0.0, %v4629
        %v4631 = vpop.f32.mrb[0].mxu0
        %v4632 = vpop.f32.mrb[0].mxu0
        %v4633 = vadd.f32 0.0, %v4632
        %v4634 = vpop.f32.mrb[0].mxu0
        %4635 = vmatprep.mubr.bf16.mxu0 0
        %4636 = vmatmul.mubr.bf16.gmra.mrb[0].mxu0 %v4518
        %v4637 = vpop.f32.mrb[0].mxu0
        %v4638 = vadd.f32 0.0, %v4637
        %v4639 = vpop.f32.mrb[0].mxu0
        %v4640 = vpop.f32.mrb[0].mxu0
        %v4641 = vadd.f32 0.0, %v4640
        %v4642 = vpop.f32.mrb[0].mxu0
        %4643 = vmatprep.mubr.bf16.mxu0 0
        %4644 = vmatmul.mubr.bf16.gmra.mrb[0].mxu0 %v4521
        %v4645 = vpop.f32.mrb[0].mxu0
        %v4646 = vadd.f32 0.0, %v4645
        %v4647 = vpop.f32.mrb[0].mxu0
        %v4648 = vpop.f32.mrb[0].mxu0
        %v4649 = vadd.f32 0.0, %v4648
        %v4650 = vpop.f32.mrb[0].mxu0
        %4651 = vmatprep.mubr.bf16.mxu0 0
        %4652 = vmatmul.mubr.bf16.gmra.mrb[0].mxu0 %v4524
        %v4653 = vpop.f32.mrb[0].mxu0
        %v4654 = vadd.f32 0.0, %v4653
        %v4655 = vpop.f32.mrb[0].mxu0
        %v4656 = vpop.f32.mrb[0].mxu0
        %v4657 = vadd.f32 0.0, %v4656
        %v4658 = vpop.f32.mrb[0].mxu0
        %4659 = vmatprep.mubr.bf16.mxu0 0
        %4660 = vmatmul.mubr.bf16.gmra.mrb[0].mxu0 %v4527
        %v4661 = vpop.f32.mrb[0].mxu0
        %v4662 = vadd.f32 0.0, %v4661
        %v4663 = vpop.f32.mrb[0].mxu0
        %v4664 = vpop.f32.mrb[0].mxu0
        %v4665 = vadd.f32 0.0, %v4664
        %v4666 = vpop.f32.mrb[0].mxu0
        %4667 = vmatprep.mubr.bf16.mxu0 0
        %4668 = vmatmul.mubr.bf16.gmra.mrb[0].mxu0 %v4530
        %v4669 = vpop.f32.mrb[0].mxu0
        %v4670 = vadd.f32 0.0, %v4669
        %v4671 = vpop.f32.mrb[0].mxu0
        %v4672 = vpop.f32.mrb[0].mxu0
        %v4673 = vadd.f32 0.0, %v4672
        %v4674 = vpop.f32.mrb[0].mxu0
        %4675 = vmatprep.mubr.bf16.mxu0 0
        %4676 = vmatmul.mubr.bf16.gmra.mrb[0].mxu0 %v4533
        %v4677 = vpop.f32.mrb[0].mxu0
        %v4678 = vadd.f32 0.0, %v4677
        %v4679 = vpop.f32.mrb[0].mxu0
        %v4680 = vpop.f32.mrb[0].mxu0
        %v4681 = vadd.f32 0.0, %v4680
        %v4682 = vpop.f32.mrb[0].mxu0
        %4683 = vmatprep.mubr.bf16.mxu0 0
        %4684 = vmatmul.mubr.bf16.gmra.mrb[0].mxu0 %v4536
        %v4685 = vpop.f32.mrb[0].mxu0
        %v4686 = vadd.f32 0.0, %v4685
        %v4687 = vpop.f32.mrb[0].mxu0
        %v4688 = vpop.f32.mrb[0].mxu0
        %v4689 = vadd.f32 0.0, %v4688
        %v4690 = vpop.f32.mrb[0].mxu0
        %4691 = vmatprep.mubr.bf16.mxu0 0
        %4692 = vmatmul.mubr.bf16.gmra.mrb[0].mxu0 %v4539
        %v4693 = vpop.f32.mrb[0].mxu0
        %v4694 = vadd.f32 0.0, %v4693
        %v4695 = vpop.f32.mrb[0].mxu0
        %v4696 = vpop.f32.mrb[0].mxu0
        %v4697 = vadd.f32 0.0, %v4696
        %v4698 = vpop.f32.mrb[0].mxu0
        %4699 = vmatprep.mubr.bf16.mxu0 0
        %4700 = vmatmul.mubr.bf16.gmra.mrb[0].mxu0 %v4542
        %v4701 = vpop.f32.mrb[0].mxu0
        %v4702 = vadd.f32 0.0, %v4701
        %v4703 = vpop.f32.mrb[0].mxu0
        %v4704 = vpop.f32.mrb[0].mxu0
        %v4705 = vadd.f32 0.0, %v4704
        %v4706 = vpop.f32.mrb[0].mxu0
        %4707 = vdwg.mxu0
        %v4708 = vadd.f32 %v4238, %v4582
        %v4709 = vadd.f32 %v4239, %v4585
        %v4710 = vadd.f32 %v4240, %v4590
        %v4711 = vadd.f32 %v4241, %v4593
        %v4712 = vadd.f32 %v4242, %v4598
        %v4713 = vadd.f32 %v4243, %v4601
        %v4714 = vadd.f32 %v4244, %v4606
        %v4715 = vadd.f32 %v4245, %v4609
        %v4716 = vadd.f32 %v4246, %v4614
        %v4717 = vadd.f32 %v4247, %v4617
        %v4718 = vadd.f32 %v4248, %v4622
        %v4719 = vadd.f32 %v4249, %v4625
        %v4720 = vadd.f32 %v4250, %v4630
        %v4721 = vadd.f32 %v4251, %v4633
        %v4722 = vadd.f32 %v4252, %v4638
        %v4723 = vadd.f32 %v4253, %v4641
        %v4724 = vadd.f32 %v4254, %v4646
        %v4725 = vadd.f32 %v4255, %v4649
        %v4726 = vadd.f32 %v4256, %v4654
        %v4727 = vadd.f32 %v4257, %v4657
        %v4728 = vadd.f32 %v4258, %v4662
        %v4729 = vadd.f32 %v4259, %v4665
        %v4730 = vadd.f32 %v4260, %v4670
        %v4731 = vadd.f32 %v4261, %v4673
        %v4732 = vadd.f32 %v4262, %v4678
        %v4733 = vadd.f32 %v4263, %v4681
        %v4734 = vadd.f32 %v4264, %v4686
        %v4735 = vadd.f32 %v4265, %v4689
        %v4736 = vadd.f32 %v4266, %v4694
        %v4737 = vadd.f32 %v4267, %v4697
        %v4738 = vadd.f32 %v4268, %v4702
        %v4739 = vadd.f32 %v4269, %v4705
        %4740 = vst [vmem:[%s167] sm:$0xff] %v4708
        %4741 = vst [vmem:[%s167 + $0x8] sm:$0xff] %v4709
        %4742 = vst [vmem:[%s167 + $0x10] sm:$0xff] %v4710
        %4743 = vst [vmem:[%s167 + $0x18] sm:$0xff] %v4711
        %4744 = vst [vmem:[%s167 + $0x20] sm:$0xff] %v4712
        %4745 = vst [vmem:[%s167 + $0x28] sm:$0xff] %v4713
        %4746 = vst [vmem:[%s167 + $0x30] sm:$0xff] %v4714
        %4747 = vst [vmem:[%s167 + $0x38] sm:$0xff] %v4715
        %4748 = vst [vmem:[%s167 + $0x40] sm:$0xff] %v4716
        %4749 = vst [vmem:[%s167 + $0x48] sm:$0xff] %v4717
        %4750 = vst [vmem:[%s167 + $0x50] sm:$0xff] %v4718
        %4751 = vst [vmem:[%s167 + $0x58] sm:$0xff] %v4719
        %4752 = vst [vmem:[%s167 + $0x60] sm:$0xff] %v4720
        %4753 = vst [vmem:[%s167 + $0x68] sm:$0xff] %v4721
        %4754 = vst [vmem:[%s167 + $0x70] sm:$0xff] %v4722
        %4755 = vst [vmem:[%s167 + $0x78] sm:$0xff] %v4723
        %4756 = vst [vmem:[%s167 + $0x80] sm:$0xff] %v4724
        %4757 = vst [vmem:[%s167 + $0x88] sm:$0xff] %v4725
        %4758 = vst [vmem:[%s167 + $0x90] sm:$0xff] %v4726
        %4759 = vst [vmem:[%s167 + $0x98] sm:$0xff] %v4727
        %4760 = vst [vmem:[%s167 + $0xa0] sm:$0xff] %v4728
        %4761 = vst [vmem:[%s167 + $0xa8] sm:$0xff] %v4729
        %4762 = vst [vmem:[%s167 + $0xb0] sm:$0xff] %v4730
        %4763 = vst [vmem:[%s167 + $0xb8] sm:$0xff] %v4731
        %4764 = vst [vmem:[%s167 + $0xc0] sm:$0xff] %v4732
        %4765 = vst [vmem:[%s167 + $0xc8] sm:$0xff] %v4733
        %4766 = vst [vmem:[%s167 + $0xd0] sm:$0xff] %v4734
        %4767 = vst [vmem:[%s167 + $0xd8] sm:$0xff] %v4735
        %4768 = vst [vmem:[%s167 + $0xe0] sm:$0xff] %v4736
        %4769 = vst [vmem:[%s167 + $0xe8] sm:$0xff] %v4737
        %4770 = vst [vmem:[%s167 + $0xf0] sm:$0xff] %v4738
        %4771 = vst [vmem:[%s167 + $0xf8] sm:$0xff] %v4739
        %v4772 = vadd.f32 %v4708, %v4709
        %v4773 = vadd.f32 %v4772, %v4710
        %v4774 = vadd.f32 %v4773, %v4711
        %v4775 = vadd.f32 %v4774, %v4712
        %v4776 = vadd.f32 %v4775, %v4713
        %v4777 = vadd.f32 %v4776, %v4714
        %v4778 = vadd.f32 %v4777, %v4715
        %v4779 = vadd.f32 %v4778, %v4716
        %v4780 = vadd.f32 %v4779, %v4717
        %v4781 = vadd.f32 %v4780, %v4718
        %v4782 = vadd.f32 %v4781, %v4719
        %v4783 = vadd.f32 %v4782, %v4720
        %v4784 = vadd.f32 %v4783, %v4721
        %v4785 = vadd.f32 %v4784, %v4722
        %v4786 = vadd.f32 %v4785, %v4723
        %v4787 = vadd.f32 %v4786, %v4724
        %v4788 = vadd.f32 %v4787, %v4725
        %v4789 = vadd.f32 %v4788, %v4726
        %v4790 = vadd.f32 %v4789, %v4727
        %v4791 = vadd.f32 %v4790, %v4728
        %v4792 = vadd.f32 %v4791, %v4729
        %v4793 = vadd.f32 %v4792, %v4730
        %v4794 = vadd.f32 %v4793, %v4731
        %v4795 = vadd.f32 %v4794, %v4732
        %v4796 = vadd.f32 %v4795, %v4733
        %v4797 = vadd.f32 %v4796, %v4734
        %v4798 = vadd.f32 %v4797, %v4735
        %v4799 = vadd.f32 %v4798, %v4736
        %v4800 = vadd.f32 %v4799, %v4737
        %v4801 = vadd.f32 %v4800, %v4738
        %v4802 = vadd.f32 %v4801, %v4739
        %v4803 = vrot.slane %v4802, 4
        %v4804 = vadd.f32 %v4802, %v4803
        %v4805 = vrot.slane %v4804, 2
        %v4806 = vadd.f32 %v4804, %v4805
        %v4807 = vrot.slane %v4806, 1
        %v4808 = vadd.f32 %v4806, %v4807
        %v4809 = vmul.f32 %v4708, %v4708
        %v4810 = vmul.f32 %v4709, %v4709
        %v4811 = vmul.f32 %v4710, %v4710
        %v4812 = vmul.f32 %v4711, %v4711
        %v4813 = vmul.f32 %v4712, %v4712
        %v4814 = vmul.f32 %v4713, %v4713
        %v4815 = vmul.f32 %v4714, %v4714
        %v4816 = vmul.f32 %v4715, %v4715
        %v4817 = vmul.f32 %v4716, %v4716
        %v4818 = vmul.f32 %v4717, %v4717
        %v4819 = vmul.f32 %v4718, %v4718
        %v4820 = vmul.f32 %v4719, %v4719
        %v4821 = vmul.f32 %v4720, %v4720
        %v4822 = vmul.f32 %v4721, %v4721
        %v4823 = vmul.f32 %v4722, %v4722
        %v4824 = vmul.f32 %v4723, %v4723
        %v4825 = vmul.f32 %v4724, %v4724
        %v4826 = vmul.f32 %v4725, %v4725
        %v4827 = vmul.f32 %v4726, %v4726
        %v4828 = vmul.f32 %v4727, %v4727
        %v4829 = vmul.f32 %v4728, %v4728
        %v4830 = vmul.f32 %v4729, %v4729
        %v4831 = vmul.f32 %v4730, %v4730
        %v4832 = vmul.f32 %v4731, %v4731
        %v4833 = vmul.f32 %v4732, %v4732
        %v4834 = vmul.f32 %v4733, %v4733
        %v4835 = vmul.f32 %v4734, %v4734
        %v4836 = vmul.f32 %v4735, %v4735
        %v4837 = vmul.f32 %v4736, %v4736
        %v4838 = vmul.f32 %v4737, %v4737
        %v4839 = vmul.f32 %v4738, %v4738
        %v4840 = vmul.f32 %v4739, %v4739
        %v4841 = vadd.f32 %v4809, %v4810
        %v4842 = vadd.f32 %v4841, %v4811
        %v4843 = vadd.f32 %v4842, %v4812
        %v4844 = vadd.f32 %v4843, %v4813
        %v4845 = vadd.f32 %v4844, %v4814
        %v4846 = vadd.f32 %v4845, %v4815
        %v4847 = vadd.f32 %v4846, %v4816
        %v4848 = vadd.f32 %v4847, %v4817
        %v4849 = vadd.f32 %v4848, %v4818
        %v4850 = vadd.f32 %v4849, %v4819
        %v4851 = vadd.f32 %v4850, %v4820
        %v4852 = vadd.f32 %v4851, %v4821
        %v4853 = vadd.f32 %v4852, %v4822
        %v4854 = vadd.f32 %v4853, %v4823
        %v4855 = vadd.f32 %v4854, %v4824
        %v4856 = vadd.f32 %v4855, %v4825
        %v4857 = vadd.f32 %v4856, %v4826
        %v4858 = vadd.f32 %v4857, %v4827
        %v4859 = vadd.f32 %v4858, %v4828
        %v4860 = vadd.f32 %v4859, %v4829
        %v4861 = vadd.f32 %v4860, %v4830
        %v4862 = vadd.f32 %v4861, %v4831
        %v4863 = vadd.f32 %v4862, %v4832
        %v4864 = vadd.f32 %v4863, %v4833
        %v4865 = vadd.f32 %v4864, %v4834
        %v4866 = vadd.f32 %v4865, %v4835
        %v4867 = vadd.f32 %v4866, %v4836
        %v4868 = vadd.f32 %v4867, %v4837
        %v4869 = vadd.f32 %v4868, %v4838
        %v4870 = vadd.f32 %v4869, %v4839
        %v4871 = vadd.f32 %v4870, %v4840
        %v4872 = vrot.slane %v4871, 4
        %v4873 = vadd.f32 %v4871, %v4872
        %v4874 = vrot.slane %v4873, 2
        %v4875 = vadd.f32 %v4873, %v4874
        %v4876 = vrot.slane %v4875, 1
        %v4877 = vadd.f32 %v4875, %v4876
        %4878 = vst [vmem:[%s174] sm:$0x1] %v4808
        %4879 = vst [vmem:[%s174 + $0x1] sm:$0x1] %v4877
        %s4880 = sand.u32 %s76, 1
        %s4881 = scalar_lea.sflag [#allocation3], %s4880
        %s4882 = sand.u32 %s76, 1
        %s4883 = smul.addr %s4882, 256
        %s4884 = scalar_lea.vmem [#allocation2], %s4883
        %s4885 = sand.u32 %s102, 1
        %s4886 = scalar_lea.sflag [#allocation5], %s4885
        %s4887 = sand.u32 %s102, 1
        %s4888 = smul.addr %s4887, 2
        %s4889 = scalar_lea.vmem [#allocation4], %s4888
        // Predicated region
        $region29: #{tpu_custom_call.1} parent=27 // pred_check
          %p4890 = pneg %p86
        $region30: #{tpu_custom_call.1} parent=27 // pred_check_branch
          %4892 = sbr.rel (%p4890) target = $region32
        $region31: #{tpu_custom_call.1} parent=27 // pred_region
          %s4894 = ssub.s32 4096, 4096
          %4895 = vsyncadd %s4881, %s4894
          %s4896 = smul.addr %s21, 32
          %s4897 = smul.addr %s4896, 128
          %s4898 = scalar_lea.hbm %s2, %s4897
          %s4899 = sshll.u32 %s4884, 4
          %s4900 = int_to_ptr.vmem [resolvable:$true] %s4899
          %4905 = dma.vmem_to_hbm [thread:$0]  %s4900, 4096, %s4898, %s4881, 128, 128, 8
        $region32: #{tpu_custom_call.1} parent=27 // pred_fallthru
          _
        // Predicated region
        $region33: #{tpu_custom_call.1} parent=27 // pred_check
          %p4906 = pneg %p112
        $region34: #{tpu_custom_call.1} parent=27 // pred_check_branch
          %4908 = sbr.rel (%p4906) target = $region36
        $region35: #{tpu_custom_call.1} parent=27 // pred_region
          %s4910 = ssub.s32 32, 32
          %4911 = vsyncadd %s4886, %s4910
          %s4912 = smul.addr %s21, 32
          %s4913 = scalar_lea.hbm %s3, %s4912
          %s4915 = sshll.u32 %s4889, 4
          %s4916 = int_to_ptr.vmem [resolvable:$true] %s4915
          %4918 = dma.vmem_to_hbm [thread:$0]  %s4916, 32, %s4913, %s4886
        $region36: #{tpu_custom_call.1} parent=27 // pred_fallthru
          _
      $region28: #{tpu_custom_call.1} parent=5 // pred_fallthru
        _
      %p4919 = scmp.le.s32.totalorder 2, %s16
      // Predicated region
      $region37: #{tpu_custom_call.1} parent=5 // pred_check
        %p4920 = pneg %p4919
      $region38: #{tpu_custom_call.1} parent=5 // pred_check_branch
        %4922 = sbr.rel (%p4920) target = $region40
      $region39: #{tpu_custom_call.1} parent=5 // pred_region
        %s4923 = ssub.s32 %s16, 2
        // Predicated region
        $region41: #{tpu_custom_call.1} parent=39 // pred_check
          %p4924 = pneg %p92
        $region42: #{tpu_custom_call.1} parent=39 // pred_check_branch
          %4926 = sbr.rel (%p4924) target = $region44
        $region43: #{tpu_custom_call.1} parent=39 // pred_region
          %s4927 = sand.u32 %s77, 1
          %s4928 = scalar_lea.sflag [#allocation3], %s4927
          %s4929 = sand.u32 %s77, 1
          %s4930 = smul.addr %s4929, 256
          %s4931 = scalar_lea.vmem [#allocation2], %s4930
          %4932 = dma.done %s4928, 4096
        $region44: #{tpu_custom_call.1} parent=39 // pred_fallthru
          _
        // Predicated region
        $region45: #{tpu_custom_call.1} parent=39 // pred_check
          %p4933 = pneg %p118
        $region46: #{tpu_custom_call.1} parent=39 // pred_check_branch
          %4935 = sbr.rel (%p4933) target = $region48
        $region47: #{tpu_custom_call.1} parent=39 // pred_region
          %s4936 = sand.u32 %s103, 1
          %s4937 = scalar_lea.sflag [#allocation5], %s4936
          %s4938 = sand.u32 %s103, 1
          %s4939 = smul.addr %s4938, 2
          %s4940 = scalar_lea.vmem [#allocation4], %s4939
          %4941 = dma.done %s4937, 32
        $region48: #{tpu_custom_call.1} parent=39 // pred_fallthru
          _
      $region40: #{tpu_custom_call.1} parent=5 // pred_fallthru
        _
    $region6: #{tpu_custom_call.1} parent=1 // loop_footer
      %s20 = sadd.s32 1, %s16
    $region7: #{tpu_custom_call.1} parent=1 // loop_footer_branch
      %15 = sbr.rel target = $region3
    $region8: #{tpu_custom_call.1} parent=1 // loop_exit
      _
    %4942 = vsyncpa [#allocation3], 1
    %s4943 = scalar_lea.sflag [#allocation3], 1
    %4944 = vsyncpa %s4943, 1
    %4945 = vsyncpa [#allocation5], 1
    %s4946 = scalar_lea.sflag [#allocation5], 1
    %4947 = vsyncpa %s4946, 1

</llo_original>
